<compile_context>
chip_gen: v5e
topology: v5e:2x2
jax: 0.10.0
libtpu: 0.0.40
codegen_flags: <defaults>
</compile_context>

<pallas_src>
import functools

import jax
import jax.numpy as jnp
from jax.experimental import pallas as pl
from jax.experimental.pallas import tpu as pltpu

ACT_DTYPE = jnp.bfloat16
_VMEM_LIMIT = 64 * 1024 * 1024


# ----------------------------- small helpers -----------------------------

def _round_up(x, m):
    return (x + m - 1) // m * m


def _pad_dim(x, mult, axis):
    r = x.shape[axis] % mult
    if r == 0:
        return x
    pads = [(0, 0)] * x.ndim
    pads[axis] = (0, mult - r)
    return jnp.pad(x, pads)


def _row_block(rows, candidates=(16, 12, 8, 6, 4, 3, 2, 1)):
    for r in candidates:
        if rows % r == 0:
            return r
    return 1


# ----------------------------- Pallas kernels -----------------------------

def _mm_kernel(x_ref, w_ref, s_ref, h_ref, o_ref, acc_ref, *, apply_relu):
    """Tiled matmul (bf16 x bf16 -> f32 acc) with fused affine (+ReLU) epilogue."""
    k = pl.program_id(2)

    @pl.when(k == 0)
    def _():
        acc_ref[...] = jnp.zeros_like(acc_ref)

    acc_ref[...] += jnp.dot(x_ref[...], w_ref[...],
                            preferred_element_type=jnp.float32)

    @pl.when(k == pl.num_programs(2) - 1)
    def _():
        y = acc_ref[...] * s_ref[...] + h_ref[...]
        if apply_relu:
            y = jnp.maximum(y, 0.0)
        o_ref[...] = y.astype(o_ref.dtype)


def _sepconv_kernel(x_ref, w_ref, s_ref, h_ref, *rest,
                    rows, taps, dil, w_out, cout, apply_relu, has_residual):
    """1xK conv along W: per-row tap-accumulated matmuls, fused affine /
    residual / ReLU epilogue.  x_ref block is (R, W + 2*dil, C)."""
    if has_residual:
        res_ref, o_ref = rest
    else:
        (o_ref,) = rest
    s = s_ref[...]              # (1, Cout) f32
    h = h_ref[...]              # (1, Cout) f32
    for r in range(rows):
        acc = jnp.zeros((w_out, cout), jnp.float32)
        for t in range(taps):
            acc = acc + jnp.dot(x_ref[r, pl.ds(t * dil, w_out), :],
                                w_ref[t, :, :],
                                preferred_element_type=jnp.float32)
        y = acc * s + h
        if has_residual:
            y = y + res_ref[r, :, :].astype(jnp.float32)
        if apply_relu:
            y = jnp.maximum(y, 0.0)
        o_ref[r, :, :] = y.astype(o_ref.dtype)


def _pool_affine_kernel(x_ref, s_ref, h_ref, o_ref, *, c, apply_relu):
    """2x2 maxpool with fused per-channel affine (folded BN) and optional ReLU.
    x_ref block is (R, 2, W2, 2*C)."""
    a = x_ref[:, 0, :, :]
    b = x_ref[:, 1, :, :]
    m = jnp.maximum(a, b)                          # (R, W2, 2C)
    m = jnp.maximum(m[:, :, :c], m[:, :, c:])      # (R, W2, C)
    y = m.astype(jnp.float32) * s_ref[...] + h_ref[...]
    if apply_relu:
        y = jnp.maximum(y, 0.0)
    o_ref[...] = y.astype(o_ref.dtype)


# ----------------------------- Pallas wrappers -----------------------------

@functools.partial(jax.jit, static_argnames=("apply_relu",))
def matmul_fused(x, w, scale, shift, *, apply_relu=False):
    """y = act((x @ w) * scale + shift), bf16 operands, f32 accumulate."""
    M, K = x.shape
    N = w.shape[1]

    tm = min(2048, _round_up(M, 8))
    Np = _round_up(N, 8)
    tn = Np if Np <= 256 else 256
    Kp8 = _round_up(K, 8)
    tk = Kp8 if Kp8 <= 2304 else 512

    xp = _pad_dim(_pad_dim(x.astype(ACT_DTYPE), tm, 0), tk, 1)
    wp = _pad_dim(_pad_dim(w.astype(ACT_DTYPE), tk, 0), tn, 1)
    sp = _pad_dim(scale.reshape(1, -1).astype(jnp.float32), tn, 1)
    hp = _pad_dim(shift.reshape(1, -1).astype(jnp.float32), tn, 1)

    Mp, Kpad = xp.shape
    Npad = wp.shape[1]
    grid = (Mp // tm, Npad // tn, Kpad // tk)

    out = pl.pallas_call(
        functools.partial(_mm_kernel, apply_relu=apply_relu),
        out_shape=jax.ShapeDtypeStruct((Mp, Npad), ACT_DTYPE),
        grid_spec=pltpu.PrefetchScalarGridSpec(
            num_scalar_prefetch=0,
            grid=grid,
            in_specs=[
                pl.BlockSpec((tm, tk), lambda i, j, k: (i, k)),
                pl.BlockSpec((tk, tn), lambda i, j, k: (k, j)),
                pl.BlockSpec((1, tn), lambda i, j, k: (0, j)),
                pl.BlockSpec((1, tn), lambda i, j, k: (0, j)),
            ],
            out_specs=pl.BlockSpec((tm, tn), lambda i, j, k: (i, j)),
            scratch_shapes=[pltpu.VMEM((tm, tn), jnp.float32)],
        ),
        compiler_params=pltpu.CompilerParams(
            dimension_semantics=("parallel", "parallel", "arbitrary"),
            vmem_limit_bytes=_VMEM_LIMIT),
    )(xp, wp, sp, hp)
    return out[:M, :N]


@functools.partial(jax.jit, static_argnames=("dilation", "apply_relu"))
def conv1x3_fused(x, w_taps, scale, shift, residual=None, *,
                  dilation=1, apply_relu=True):
    """(1,3) conv along W (PyTorch cross-correlation, padding=dilation) with
    fused affine (+ optional residual add) (+ optional ReLU)."""
    N, H, W, C = x.shape
    taps, _, Cout = w_taps.shape
    d = dilation
    Wp = W + 2 * d
    rows = N * H
    R = _row_block(rows)

    xr = jnp.pad(x.astype(ACT_DTYPE),
                 ((0, 0), (0, 0), (d, d), (0, 0))).reshape(rows, Wp, C)

    in_specs = [
        pl.BlockSpec((R, Wp, C), lambda i: (i, 0, 0)),
        pl.BlockSpec((taps, C, Cout), lambda i: (0, 0, 0)),
        pl.BlockSpec((1, Cout), lambda i: (0, 0)),
        pl.BlockSpec((1, Cout), lambda i: (0, 0)),
    ]
    args = [xr,
            w_taps.astype(ACT_DTYPE),
            scale.reshape(1, Cout).astype(jnp.float32),
            shift.reshape(1, Cout).astype(jnp.float32)]
    has_res = residual is not None
    if has_res:
        in_specs.append(pl.BlockSpec((R, W, Cout), lambda i: (i, 0, 0)))
        args.append(residual.astype(ACT_DTYPE).reshape(rows, W, Cout))

    out = pl.pallas_call(
        functools.partial(_sepconv_kernel, rows=R, taps=taps, dil=d,
                          w_out=W, cout=Cout, apply_relu=apply_relu,
                          has_residual=has_res),
        out_shape=jax.ShapeDtypeStruct((rows, W, Cout), ACT_DTYPE),
        grid_spec=pltpu.PrefetchScalarGridSpec(
            num_scalar_prefetch=0,
            grid=(rows // R,),
            in_specs=in_specs,
            out_specs=pl.BlockSpec((R, W, Cout), lambda i: (i, 0, 0)),
        ),
        compiler_params=pltpu.CompilerParams(
            dimension_semantics=("parallel",),
            vmem_limit_bytes=_VMEM_LIMIT),
    )(*args)
    return out.reshape(N, H, W, Cout)


@functools.partial(jax.jit, static_argnames=("apply_relu",))
def maxpool2x2_affine(x, scale, shift, *, apply_relu):
    """2x2/2 maxpool (floor mode) with fused per-channel affine (+ReLU)."""
    N, H, W, C = x.shape
    H2, W2 = H // 2, W // 2
    x = x[:, :H2 * 2, :W2 * 2, :]
    xr = x.astype(ACT_DTYPE).reshape(N * H2, 2, W2, 2 * C)
    rows = N * H2
    R = _row_block(rows)

    out = pl.pallas_call(
        functools.partial(_pool_affine_kernel, c=C, apply_relu=apply_relu),
        out_shape=jax.ShapeDtypeStruct((rows, W2, C), ACT_DTYPE),
        grid_spec=pltpu.PrefetchScalarGridSpec(
            num_scalar_prefetch=0,
            grid=(rows // R,),
            in_specs=[
                pl.BlockSpec((R, 2, W2, 2 * C), lambda i: (i, 0, 0, 0)),
                pl.BlockSpec((1, 1, C), lambda i: (0, 0, 0)),
                pl.BlockSpec((1, 1, C), lambda i: (0, 0, 0)),
            ],
            out_specs=pl.BlockSpec((R, W2, C), lambda i: (i, 0, 0)),
        ),
        compiler_params=pltpu.CompilerParams(
            dimension_semantics=("parallel",),
            vmem_limit_bytes=_VMEM_LIMIT),
    )(xr,
      scale.reshape(1, 1, C).astype(jnp.float32),
      shift.reshape(1, 1, C).astype(jnp.float32))
    return out.reshape(N, H2, W2, C)


@functools.partial(jax.jit,
                   static_argnames=("stride", "padding", "dilation", "apply_relu"))
def conv2d_im2col(x, w_hwio, scale, shift, *, stride=(1, 1), padding=(0, 0),
                  dilation=(1, 1), apply_relu=False):
    """General conv (PyTorch cross-correlation) via im2col + fused matmul.
    Used for 3x3 and 3x1 convs; 1x3 convs go through conv1x3_fused."""
    N, H, W, C = x.shape
    KH, KW, Cin, Cout = w_hwio.shape
    sh, sw = stride
    ph, pw = padding
    dh, dw = dilation
    OH = (H + 2 * ph - dh * (KH - 1) - 1) // sh + 1
    OW = (W + 2 * pw - dw * (KW - 1) - 1) // sw + 1
    xp = jnp.pad(x.astype(ACT_DTYPE), ((0, 0), (ph, ph), (pw, pw), (0, 0)))
    cols = []
    for kh in range(KH):
        for kw in range(KW):
            sl = xp[:, kh * dh: kh * dh + sh * (OH - 1) + 1: sh,
                       kw * dw: kw * dw + sw * (OW - 1) + 1: sw, :]
            cols.append(sl.reshape(N * OH * OW, C))
    X = jnp.concatenate(cols, axis=1) if len(cols) > 1 else cols[0]
    Wm = w_hwio.reshape(KH * KW * Cin, Cout)        # tap-major, matches cols
    y = matmul_fused(X, Wm, scale, shift, apply_relu=apply_relu)
    return y.reshape(N, OH, OW, Cout)


# ----------------------------- module blocks (NHWC) -----------------------------

def _bn_scale_shift(bn, eps=1e-3):
    scale = bn["gamma"] / jnp.sqrt(bn["var"] + eps)
    shift = bn["beta"] - bn["mean"] * scale
    return scale, shift


def downsampler_block(x, p):
    cc = p["conv"]["w"].shape[-1]                      # conv output channels
    scale, shift = _bn_scale_shift(p["bn"])            # over all noutput chans
    s_conv, h_conv = scale[:cc], shift[:cc]
    s_pool, h_pool = scale[cc:], shift[cc:]
    h_conv = h_conv + p["conv"]["b"] * s_conv          # fold conv bias into BN
    conv_out = conv2d_im2col(x, p["conv"]["w"], s_conv, h_conv,
                             stride=(2, 2), padding=(1, 1), apply_relu=True)
    pool_out = maxpool2x2_affine(x, s_pool, h_pool, apply_relu=True)
    return jnp.concatenate([conv_out, pool_out], axis=-1)


def non_bottleneck_1d_block(x, p, dilated):
    c = x.shape[-1]
    ones = jnp.ones((c,), jnp.float32)
    s1, h1 = _bn_scale_shift(p["bn1"])
    s2, h2 = _bn_scale_shift(p["bn2"])

    out = conv2d_im2col(x, p["conv3x1_1"]["w"], ones, p["conv3x1_1"]["b"],
                        padding=(1, 0), apply_relu=True)

    w13_1 = p["conv1x3_1"]["w"].reshape(3, c, c)
    out = conv1x3_fused(out, w13_1, s1, h1 + p["conv1x3_1"]["b"] * s1,
                        dilation=1, apply_relu=True)

    out = conv2d_im2col(out, p["conv3x1_2"]["w"], ones, p["conv3x1_2"]["b"],
                        padding=(dilated, 0), dilation=(dilated, 1),
                        apply_relu=True)

    # last conv: bias+BN2 folded, residual add and final ReLU fused in-kernel.
    w13_2 = p["conv1x3_2"]["w"].reshape(3, c, c)
    out = conv1x3_fused(out, w13_2, s2, h2 + p["conv1x3_2"]["b"] * s2,
                        residual=x, dilation=dilated, apply_relu=True)
    # TODO(synk): Dropout2d eval-mode identity here.
    return out


# ----------------------------- parameter init -----------------------------

def _init_conv(key, kh, kw, cin, cout):
    k_w, k_b = jax.random.split(key)
    fan_in = kh * kw * cin
    w = jax.random.normal(k_w, (kh, kw, cin, cout), jnp.float32) * (2.0 / fan_in) ** 0.5
    b = 0.01 * jax.random.normal(k_b, (cout,), jnp.float32)
    return {"w": w, "b": b}


def _init_bn(key, c):
    k1, k2, k3, k4 = jax.random.split(key, 4)
    return {"gamma": 1.0 + 0.1 * jax.random.normal(k1, (c,), jnp.float32),
            "beta": 0.1 * jax.random.normal(k2, (c,), jnp.float32),
            "mean": 0.1 * jax.random.normal(k3, (c,), jnp.float32),
            "var": 1.0 + 0.1 * jnp.abs(jax.random.normal(k4, (c,), jnp.float32))}


def _init_downsampler(key, cin, cout):
    k1, k2 = jax.random.split(key)
    return {"conv": _init_conv(k1, 3, 3, cin, cout - cin), "bn": _init_bn(k2, cout)}


def _init_nb(key, c):
    ks = jax.random.split(key, 6)
    return {"conv3x1_1": _init_conv(ks[0], 3, 1, c, c),
            "conv1x3_1": _init_conv(ks[1], 1, 3, c, c),
            "bn1": _init_bn(ks[2], c),
            "conv3x1_2": _init_conv(ks[3], 3, 1, c, c),
            "conv1x3_2": _init_conv(ks[4], 1, 3, c, c),
            "bn2": _init_bn(ks[5], c)}


def init_encoder(key, num_classes_scene, multitask=True):
    keys = iter(jax.random.split(key, 64))
    params = {"initial_block": _init_downsampler(next(keys), 3, 16)}
    layers = [("down", _init_downsampler(next(keys), 16, 64), None)]
    for _ in range(5):
        layers.append(("nb", _init_nb(next(keys), 64), 1))
    layers.append(("down", _init_downsampler(next(keys), 64, 128), None))
    for _ in range(2):
        for d in (2, 4, 8, 16):
            layers.append(("nb", _init_nb(next(keys), 128), d))
    params["layers"] = layers
    if multitask:
        road = {"conv1": _init_conv(next(keys), 3, 3, 128, 256),
                "bn1": _init_bn(next(keys), 256),
                "nb1": _init_nb(next(keys), 256),
                "conv2": _init_conv(next(keys), 3, 3, 256, 512),
                "bn2": _init_bn(next(keys), 512),
                "nb2": _init_nb(next(keys), 512)}
        k1, k2, k3, k4 = jax.random.split(next(keys), 4)
        fin = 512 * 3 * 5
        road["lin1_w"] = jax.random.normal(k1, (fin, 1024), jnp.float32) / fin ** 0.5
        road["lin1_b"] = 0.01 * jax.random.normal(k2, (1024,), jnp.float32)
        road["lin2_w"] = jax.random.normal(k3, (1024, num_classes_scene), jnp.float32) / 1024 ** 0.5
        road["lin2_b"] = 0.01 * jax.random.normal(k4, (num_classes_scene,), jnp.float32)
        params["road"] = road
    return params


# ----------------------------- Encoder forward -----------------------------

def encoder_forward(x_nchw, params, multitask=True):
    x = jnp.transpose(x_nchw, (0, 2, 3, 1)).astype(ACT_DTYPE)    # NCHW -> NHWC
    out = downsampler_block(x, params["initial_block"])
    for kind, p, d in params["layers"]:
        if kind == "down":
            out = downsampler_block(out, p)
        else:
            out = non_bottleneck_1d_block(out, p, d)
    output = jnp.transpose(out, (0, 3, 1, 2)).astype(jnp.float32)  # NCHW

    if not multitask:
        return output, None

    r = params["road"]
    c1 = r["conv1"]["w"].shape[-1]
    o = conv2d_im2col(out, r["conv1"]["w"], jnp.ones((c1,), jnp.float32),
                      r["conv1"]["b"], stride=(2, 2), padding=(2, 2),
                      apply_relu=False)
    s, h = _bn_scale_shift(r["bn1"])
    o = maxpool2x2_affine(o, s, h, apply_relu=False)     # BN after pool, no ReLU
    o = non_bottleneck_1d_block(o, r["nb1"], 1)

    c2 = r["conv2"]["w"].shape[-1]
    o = conv2d_im2col(o, r["conv2"]["w"], jnp.ones((c2,), jnp.float32),
                      r["conv2"]["b"], stride=(2, 2), padding=(2, 2),
                      apply_relu=False)
    s, h = _bn_scale_shift(r["bn2"])
    o = maxpool2x2_affine(o, s, h, apply_relu=False)
    o = non_bottleneck_1d_block(o, r["nb2"], 1)

    bs = o.shape[0]
    flat = jnp.transpose(o, (0, 3, 1, 2)).reshape(bs, -1)  # NCHW flatten == torch .view
    y = matmul_fused(flat, r["lin1_w"], jnp.ones((1024,), jnp.float32),
                     r["lin1_b"], apply_relu=False)
    nc = r["lin2_w"].shape[1]
    y = matmul_fused(y, r["lin2_w"], jnp.ones((nc,), jnp.float32),
                     r["lin2_b"], apply_relu=False)
    return output, y.astype(jnp.float32)


# ----------------------------- main -----------------------------

if __name__ == "__main__":
    key = jax.random.PRNGKey(0)
    k_in, k_par = jax.random.split(key)

    num_classes_scene = 4
    multitask = True
    # Smallest batch=2 input whose spatial dims are consistent with the fixed
    # road_linear_1 in_features = 512*3*5 implied by the forward pass
    # (overall ~/128 spatial reduction on the road branch).
    N, C, H, W = 2, 3, 264, 520
    x = jax.random.normal(k_in, (N, C, H, W), jnp.float32)

    params = init_encoder(k_par, num_classes_scene, multitask)
    output, output_road = encoder_forward(x, params, multitask)

    output = jax.block_until_ready(output)
    output_road = jax.block_until_ready(output_road)

    assert output.shape == (N, 128, H // 8, W // 8), output.shape
    assert output_road.shape == (N, num_classes_scene), output_road.shape
    assert bool(jnp.all(jnp.isfinite(output))) and bool(jnp.all(jnp.isfinite(output_road)))
    print("KERNEL_OK")
</pallas_src>

<mosaic_0001>
module attributes {stable_mosaic.version = 11 : i64} {
  func.func @_mm_kernel(%arg0: i32, %arg1: i32, %arg2: i32, %arg3: memref<2048x32xbf16, #tpu.memory_space<vmem>>, %arg4: memref<32x16xbf16, #tpu.memory_space<vmem>>, %arg5: memref<1x16xf32, #tpu.memory_space<vmem>>, %arg6: memref<1x16xf32, #tpu.memory_space<vmem>>, %arg7: memref<2048x16xbf16, #tpu.memory_space<vmem>>, %arg8: memref<2048x16xf32, #tpu.memory_space<vmem>>) attributes {dimension_semantics = [#tpu.dimension_semantics<parallel>, #tpu.dimension_semantics<parallel>, #tpu.dimension_semantics<arbitrary>], iteration_bounds = array<i64: 34, 1, 1>, scalar_prefetch = 0 : i64, scratch_operands = 1 : i64, tpu.core_type = #tpu.core_type<tc>, window_params = [{transform_indices = @transform_0, window_bounds = array<i64: 2048, 32>}, {transform_indices = @transform_1, window_bounds = array<i64: 32, 16>}, {transform_indices = @transform_2, window_bounds = array<i64: 1, 16>}, {transform_indices = @transform_3, window_bounds = array<i64: 1, 16>}, {transform_indices = @transform_4, window_bounds = array<i64: 2048, 16>}]} {
    %c0_i32 = arith.constant 0 : i32
    %0 = arith.cmpi eq, %arg2, %c0_i32 : i32
    %1 = arith.extui %0 : i1 to i32
    %c0_i32_0 = arith.constant 0 : i32
    %2 = arith.cmpi ne, %1, %c0_i32_0 : i32
    scf.if %2 {
      %cst_10 = arith.constant 0.000000e+00 : f32
      %12 = vector.broadcast %cst_10 : f32 to vector<2048x16xf32>
      %c0_11 = arith.constant 0 : index
      %c0_12 = arith.constant 0 : index
      %13 = vector.load %arg8[%c0_11, %c0_12] : memref<2048x16xf32, #tpu.memory_space<vmem>>, vector<2048x16xf32>
      tpu.vector_store %arg8[%c0_11, %c0_12], %12 {strides = array<i32>} : memref<2048x16xf32, #tpu.memory_space<vmem>>, vector<2048x16xf32>,
    } else {
    }
    %c0 = arith.constant 0 : index
    %c0_1 = arith.constant 0 : index
    %3 = vector.load %arg8[%c0, %c0_1] : memref<2048x16xf32, #tpu.memory_space<vmem>>, vector<2048x16xf32>
    %c0_2 = arith.constant 0 : index
    %c0_3 = arith.constant 0 : index
    %4 = vector.load %arg3[%c0_2, %c0_3] : memref<2048x32xbf16, #tpu.memory_space<vmem>>, vector<2048x32xbf16>
    %c0_4 = arith.constant 0 : index
    %c0_5 = arith.constant 0 : index
    %5 = vector.load %arg4[%c0_4, %c0_5] : memref<32x16xbf16, #tpu.memory_space<vmem>>, vector<32x16xbf16>
    %cst = arith.constant dense<0.000000e+00> : vector<2048x16xf32>
    %6 = tpu.matmul %4, %5, %cst {dimension_numbers = #tpu.dot_dimension_numbers<[1], [0], [0], [1], [0, 0, 1, 1], [], []>} : vector<2048x32xbf16>, vector<32x16xbf16>, vector<2048x16xf32> -> vector<2048x16xf32>
    %7 = arith.addf %3, %6 : vector<2048x16xf32>
    %c0_6 = arith.constant 0 : index
    %c0_7 = arith.constant 0 : index
    %8 = vector.load %arg8[%c0_6, %c0_7] : memref<2048x16xf32, #tpu.memory_space<vmem>>, vector<2048x16xf32>
    tpu.vector_store %arg8[%c0_6, %c0_7], %7 {strides = array<i32>} : memref<2048x16xf32, #tpu.memory_space<vmem>>, vector<2048x16xf32>,
    %c0_i32_8 = arith.constant 0 : i32
    %9 = arith.cmpi eq, %arg2, %c0_i32_8 : i32
    %10 = arith.extui %9 : i1 to i32
    %c0_i32_9 = arith.constant 0 : i32
    %11 = arith.cmpi ne, %10, %c0_i32_9 : i32
    scf.if %11 {
      %c0_10 = arith.constant 0 : index
      %c0_11 = arith.constant 0 : index
      %12 = vector.load %arg8[%c0_10, %c0_11] : memref<2048x16xf32, #tpu.memory_space<vmem>>, vector<2048x16xf32>
      %c0_12 = arith.constant 0 : index
      %c0_13 = arith.constant 0 : index
      %13 = vector.load %arg5[%c0_12, %c0_13] : memref<1x16xf32, #tpu.memory_space<vmem>>, vector<1x16xf32>
      %14 = vector.broadcast %13 : vector<1x16xf32> to vector<2048x16xf32>
      %15 = arith.mulf %12, %14 : vector<2048x16xf32>
      %c0_14 = arith.constant 0 : index
      %c0_15 = arith.constant 0 : index
      %16 = vector.load %arg6[%c0_14, %c0_15] : memref<1x16xf32, #tpu.memory_space<vmem>>, vector<1x16xf32>
      %17 = vector.broadcast %16 : vector<1x16xf32> to vector<2048x16xf32>
      %18 = arith.addf %15, %17 : vector<2048x16xf32>
      %cst_16 = arith.constant 0.000000e+00 : f32
      %19 = vector.broadcast %cst_16 : f32 to vector<2048x16xf32>
      %20 = arith.maximumf %18, %19 : vector<2048x16xf32>
      %21 = arith.truncf %20 : vector<2048x16xf32> to vector<2048x16xbf16>
      %c0_17 = arith.constant 0 : index
      %c0_18 = arith.constant 0 : index
      %22 = vector.load %arg7[%c0_17, %c0_18] : memref<2048x16xbf16, #tpu.memory_space<vmem>>, vector<2048x16xbf16>
      tpu.vector_store %arg7[%c0_17, %c0_18], %21 {strides = array<i32>} : memref<2048x16xbf16, #tpu.memory_space<vmem>>, vector<2048x16xbf16>,
    } else {
    }
    return
  }
  func.func @transform_0(%arg0: i32, %arg1: i32, %arg2: i32) -> (i32, i32) {
    %c0_i32 = arith.constant 0 : i32
    return %arg0, %arg2 : i32, i32
  }
  func.func @transform_1(%arg0: i32, %arg1: i32, %arg2: i32) -> (i32, i32) {
    %c0_i32 = arith.constant 0 : i32
    return %arg2, %arg1 : i32, i32
  }
  func.func @transform_2(%arg0: i32, %arg1: i32, %arg2: i32) -> (i32, i32) {
    %c0_i32 = arith.constant 0 : i32
    %c0_i32_0 = arith.constant 0 : i32
    return %c0_i32, %arg1 : i32, i32
  }
  func.func @transform_3(%arg0: i32, %arg1: i32, %arg2: i32) -> (i32, i32) {
    %c0_i32 = arith.constant 0 : i32
    %c0_i32_0 = arith.constant 0 : i32
    return %c0_i32, %arg1 : i32, i32
  }
  func.func @transform_4(%arg0: i32, %arg1: i32, %arg2: i32) -> (i32, i32) {
    %c0_i32 = arith.constant 0 : i32
    return %arg0, %arg1 : i32, i32
  }
}

</mosaic_0001>

<llo_original>
// kernel: matmul_fused.1
$region0: #{matmul_fused.1}
  #allocation0 [shape = 'u32[]', space=smem, size = 0x4, offset = 0x4, fixed_abs, tag = 'smem constant byte address 0x4 - core index']
  #allocation1 [shape = 'u32[72,128]{1,0:T(1,128)}', space=vmem, size = 0x9000, scoped, tag = 'internal scratch']
  #allocation2 [shape = 'f32[2048,16]{1,0:T(8,128)}', space=vmem, size = 0x100000, scoped, tag = 'scratch operand']
  %s0 = inlined_call_operand.vmem [shape: bf16[69632,32], index: 0, kind: input, shape index: {}]
  %s1 = inlined_call_operand.vmem [shape: bf16[32,16], index: 1, kind: input, shape index: {}]
  %s2 = inlined_call_operand.vmem [shape: f32[1,16], index: 2, kind: input, shape index: {}]
  %s3 = inlined_call_operand.vmem [shape: f32[1,16], index: 3, kind: input, shape index: {}]
  %s4 = inlined_call_operand.vmem [shape: bf16[69632,16], index: 4, kind: output, shape index: {}]
  %s5 = sld [smem:[#allocation0]]
  $region57: #{matmul_fused.1} parent=0
    _
  %s7 = ssub.s32 1, %s5
  %s8 = scalar_select 0, %s7, %s5
  loop: start=0, step=1, limit=36
  $region2: #{matmul_fused.1} parent=0 // loop_pre_header
    _
  $region3: #{matmul_fused.1} parent=0 // loop_header
    %s10 = sphi 0, %s14
    %p11 = scmp.ge.s32.totalorder %s10, 36
    %s17 = sphi 0, %s36
    %s18 = sphi 0, %s32
    %s19 = sphi 0, %s28
    %s20 = sphi 0, %s17
    %s21 = sphi 0, %s18
    %s22 = sphi 0, %s19
    %s23 = sphi 0, %s20
    %s24 = sphi 0, %s21
    %s25 = sphi 0, %s22
    %s41 = sphi 0, %s43
    %s44 = sphi 0, %s41
    %s45 = sphi 0, %s44
    %s61 = sphi 0, %s45
    %s69 = sphi 0, %s71
    %s72 = sphi 0, %s69
    %s73 = sphi 0, %s72
    %s89 = sphi 0, %s73
    %s95 = sphi 0, %s97
    %s98 = sphi 0, %s95
    %s99 = sphi 0, %s98
    %s115 = sphi 0, %s99
    %s121 = sphi 0, %s123
    %s124 = sphi 0, %s121
    %s125 = sphi 0, %s124
    %s141 = sphi 0, %s125
    %s149 = sphi 0, %s151
    %s152 = sphi 0, %s149
    %s153 = sphi 0, %s152
    %s169 = sphi 0, %s153
  $region4: #{matmul_fused.1} parent=0 // loop_header_branch
    %13 = sbr.rel (%p11) target = $region8
  $region5: #{matmul_fused.1} parent=0 // loop_body
    %s15 = ssub.s32 %s10, 1
    %s16 = ssub.s32 %s10, 2
    %s26 = sadd.s32 1, %s19
    %p27 = scmp.ge.s32.totalorder %s26, 1
    %s28 = scalar_select %p27, 0, %s26
    %s29 = sadd.s32 1, %s18
    %s30 = scalar_select %p27, %s29, %s18
    %p31 = scmp.ge.s32.totalorder %s30, 1
    %s32 = scalar_select %p31, 0, %s30
    %s33 = sadd.s32 1, %s17
    %s34 = scalar_select %p31, %s33, %s17
    %p35 = scmp.ge.s32.totalorder %s34, 34
    %s36 = scalar_select %p35, 0, %s34
    %s37 = ssub.s32 %s17, %s36
    %s38 = ssub.s32 %s19, %s28
    %s39 = sor.u32 %s37, %s38
    %p40 = scmp.eq.s32.totalorder %s39, 0
    %s42 = sadd.s32 %s41, 1
    %s43 = scalar_select %p40, %s41, %s42
    %p46 = pneg %p40
    %p47 = scmp.eq.s32.totalorder %s10, 33
    %p48 = por %p46, %p47
    %p49 = scmp.ne.s32.totalorder %s41, %s44
    %p50 = scmp.eq.s32.totalorder %s10, 0
    %p51 = por %p49, %p50
    %p52 = scmp.ne.s32.totalorder %s41, %s44
    %p53 = scmp.eq.s32.totalorder %s15, 33
    %p54 = por %p52, %p53
    %p55 = scmp.ne.s32.totalorder %s44, %s45
    %p56 = scmp.eq.s32.totalorder %s15, 0
    %p57 = por %p55, %p56
    %p58 = scmp.ne.s32.totalorder %s44, %s45
    %p59 = scmp.eq.s32.totalorder %s16, 33
    %p60 = por %p58, %p59
    %p62 = scmp.ne.s32.totalorder %s45, %s61
    %p63 = scmp.eq.s32.totalorder %s16, 0
    %p64 = por %p62, %p63
    %s65 = ssub.s32 %s19, %s28
    %s66 = ssub.s32 %s18, %s32
    %s67 = sor.u32 %s65, %s66
    %p68 = scmp.eq.s32.totalorder %s67, 0
    %s70 = sadd.s32 %s69, 1
    %s71 = scalar_select %p68, %s69, %s70
    %p74 = pneg %p68
    %p75 = scmp.eq.s32.totalorder %s10, 33
    %p76 = por %p74, %p75
    %p77 = scmp.ne.s32.totalorder %s69, %s72
    %p78 = scmp.eq.s32.totalorder %s10, 0
    %p79 = por %p77, %p78
    %p80 = scmp.ne.s32.totalorder %s69, %s72
    %p81 = scmp.eq.s32.totalorder %s15, 33
    %p82 = por %p80, %p81
    %p83 = scmp.ne.s32.totalorder %s72, %s73
    %p84 = scmp.eq.s32.totalorder %s15, 0
    %p85 = por %p83, %p84
    %p86 = scmp.ne.s32.totalorder %s72, %s73
    %p87 = scmp.eq.s32.totalorder %s16, 33
    %p88 = por %p86, %p87
    %p90 = scmp.ne.s32.totalorder %s73, %s89
    %p91 = scmp.eq.s32.totalorder %s16, 0
    %p92 = por %p90, %p91
    %s93 = ssub.s32 %s18, %s32
    %p94 = scmp.eq.s32.totalorder %s93, 0
    %s96 = sadd.s32 %s95, 1
    %s97 = scalar_select %p94, %s95, %s96
    %p100 = pneg %p94
    %p101 = scmp.eq.s32.totalorder %s10, 33
    %p102 = por %p100, %p101
    %p103 = scmp.ne.s32.totalorder %s95, %s98
    %p104 = scmp.eq.s32.totalorder %s10, 0
    %p105 = por %p103, %p104
    %p106 = scmp.ne.s32.totalorder %s95, %s98
    %p107 = scmp.eq.s32.totalorder %s15, 33
    %p108 = por %p106, %p107
    %p109 = scmp.ne.s32.totalorder %s98, %s99
    %p110 = scmp.eq.s32.totalorder %s15, 0
    %p111 = por %p109, %p110
    %p112 = scmp.ne.s32.totalorder %s98, %s99
    %p113 = scmp.eq.s32.totalorder %s16, 33
    %p114 = por %p112, %p113
    %p116 = scmp.ne.s32.totalorder %s99, %s115
    %p117 = scmp.eq.s32.totalorder %s16, 0
    %p118 = por %p116, %p117
    %s119 = ssub.s32 %s18, %s32
    %p120 = scmp.eq.s32.totalorder %s119, 0
    %s122 = sadd.s32 %s121, 1
    %s123 = scalar_select %p120, %s121, %s122
    %p126 = pneg %p120
    %p127 = scmp.eq.s32.totalorder %s10, 33
    %p128 = por %p126, %p127
    %p129 = scmp.ne.s32.totalorder %s121, %s124
    %p130 = scmp.eq.s32.totalorder %s10, 0
    %p131 = por %p129, %p130
    %p132 = scmp.ne.s32.totalorder %s121, %s124
    %p133 = scmp.eq.s32.totalorder %s15, 33
    %p134 = por %p132, %p133
    %p135 = scmp.ne.s32.totalorder %s124, %s125
    %p136 = scmp.eq.s32.totalorder %s15, 0
    %p137 = por %p135, %p136
    %p138 = scmp.ne.s32.totalorder %s124, %s125
    %p139 = scmp.eq.s32.totalorder %s16, 33
    %p140 = por %p138, %p139
    %p142 = scmp.ne.s32.totalorder %s125, %s141
    %p143 = scmp.eq.s32.totalorder %s16, 0
    %p144 = por %p142, %p143
    %s145 = ssub.s32 %s17, %s36
    %s146 = ssub.s32 %s18, %s32
    %s147 = sor.u32 %s145, %s146
    %p148 = scmp.eq.s32.totalorder %s147, 0
    %s150 = sadd.s32 %s149, 1
    %s151 = scalar_select %p148, %s149, %s150
    %p154 = pneg %p148
    %p155 = scmp.eq.s32.totalorder %s10, 33
    %p156 = por %p154, %p155
    %p157 = scmp.ne.s32.totalorder %s149, %s152
    %p158 = scmp.eq.s32.totalorder %s10, 0
    %p159 = por %p157, %p158
    %p160 = scmp.ne.s32.totalorder %s149, %s152
    %p161 = scmp.eq.s32.totalorder %s15, 33
    %p162 = por %p160, %p161
    %p163 = scmp.ne.s32.totalorder %s152, %s153
    %p164 = scmp.eq.s32.totalorder %s15, 0
    %p165 = por %p163, %p164
    %p166 = scmp.ne.s32.totalorder %s152, %s153
    %p167 = scmp.eq.s32.totalorder %s16, 33
    %p168 = por %p166, %p167
    %p170 = scmp.ne.s32.totalorder %s153, %s169
    %p171 = scmp.eq.s32.totalorder %s16, 0
    %p172 = por %p170, %p171
    %p173 = scmp.le.s32.totalorder 1, %s10
    %p174 = scmp.lt.s32.totalorder %s10, 35
    %p175 = pnand %p173, %p174
    %p176 = pneg %p175
    // Predicated region
    $region9: #{matmul_fused.1} parent=5 // pred_check
      _
    $region10: #{matmul_fused.1} parent=5 // pred_check_branch
      %178 = sbr.rel (%p175) target = $region12
    $region11: #{matmul_fused.1} parent=5 // pred_region
      %s179 = ssub.s32 %s10, 1
      // Predicated region
      $region13: #{matmul_fused.1} parent=11 // pred_check
        %p180 = pneg %p85
      $region14: #{matmul_fused.1} parent=11 // pred_check_branch
        %182 = sbr.rel (%p180) target = $region16
      $region15: #{matmul_fused.1} parent=11 // pred_region
        %s183 = smul.u32 4, %s22
        %p184 = scmp.lt.s32.totalorder %s183, 3
        %s185 = scalar_select %p184, %s183, 3
        %p186 = scmp.lt.s32.totalorder %s21, 0
        %s187 = scalar_select %p186, %s21, 0
        %s188 = sadd.s32 %s187, %s185
        %s189 = smul.addr %s188, 4
        %s190 = scalar_lea.vmem %s1, %s189
        %s191 = smul.u32 4, %s22
      $region16: #{matmul_fused.1} parent=11 // pred_fallthru
        _
      // Predicated region
      $region17: #{matmul_fused.1} parent=11 // pred_check
        %p192 = pneg %p111
      $region18: #{matmul_fused.1} parent=11 // pred_check_branch
        %194 = sbr.rel (%p192) target = $region20
      $region19: #{matmul_fused.1} parent=11 // pred_region
        %p195 = scmp.lt.s32.totalorder %s21, 0
        %s196 = scalar_select %p195, %s21, 0
        %s197 = scalar_lea.vmem %s2, %s196
      $region20: #{matmul_fused.1} parent=11 // pred_fallthru
        _
      // Predicated region
      $region21: #{matmul_fused.1} parent=11 // pred_check
        %p198 = pneg %p137
      $region22: #{matmul_fused.1} parent=11 // pred_check_branch
        %200 = sbr.rel (%p198) target = $region24
      $region23: #{matmul_fused.1} parent=11 // pred_region
        %p201 = scmp.lt.s32.totalorder %s21, 0
        %s202 = scalar_select %p201, %s21, 0
        %s203 = scalar_lea.vmem %s3, %s202
      $region24: #{matmul_fused.1} parent=11 // pred_fallthru
        _
    $region12: #{matmul_fused.1} parent=5 // pred_fallthru
      _
    %p204 = scmp.lt.s32.totalorder %s10, 34
    // Predicated region
    $region25: #{matmul_fused.1} parent=5 // pred_check
      %p205 = pneg %p204
    $region26: #{matmul_fused.1} parent=5 // pred_check_branch
      %207 = sbr.rel (%p205) target = $region28
    $region27: #{matmul_fused.1} parent=5 // pred_region
      // Predicated region
      $region29: #{matmul_fused.1} parent=27 // pred_check
        %p208 = pneg %p51
      $region30: #{matmul_fused.1} parent=27 // pred_check_branch
        %210 = sbr.rel (%p208) target = $region32
      $region31: #{matmul_fused.1} parent=27 // pred_region
        %s211 = smul.u32 256, %s17
        %p212 = scmp.lt.s32.totalorder %s211, 8703
        %s213 = scalar_select %p212, %s211, 8703
        %p214 = scmp.lt.s32.totalorder %s19, 0
        %s215 = scalar_select %p214, %s19, 0
        %s216 = sadd.s32 %s215, %s213
        %s217 = smul.addr %s216, 4
        %s218 = scalar_lea.vmem %s0, %s217
        %s219 = smul.u32 256, %s17
      $region32: #{matmul_fused.1} parent=27 // pred_fallthru
        _
    $region28: #{matmul_fused.1} parent=5 // pred_fallthru
      _
    %p220 = scmp.le.s32.totalorder 1, %s10
    %p221 = scmp.lt.s32.totalorder %s10, 35
    %p222 = pnand %p220, %p221
    %p223 = pneg %p222
    // Predicated region
    $region33: #{matmul_fused.1} parent=5 // pred_check
      _
    $region34: #{matmul_fused.1} parent=5 // pred_check_branch
      %225 = sbr.rel (%p222) target = $region36
    $region35: #{matmul_fused.1} parent=5 // pred_region
      %s226 = ssub.s32 %s10, 1
      %s227 = smul.u32 256, %s20
      %p228 = scmp.lt.s32.totalorder %s227, 8703
      %s229 = scalar_select %p228, %s227, 8703
      %p230 = scmp.lt.s32.totalorder %s22, 0
      %s231 = scalar_select %p230, %s22, 0
      %s232 = sadd.s32 %s231, %s229
      %s233 = smul.addr %s232, 4
      %s234 = scalar_lea.vmem %s0, %s233
      %p235 = pneg %p57
      %p236 = pneg %p54
      %s237 = smul.u32 4, %s22
      %p238 = scmp.lt.s32.totalorder %s237, 3
      %s239 = scalar_select %p238, %s237, 3
      %p240 = scmp.lt.s32.totalorder %s21, 0
      %s241 = scalar_select %p240, %s21, 0
      %s242 = sadd.s32 %s241, %s239
      %s243 = smul.addr %s242, 4
      %s244 = scalar_lea.vmem %s1, %s243
      %p245 = pneg %p85
      %p246 = pneg %p82
      %p247 = scmp.lt.s32.totalorder %s21, 0
      %s248 = scalar_select %p247, %s21, 0
      %s249 = scalar_lea.vmem %s2, %s248
      %p250 = pneg %p111
      %p251 = pneg %p108
      %p252 = scmp.lt.s32.totalorder %s21, 0
      %s253 = scalar_select %p252, %s21, 0
      %s254 = scalar_lea.vmem %s3, %s253
      %p255 = pneg %p137
      %p256 = pneg %p134
      %p257 = pneg %p165
      %p258 = pneg %p162
      %s259 = smul.u32 256, %s20
      %p260 = scmp.lt.s32.totalorder %s259, 8703
      %s261 = scalar_select %p260, %s259, 8703
      %p262 = scmp.lt.s32.totalorder %s21, 0
      %s263 = scalar_select %p262, %s21, 0
      %s264 = sadd.s32 %s263, %s261
      %s265 = smul.addr %s264, 4
      %s266 = scalar_lea.vmem %s4, %s265
      %s267 = smul.u32 256, %s20
      %p268 = scmp.lt.s32.totalorder %s267, 8703
      %s269 = scalar_select %p268, %s267, 8703
      %p270 = scmp.lt.s32.totalorder %s22, 0
      %s271 = scalar_select %p270, %s22, 0
      %s272 = sadd.s32 %s271, %s269
      %s273 = smul.addr %s272, 4
      %s274 = scalar_lea.vmem %s0, %s273
      %s275 = smul.u32 256, %s20
      %s276 = smul.u32 4, %s22
      %p277 = scmp.lt.s32.totalorder %s276, 3
      %s278 = scalar_select %p277, %s276, 3
      %p279 = scmp.lt.s32.totalorder %s21, 0
      %s280 = scalar_select %p279, %s21, 0
      %s281 = sadd.s32 %s280, %s278
      %s282 = smul.addr %s281, 4
      %s283 = scalar_lea.vmem %s1, %s282
      %s284 = smul.u32 4, %s22
      %p285 = scmp.lt.s32.totalorder %s21, 0
      %s286 = scalar_select %p285, %s21, 0
      %s287 = scalar_lea.vmem %s2, %s286
      %p288 = scmp.lt.s32.totalorder %s21, 0
      %s289 = scalar_select %p288, %s21, 0
      %s290 = scalar_lea.vmem %s3, %s289
      %s291 = smul.u32 256, %s20
      %p292 = scmp.lt.s32.totalorder %s291, 8703
      %s293 = scalar_select %p292, %s291, 8703
      %p294 = scmp.lt.s32.totalorder %s21, 0
      %s295 = scalar_select %p294, %s21, 0
      %s296 = sadd.s32 %s295, %s293
      %s297 = smul.addr %s296, 4
      %s298 = scalar_lea.vmem %s4, %s297
      %s299 = smul.u32 256, %s20
      %p301 = scmp.eq.s32.totalorder %s22, 0
      // Predicated region
      $region37: #{matmul_fused.1} parent=35 // pred_check
        %p302 = pneg %p301
      $region38: #{matmul_fused.1} parent=35 // pred_check_branch
        %304 = sbr.rel (%p302) target = $region40
      $region39: #{matmul_fused.1} parent=35 // pred_region
        %vm305 = vcmask 130048
        %306 = vst.msk [vmem:[#allocation2] sm:$0xff] %vm305, 0.0
        %307 = vst.msk [vmem:[#allocation2 + $0x8] sm:$0xff] %vm305, 0.0
        %308 = vst.msk [vmem:[#allocation2 + $0x10] sm:$0xff] %vm305, 0.0
        %309 = vst.msk [vmem:[#allocation2 + $0x18] sm:$0xff] %vm305, 0.0
        %310 = vst.msk [vmem:[#allocation2 + $0x20] sm:$0xff] %vm305, 0.0
        %311 = vst.msk [vmem:[#allocation2 + $0x28] sm:$0xff] %vm305, 0.0
        %312 = vst.msk [vmem:[#allocation2 + $0x30] sm:$0xff] %vm305, 0.0
        %313 = vst.msk [vmem:[#allocation2 + $0x38] sm:$0xff] %vm305, 0.0
        %314 = vst.msk [vmem:[#allocation2 + $0x40] sm:$0xff] %vm305, 0.0
        %315 = vst.msk [vmem:[#allocation2 + $0x48] sm:$0xff] %vm305, 0.0
        %316 = vst.msk [vmem:[#allocation2 + $0x50] sm:$0xff] %vm305, 0.0
        %317 = vst.msk [vmem:[#allocation2 + $0x58] sm:$0xff] %vm305, 0.0
        %318 = vst.msk [vmem:[#allocation2 + $0x60] sm:$0xff] %vm305, 0.0
        %319 = vst.msk [vmem:[#allocation2 + $0x68] sm:$0xff] %vm305, 0.0
        %320 = vst.msk [vmem:[#allocation2 + $0x70] sm:$0xff] %vm305, 0.0
        %321 = vst.msk [vmem:[#allocation2 + $0x78] sm:$0xff] %vm305, 0.0
        %322 = vst.msk [vmem:[#allocation2 + $0x80] sm:$0xff] %vm305, 0.0
        %323 = vst.msk [vmem:[#allocation2 + $0x88] sm:$0xff] %vm305, 0.0
        %324 = vst.msk [vmem:[#allocation2 + $0x90] sm:$0xff] %vm305, 0.0
        %325 = vst.msk [vmem:[#allocation2 + $0x98] sm:$0xff] %vm305, 0.0
        %326 = vst.msk [vmem:[#allocation2 + $0xa0] sm:$0xff] %vm305, 0.0
        %327 = vst.msk [vmem:[#allocation2 + $0xa8] sm:$0xff] %vm305, 0.0
        %328 = vst.msk [vmem:[#allocation2 + $0xb0] sm:$0xff] %vm305, 0.0
        %329 = vst.msk [vmem:[#allocation2 + $0xb8] sm:$0xff] %vm305, 0.0
        %330 = vst.msk [vmem:[#allocation2 + $0xc0] sm:$0xff] %vm305, 0.0
        %331 = vst.msk [vmem:[#allocation2 + $0xc8] sm:$0xff] %vm305, 0.0
        %332 = vst.msk [vmem:[#allocation2 + $0xd0] sm:$0xff] %vm305, 0.0
        %333 = vst.msk [vmem:[#allocation2 + $0xd8] sm:$0xff] %vm305, 0.0
        %334 = vst.msk [vmem:[#allocation2 + $0xe0] sm:$0xff] %vm305, 0.0
        %335 = vst.msk [vmem:[#allocation2 + $0xe8] sm:$0xff] %vm305, 0.0
        %336 = vst.msk [vmem:[#allocation2 + $0xf0] sm:$0xff] %vm305, 0.0
        %337 = vst.msk [vmem:[#allocation2 + $0xf8] sm:$0xff] %vm305, 0.0
        %338 = vst.msk [vmem:[#allocation2 + $0x100] sm:$0xff] %vm305, 0.0
        %339 = vst.msk [vmem:[#allocation2 + $0x108] sm:$0xff] %vm305, 0.0
        %340 = vst.msk [vmem:[#allocation2 + $0x110] sm:$0xff] %vm305, 0.0
        %341 = vst.msk [vmem:[#allocation2 + $0x118] sm:$0xff] %vm305, 0.0
        %342 = vst.msk [vmem:[#allocation2 + $0x120] sm:$0xff] %vm305, 0.0
        %343 = vst.msk [vmem:[#allocation2 + $0x128] sm:$0xff] %vm305, 0.0
        %344 = vst.msk [vmem:[#allocation2 + $0x130] sm:$0xff] %vm305, 0.0
        %345 = vst.msk [vmem:[#allocation2 + $0x138] sm:$0xff] %vm305, 0.0
        %346 = vst.msk [vmem:[#allocation2 + $0x140] sm:$0xff] %vm305, 0.0
        %347 = vst.msk [vmem:[#allocation2 + $0x148] sm:$0xff] %vm305, 0.0
        %348 = vst.msk [vmem:[#allocation2 + $0x150] sm:$0xff] %vm305, 0.0
        %349 = vst.msk [vmem:[#allocation2 + $0x158] sm:$0xff] %vm305, 0.0
        %350 = vst.msk [vmem:[#allocation2 + $0x160] sm:$0xff] %vm305, 0.0
        %351 = vst.msk [vmem:[#allocation2 + $0x168] sm:$0xff] %vm305, 0.0
        %352 = vst.msk [vmem:[#allocation2 + $0x170] sm:$0xff] %vm305, 0.0
        %353 = vst.msk [vmem:[#allocation2 + $0x178] sm:$0xff] %vm305, 0.0
        %354 = vst.msk [vmem:[#allocation2 + $0x180] sm:$0xff] %vm305, 0.0
        %355 = vst.msk [vmem:[#allocation2 + $0x188] sm:$0xff] %vm305, 0.0
        %356 = vst.msk [vmem:[#allocation2 + $0x190] sm:$0xff] %vm305, 0.0
        %357 = vst.msk [vmem:[#allocation2 + $0x198] sm:$0xff] %vm305, 0.0
        %358 = vst.msk [vmem:[#allocation2 + $0x1a0] sm:$0xff] %vm305, 0.0
        %359 = vst.msk [vmem:[#allocation2 + $0x1a8] sm:$0xff] %vm305, 0.0
        %360 = vst.msk [vmem:[#allocation2 + $0x1b0] sm:$0xff] %vm305, 0.0
        %361 = vst.msk [vmem:[#allocation2 + $0x1b8] sm:$0xff] %vm305, 0.0
        %362 = vst.msk [vmem:[#allocation2 + $0x1c0] sm:$0xff] %vm305, 0.0
        %363 = vst.msk [vmem:[#allocation2 + $0x1c8] sm:$0xff] %vm305, 0.0
        %364 = vst.msk [vmem:[#allocation2 + $0x1d0] sm:$0xff] %vm305, 0.0
        %365 = vst.msk [vmem:[#allocation2 + $0x1d8] sm:$0xff] %vm305, 0.0
        %366 = vst.msk [vmem:[#allocation2 + $0x1e0] sm:$0xff] %vm305, 0.0
        %367 = vst.msk [vmem:[#allocation2 + $0x1e8] sm:$0xff] %vm305, 0.0
        %368 = vst.msk [vmem:[#allocation2 + $0x1f0] sm:$0xff] %vm305, 0.0
        %369 = vst.msk [vmem:[#allocation2 + $0x1f8] sm:$0xff] %vm305, 0.0
        %370 = vst.msk [vmem:[#allocation2 + $0x200] sm:$0xff] %vm305, 0.0
        %371 = vst.msk [vmem:[#allocation2 + $0x208] sm:$0xff] %vm305, 0.0
        %372 = vst.msk [vmem:[#allocation2 + $0x210] sm:$0xff] %vm305, 0.0
        %373 = vst.msk [vmem:[#allocation2 + $0x218] sm:$0xff] %vm305, 0.0
        %374 = vst.msk [vmem:[#allocation2 + $0x220] sm:$0xff] %vm305, 0.0
        %375 = vst.msk [vmem:[#allocation2 + $0x228] sm:$0xff] %vm305, 0.0
        %376 = vst.msk [vmem:[#allocation2 + $0x230] sm:$0xff] %vm305, 0.0
        %377 = vst.msk [vmem:[#allocation2 + $0x238] sm:$0xff] %vm305, 0.0
        %378 = vst.msk [vmem:[#allocation2 + $0x240] sm:$0xff] %vm305, 0.0
        %379 = vst.msk [vmem:[#allocation2 + $0x248] sm:$0xff] %vm305, 0.0
        %380 = vst.msk [vmem:[#allocation2 + $0x250] sm:$0xff] %vm305, 0.0
        %381 = vst.msk [vmem:[#allocation2 + $0x258] sm:$0xff] %vm305, 0.0
        %382 = vst.msk [vmem:[#allocation2 + $0x260] sm:$0xff] %vm305, 0.0
        %383 = vst.msk [vmem:[#allocation2 + $0x268] sm:$0xff] %vm305, 0.0
        %384 = vst.msk [vmem:[#allocation2 + $0x270] sm:$0xff] %vm305, 0.0
        %385 = vst.msk [vmem:[#allocation2 + $0x278] sm:$0xff] %vm305, 0.0
        %386 = vst.msk [vmem:[#allocation2 + $0x280] sm:$0xff] %vm305, 0.0
        %387 = vst.msk [vmem:[#allocation2 + $0x288] sm:$0xff] %vm305, 0.0
        %388 = vst.msk [vmem:[#allocation2 + $0x290] sm:$0xff] %vm305, 0.0
        %389 = vst.msk [vmem:[#allocation2 + $0x298] sm:$0xff] %vm305, 0.0
        %390 = vst.msk [vmem:[#allocation2 + $0x2a0] sm:$0xff] %vm305, 0.0
        %391 = vst.msk [vmem:[#allocation2 + $0x2a8] sm:$0xff] %vm305, 0.0
        %392 = vst.msk [vmem:[#allocation2 + $0x2b0] sm:$0xff] %vm305, 0.0
        %393 = vst.msk [vmem:[#allocation2 + $0x2b8] sm:$0xff] %vm305, 0.0
        %394 = vst.msk [vmem:[#allocation2 + $0x2c0] sm:$0xff] %vm305, 0.0
        %395 = vst.msk [vmem:[#allocation2 + $0x2c8] sm:$0xff] %vm305, 0.0
        %396 = vst.msk [vmem:[#allocation2 + $0x2d0] sm:$0xff] %vm305, 0.0
        %397 = vst.msk [vmem:[#allocation2 + $0x2d8] sm:$0xff] %vm305, 0.0
        %398 = vst.msk [vmem:[#allocation2 + $0x2e0] sm:$0xff] %vm305, 0.0
        %399 = vst.msk [vmem:[#allocation2 + $0x2e8] sm:$0xff] %vm305, 0.0
        %400 = vst.msk [vmem:[#allocation2 + $0x2f0] sm:$0xff] %vm305, 0.0
        %401 = vst.msk [vmem:[#allocation2 + $0x2f8] sm:$0xff] %vm305, 0.0
        %402 = vst.msk [vmem:[#allocation2 + $0x300] sm:$0xff] %vm305, 0.0
        %403 = vst.msk [vmem:[#allocation2 + $0x308] sm:$0xff] %vm305, 0.0
        %404 = vst.msk [vmem:[#allocation2 + $0x310] sm:$0xff] %vm305, 0.0
        %405 = vst.msk [vmem:[#allocation2 + $0x318] sm:$0xff] %vm305, 0.0
        %406 = vst.msk [vmem:[#allocation2 + $0x320] sm:$0xff] %vm305, 0.0
        %407 = vst.msk [vmem:[#allocation2 + $0x328] sm:$0xff] %vm305, 0.0
        %408 = vst.msk [vmem:[#allocation2 + $0x330] sm:$0xff] %vm305, 0.0
        %409 = vst.msk [vmem:[#allocation2 + $0x338] sm:$0xff] %vm305, 0.0
        %410 = vst.msk [vmem:[#allocation2 + $0x340] sm:$0xff] %vm305, 0.0
        %411 = vst.msk [vmem:[#allocation2 + $0x348] sm:$0xff] %vm305, 0.0
        %412 = vst.msk [vmem:[#allocation2 + $0x350] sm:$0xff] %vm305, 0.0
        %413 = vst.msk [vmem:[#allocation2 + $0x358] sm:$0xff] %vm305, 0.0
        %414 = vst.msk [vmem:[#allocation2 + $0x360] sm:$0xff] %vm305, 0.0
        %415 = vst.msk [vmem:[#allocation2 + $0x368] sm:$0xff] %vm305, 0.0
        %416 = vst.msk [vmem:[#allocation2 + $0x370] sm:$0xff] %vm305, 0.0
        %417 = vst.msk [vmem:[#allocation2 + $0x378] sm:$0xff] %vm305, 0.0
        %418 = vst.msk [vmem:[#allocation2 + $0x380] sm:$0xff] %vm305, 0.0
        %419 = vst.msk [vmem:[#allocation2 + $0x388] sm:$0xff] %vm305, 0.0
        %420 = vst.msk [vmem:[#allocation2 + $0x390] sm:$0xff] %vm305, 0.0
        %421 = vst.msk [vmem:[#allocation2 + $0x398] sm:$0xff] %vm305, 0.0
        %422 = vst.msk [vmem:[#allocation2 + $0x3a0] sm:$0xff] %vm305, 0.0
        %423 = vst.msk [vmem:[#allocation2 + $0x3a8] sm:$0xff] %vm305, 0.0
        %424 = vst.msk [vmem:[#allocation2 + $0x3b0] sm:$0xff] %vm305, 0.0
        %425 = vst.msk [vmem:[#allocation2 + $0x3b8] sm:$0xff] %vm305, 0.0
        %426 = vst.msk [vmem:[#allocation2 + $0x3c0] sm:$0xff] %vm305, 0.0
        %427 = vst.msk [vmem:[#allocation2 + $0x3c8] sm:$0xff] %vm305, 0.0
        %428 = vst.msk [vmem:[#allocation2 + $0x3d0] sm:$0xff] %vm305, 0.0
        %429 = vst.msk [vmem:[#allocation2 + $0x3d8] sm:$0xff] %vm305, 0.0
        %430 = vst.msk [vmem:[#allocation2 + $0x3e0] sm:$0xff] %vm305, 0.0
        %431 = vst.msk [vmem:[#allocation2 + $0x3e8] sm:$0xff] %vm305, 0.0
        %432 = vst.msk [vmem:[#allocation2 + $0x3f0] sm:$0xff] %vm305, 0.0
        %433 = vst.msk [vmem:[#allocation2 + $0x3f8] sm:$0xff] %vm305, 0.0
        %434 = vst.msk [vmem:[#allocation2 + $0x400] sm:$0xff] %vm305, 0.0
        %435 = vst.msk [vmem:[#allocation2 + $0x408] sm:$0xff] %vm305, 0.0
        %436 = vst.msk [vmem:[#allocation2 + $0x410] sm:$0xff] %vm305, 0.0
        %437 = vst.msk [vmem:[#allocation2 + $0x418] sm:$0xff] %vm305, 0.0
        %438 = vst.msk [vmem:[#allocation2 + $0x420] sm:$0xff] %vm305, 0.0
        %439 = vst.msk [vmem:[#allocation2 + $0x428] sm:$0xff] %vm305, 0.0
        %440 = vst.msk [vmem:[#allocation2 + $0x430] sm:$0xff] %vm305, 0.0
        %441 = vst.msk [vmem:[#allocation2 + $0x438] sm:$0xff] %vm305, 0.0
        %442 = vst.msk [vmem:[#allocation2 + $0x440] sm:$0xff] %vm305, 0.0
        %443 = vst.msk [vmem:[#allocation2 + $0x448] sm:$0xff] %vm305, 0.0
        %444 = vst.msk [vmem:[#allocation2 + $0x450] sm:$0xff] %vm305, 0.0
        %445 = vst.msk [vmem:[#allocation2 + $0x458] sm:$0xff] %vm305, 0.0
        %446 = vst.msk [vmem:[#allocation2 + $0x460] sm:$0xff] %vm305, 0.0
        %447 = vst.msk [vmem:[#allocation2 + $0x468] sm:$0xff] %vm305, 0.0
        %448 = vst.msk [vmem:[#allocation2 + $0x470] sm:$0xff] %vm305, 0.0
        %449 = vst.msk [vmem:[#allocation2 + $0x478] sm:$0xff] %vm305, 0.0
        %450 = vst.msk [vmem:[#allocation2 + $0x480] sm:$0xff] %vm305, 0.0
        %451 = vst.msk [vmem:[#allocation2 + $0x488] sm:$0xff] %vm305, 0.0
        %452 = vst.msk [vmem:[#allocation2 + $0x490] sm:$0xff] %vm305, 0.0
        %453 = vst.msk [vmem:[#allocation2 + $0x498] sm:$0xff] %vm305, 0.0
        %454 = vst.msk [vmem:[#allocation2 + $0x4a0] sm:$0xff] %vm305, 0.0
        %455 = vst.msk [vmem:[#allocation2 + $0x4a8] sm:$0xff] %vm305, 0.0
        %456 = vst.msk [vmem:[#allocation2 + $0x4b0] sm:$0xff] %vm305, 0.0
        %457 = vst.msk [vmem:[#allocation2 + $0x4b8] sm:$0xff] %vm305, 0.0
        %458 = vst.msk [vmem:[#allocation2 + $0x4c0] sm:$0xff] %vm305, 0.0
        %459 = vst.msk [vmem:[#allocation2 + $0x4c8] sm:$0xff] %vm305, 0.0
        %460 = vst.msk [vmem:[#allocation2 + $0x4d0] sm:$0xff] %vm305, 0.0
        %461 = vst.msk [vmem:[#allocation2 + $0x4d8] sm:$0xff] %vm305, 0.0
        %462 = vst.msk [vmem:[#allocation2 + $0x4e0] sm:$0xff] %vm305, 0.0
        %463 = vst.msk [vmem:[#allocation2 + $0x4e8] sm:$0xff] %vm305, 0.0
        %464 = vst.msk [vmem:[#allocation2 + $0x4f0] sm:$0xff] %vm305, 0.0
        %465 = vst.msk [vmem:[#allocation2 + $0x4f8] sm:$0xff] %vm305, 0.0
        %466 = vst.msk [vmem:[#allocation2 + $0x500] sm:$0xff] %vm305, 0.0
        %467 = vst.msk [vmem:[#allocation2 + $0x508] sm:$0xff] %vm305, 0.0
        %468 = vst.msk [vmem:[#allocation2 + $0x510] sm:$0xff] %vm305, 0.0
        %469 = vst.msk [vmem:[#allocation2 + $0x518] sm:$0xff] %vm305, 0.0
        %470 = vst.msk [vmem:[#allocation2 + $0x520] sm:$0xff] %vm305, 0.0
        %471 = vst.msk [vmem:[#allocation2 + $0x528] sm:$0xff] %vm305, 0.0
        %472 = vst.msk [vmem:[#allocation2 + $0x530] sm:$0xff] %vm305, 0.0
        %473 = vst.msk [vmem:[#allocation2 + $0x538] sm:$0xff] %vm305, 0.0
        %474 = vst.msk [vmem:[#allocation2 + $0x540] sm:$0xff] %vm305, 0.0
        %475 = vst.msk [vmem:[#allocation2 + $0x548] sm:$0xff] %vm305, 0.0
        %476 = vst.msk [vmem:[#allocation2 + $0x550] sm:$0xff] %vm305, 0.0
        %477 = vst.msk [vmem:[#allocation2 + $0x558] sm:$0xff] %vm305, 0.0
        %478 = vst.msk [vmem:[#allocation2 + $0x560] sm:$0xff] %vm305, 0.0
        %479 = vst.msk [vmem:[#allocation2 + $0x568] sm:$0xff] %vm305, 0.0
        %480 = vst.msk [vmem:[#allocation2 + $0x570] sm:$0xff] %vm305, 0.0
        %481 = vst.msk [vmem:[#allocation2 + $0x578] sm:$0xff] %vm305, 0.0
        %482 = vst.msk [vmem:[#allocation2 + $0x580] sm:$0xff] %vm305, 0.0
        %483 = vst.msk [vmem:[#allocation2 + $0x588] sm:$0xff] %vm305, 0.0
        %484 = vst.msk [vmem:[#allocation2 + $0x590] sm:$0xff] %vm305, 0.0
        %485 = vst.msk [vmem:[#allocation2 + $0x598] sm:$0xff] %vm305, 0.0
        %486 = vst.msk [vmem:[#allocation2 + $0x5a0] sm:$0xff] %vm305, 0.0
        %487 = vst.msk [vmem:[#allocation2 + $0x5a8] sm:$0xff] %vm305, 0.0
        %488 = vst.msk [vmem:[#allocation2 + $0x5b0] sm:$0xff] %vm305, 0.0
        %489 = vst.msk [vmem:[#allocation2 + $0x5b8] sm:$0xff] %vm305, 0.0
        %490 = vst.msk [vmem:[#allocation2 + $0x5c0] sm:$0xff] %vm305, 0.0
        %491 = vst.msk [vmem:[#allocation2 + $0x5c8] sm:$0xff] %vm305, 0.0
        %492 = vst.msk [vmem:[#allocation2 + $0x5d0] sm:$0xff] %vm305, 0.0
        %493 = vst.msk [vmem:[#allocation2 + $0x5d8] sm:$0xff] %vm305, 0.0
        %494 = vst.msk [vmem:[#allocation2 + $0x5e0] sm:$0xff] %vm305, 0.0
        %495 = vst.msk [vmem:[#allocation2 + $0x5e8] sm:$0xff] %vm305, 0.0
        %496 = vst.msk [vmem:[#allocation2 + $0x5f0] sm:$0xff] %vm305, 0.0
        %497 = vst.msk [vmem:[#allocation2 + $0x5f8] sm:$0xff] %vm305, 0.0
        %498 = vst.msk [vmem:[#allocation2 + $0x600] sm:$0xff] %vm305, 0.0
        %499 = vst.msk [vmem:[#allocation2 + $0x608] sm:$0xff] %vm305, 0.0
        %500 = vst.msk [vmem:[#allocation2 + $0x610] sm:$0xff] %vm305, 0.0
        %501 = vst.msk [vmem:[#allocation2 + $0x618] sm:$0xff] %vm305, 0.0
        %502 = vst.msk [vmem:[#allocation2 + $0x620] sm:$0xff] %vm305, 0.0
        %503 = vst.msk [vmem:[#allocation2 + $0x628] sm:$0xff] %vm305, 0.0
        %504 = vst.msk [vmem:[#allocation2 + $0x630] sm:$0xff] %vm305, 0.0
        %505 = vst.msk [vmem:[#allocation2 + $0x638] sm:$0xff] %vm305, 0.0
        %506 = vst.msk [vmem:[#allocation2 + $0x640] sm:$0xff] %vm305, 0.0
        %507 = vst.msk [vmem:[#allocation2 + $0x648] sm:$0xff] %vm305, 0.0
        %508 = vst.msk [vmem:[#allocation2 + $0x650] sm:$0xff] %vm305, 0.0
        %509 = vst.msk [vmem:[#allocation2 + $0x658] sm:$0xff] %vm305, 0.0
        %510 = vst.msk [vmem:[#allocation2 + $0x660] sm:$0xff] %vm305, 0.0
        %511 = vst.msk [vmem:[#allocation2 + $0x668] sm:$0xff] %vm305, 0.0
        %512 = vst.msk [vmem:[#allocation2 + $0x670] sm:$0xff] %vm305, 0.0
        %513 = vst.msk [vmem:[#allocation2 + $0x678] sm:$0xff] %vm305, 0.0
        %514 = vst.msk [vmem:[#allocation2 + $0x680] sm:$0xff] %vm305, 0.0
        %515 = vst.msk [vmem:[#allocation2 + $0x688] sm:$0xff] %vm305, 0.0
        %516 = vst.msk [vmem:[#allocation2 + $0x690] sm:$0xff] %vm305, 0.0
        %517 = vst.msk [vmem:[#allocation2 + $0x698] sm:$0xff] %vm305, 0.0
        %518 = vst.msk [vmem:[#allocation2 + $0x6a0] sm:$0xff] %vm305, 0.0
        %519 = vst.msk [vmem:[#allocation2 + $0x6a8] sm:$0xff] %vm305, 0.0
        %520 = vst.msk [vmem:[#allocation2 + $0x6b0] sm:$0xff] %vm305, 0.0
        %521 = vst.msk [vmem:[#allocation2 + $0x6b8] sm:$0xff] %vm305, 0.0
        %522 = vst.msk [vmem:[#allocation2 + $0x6c0] sm:$0xff] %vm305, 0.0
        %523 = vst.msk [vmem:[#allocation2 + $0x6c8] sm:$0xff] %vm305, 0.0
        %524 = vst.msk [vmem:[#allocation2 + $0x6d0] sm:$0xff] %vm305, 0.0
        %525 = vst.msk [vmem:[#allocation2 + $0x6d8] sm:$0xff] %vm305, 0.0
        %526 = vst.msk [vmem:[#allocation2 + $0x6e0] sm:$0xff] %vm305, 0.0
        %527 = vst.msk [vmem:[#allocation2 + $0x6e8] sm:$0xff] %vm305, 0.0
        %528 = vst.msk [vmem:[#allocation2 + $0x6f0] sm:$0xff] %vm305, 0.0
        %529 = vst.msk [vmem:[#allocation2 + $0x6f8] sm:$0xff] %vm305, 0.0
        %530 = vst.msk [vmem:[#allocation2 + $0x700] sm:$0xff] %vm305, 0.0
        %531 = vst.msk [vmem:[#allocation2 + $0x708] sm:$0xff] %vm305, 0.0
        %532 = vst.msk [vmem:[#allocation2 + $0x710] sm:$0xff] %vm305, 0.0
        %533 = vst.msk [vmem:[#allocation2 + $0x718] sm:$0xff] %vm305, 0.0
        %534 = vst.msk [vmem:[#allocation2 + $0x720] sm:$0xff] %vm305, 0.0
        %535 = vst.msk [vmem:[#allocation2 + $0x728] sm:$0xff] %vm305, 0.0
        %536 = vst.msk [vmem:[#allocation2 + $0x730] sm:$0xff] %vm305, 0.0
        %537 = vst.msk [vmem:[#allocation2 + $0x738] sm:$0xff] %vm305, 0.0
        %538 = vst.msk [vmem:[#allocation2 + $0x740] sm:$0xff] %vm305, 0.0
        %539 = vst.msk [vmem:[#allocation2 + $0x748] sm:$0xff] %vm305, 0.0
        %540 = vst.msk [vmem:[#allocation2 + $0x750] sm:$0xff] %vm305, 0.0
        %541 = vst.msk [vmem:[#allocation2 + $0x758] sm:$0xff] %vm305, 0.0
        %542 = vst.msk [vmem:[#allocation2 + $0x760] sm:$0xff] %vm305, 0.0
        %543 = vst.msk [vmem:[#allocation2 + $0x768] sm:$0xff] %vm305, 0.0
        %544 = vst.msk [vmem:[#allocation2 + $0x770] sm:$0xff] %vm305, 0.0
        %545 = vst.msk [vmem:[#allocation2 + $0x778] sm:$0xff] %vm305, 0.0
        %546 = vst.msk [vmem:[#allocation2 + $0x780] sm:$0xff] %vm305, 0.0
        %547 = vst.msk [vmem:[#allocation2 + $0x788] sm:$0xff] %vm305, 0.0
        %548 = vst.msk [vmem:[#allocation2 + $0x790] sm:$0xff] %vm305, 0.0
        %549 = vst.msk [vmem:[#allocation2 + $0x798] sm:$0xff] %vm305, 0.0
        %550 = vst.msk [vmem:[#allocation2 + $0x7a0] sm:$0xff] %vm305, 0.0
        %551 = vst.msk [vmem:[#allocation2 + $0x7a8] sm:$0xff] %vm305, 0.0
        %552 = vst.msk [vmem:[#allocation2 + $0x7b0] sm:$0xff] %vm305, 0.0
        %553 = vst.msk [vmem:[#allocation2 + $0x7b8] sm:$0xff] %vm305, 0.0
        %554 = vst.msk [vmem:[#allocation2 + $0x7c0] sm:$0xff] %vm305, 0.0
        %555 = vst.msk [vmem:[#allocation2 + $0x7c8] sm:$0xff] %vm305, 0.0
        %556 = vst.msk [vmem:[#allocation2 + $0x7d0] sm:$0xff] %vm305, 0.0
        %557 = vst.msk [vmem:[#allocation2 + $0x7d8] sm:$0xff] %vm305, 0.0
        %558 = vst.msk [vmem:[#allocation2 + $0x7e0] sm:$0xff] %vm305, 0.0
        %559 = vst.msk [vmem:[#allocation2 + $0x7e8] sm:$0xff] %vm305, 0.0
        %560 = vst.msk [vmem:[#allocation2 + $0x7f0] sm:$0xff] %vm305, 0.0
        %561 = vst.msk [vmem:[#allocation2 + $0x7f8] sm:$0xff] %vm305, 0.0
      $region40: #{matmul_fused.1} parent=35 // pred_fallthru
        _
      %v562 = vld [vmem:[#allocation2] sm:$0xff]
      %v563 = vld [vmem:[#allocation2 + $0x8] sm:$0xff]
      %v564 = vld [vmem:[#allocation2 + $0x10] sm:$0xff]
      %v565 = vld [vmem:[#allocation2 + $0x18] sm:$0xff]
      %v566 = vld [vmem:[#allocation2 + $0x20] sm:$0xff]
      %v567 = vld [vmem:[#allocation2 + $0x28] sm:$0xff]
      %v568 = vld [vmem:[#allocation2 + $0x30] sm:$0xff]
      %v569 = vld [vmem:[#allocation2 + $0x38] sm:$0xff]
      %v570 = vld [vmem:[#allocation2 + $0x40] sm:$0xff]
      %v571 = vld [vmem:[#allocation2 + $0x48] sm:$0xff]
      %v572 = vld [vmem:[#allocation2 + $0x50] sm:$0xff]
      %v573 = vld [vmem:[#allocation2 + $0x58] sm:$0xff]
      %v574 = vld [vmem:[#allocation2 + $0x60] sm:$0xff]
      %v575 = vld [vmem:[#allocation2 + $0x68] sm:$0xff]
      %v576 = vld [vmem:[#allocation2 + $0x70] sm:$0xff]
      %v577 = vld [vmem:[#allocation2 + $0x78] sm:$0xff]
      %v578 = vld [vmem:[#allocation2 + $0x80] sm:$0xff]
      %v579 = vld [vmem:[#allocation2 + $0x88] sm:$0xff]
      %v580 = vld [vmem:[#allocation2 + $0x90] sm:$0xff]
      %v581 = vld [vmem:[#allocation2 + $0x98] sm:$0xff]
      %v582 = vld [vmem:[#allocation2 + $0xa0] sm:$0xff]
      %v583 = vld [vmem:[#allocation2 + $0xa8] sm:$0xff]
      %v584 = vld [vmem:[#allocation2 + $0xb0] sm:$0xff]
      %v585 = vld [vmem:[#allocation2 + $0xb8] sm:$0xff]
      %v586 = vld [vmem:[#allocation2 + $0xc0] sm:$0xff]
      %v587 = vld [vmem:[#allocation2 + $0xc8] sm:$0xff]
      %v588 = vld [vmem:[#allocation2 + $0xd0] sm:$0xff]
      %v589 = vld [vmem:[#allocation2 + $0xd8] sm:$0xff]
      %v590 = vld [vmem:[#allocation2 + $0xe0] sm:$0xff]
      %v591 = vld [vmem:[#allocation2 + $0xe8] sm:$0xff]
      %v592 = vld [vmem:[#allocation2 + $0xf0] sm:$0xff]
      %v593 = vld [vmem:[#allocation2 + $0xf8] sm:$0xff]
      %v594 = vld [vmem:[#allocation2 + $0x100] sm:$0xff]
      %v595 = vld [vmem:[#allocation2 + $0x108] sm:$0xff]
      %v596 = vld [vmem:[#allocation2 + $0x110] sm:$0xff]
      %v597 = vld [vmem:[#allocation2 + $0x118] sm:$0xff]
      %v598 = vld [vmem:[#allocation2 + $0x120] sm:$0xff]
      %v599 = vld [vmem:[#allocation2 + $0x128] sm:$0xff]
      %v600 = vld [vmem:[#allocation2 + $0x130] sm:$0xff]
      %v601 = vld [vmem:[#allocation2 + $0x138] sm:$0xff]
      %v602 = vld [vmem:[#allocation2 + $0x140] sm:$0xff]
      %v603 = vld [vmem:[#allocation2 + $0x148] sm:$0xff]
      %v604 = vld [vmem:[#allocation2 + $0x150] sm:$0xff]
      %v605 = vld [vmem:[#allocation2 + $0x158] sm:$0xff]
      %v606 = vld [vmem:[#allocation2 + $0x160] sm:$0xff]
      %v607 = vld [vmem:[#allocation2 + $0x168] sm:$0xff]
      %v608 = vld [vmem:[#allocation2 + $0x170] sm:$0xff]
      %v609 = vld [vmem:[#allocation2 + $0x178] sm:$0xff]
      %v610 = vld [vmem:[#allocation2 + $0x180] sm:$0xff]
      %v611 = vld [vmem:[#allocation2 + $0x188] sm:$0xff]
      %v612 = vld [vmem:[#allocation2 + $0x190] sm:$0xff]
      %v613 = vld [vmem:[#allocation2 + $0x198] sm:$0xff]
      %v614 = vld [vmem:[#allocation2 + $0x1a0] sm:$0xff]
      %v615 = vld [vmem:[#allocation2 + $0x1a8] sm:$0xff]
      %v616 = vld [vmem:[#allocation2 + $0x1b0] sm:$0xff]
      %v617 = vld [vmem:[#allocation2 + $0x1b8] sm:$0xff]
      %v618 = vld [vmem:[#allocation2 + $0x1c0] sm:$0xff]
      %v619 = vld [vmem:[#allocation2 + $0x1c8] sm:$0xff]
      %v620 = vld [vmem:[#allocation2 + $0x1d0] sm:$0xff]
      %v621 = vld [vmem:[#allocation2 + $0x1d8] sm:$0xff]
      %v622 = vld [vmem:[#allocation2 + $0x1e0] sm:$0xff]
      %v623 = vld [vmem:[#allocation2 + $0x1e8] sm:$0xff]
      %v624 = vld [vmem:[#allocation2 + $0x1f0] sm:$0xff]
      %v625 = vld [vmem:[#allocation2 + $0x1f8] sm:$0xff]
      %v626 = vld [vmem:[#allocation2 + $0x200] sm:$0xff]
      %v627 = vld [vmem:[#allocation2 + $0x208] sm:$0xff]
      %v628 = vld [vmem:[#allocation2 + $0x210] sm:$0xff]
      %v629 = vld [vmem:[#allocation2 + $0x218] sm:$0xff]
      %v630 = vld [vmem:[#allocation2 + $0x220] sm:$0xff]
      %v631 = vld [vmem:[#allocation2 + $0x228] sm:$0xff]
      %v632 = vld [vmem:[#allocation2 + $0x230] sm:$0xff]
      %v633 = vld [vmem:[#allocation2 + $0x238] sm:$0xff]
      %v634 = vld [vmem:[#allocation2 + $0x240] sm:$0xff]
      %v635 = vld [vmem:[#allocation2 + $0x248] sm:$0xff]
      %v636 = vld [vmem:[#allocation2 + $0x250] sm:$0xff]
      %v637 = vld [vmem:[#allocation2 + $0x258] sm:$0xff]
      %v638 = vld [vmem:[#allocation2 + $0x260] sm:$0xff]
      %v639 = vld [vmem:[#allocation2 + $0x268] sm:$0xff]
      %v640 = vld [vmem:[#allocation2 + $0x270] sm:$0xff]
      %v641 = vld [vmem:[#allocation2 + $0x278] sm:$0xff]
      %v642 = vld [vmem:[#allocation2 + $0x280] sm:$0xff]
      %v643 = vld [vmem:[#allocation2 + $0x288] sm:$0xff]
      %v644 = vld [vmem:[#allocation2 + $0x290] sm:$0xff]
      %v645 = vld [vmem:[#allocation2 + $0x298] sm:$0xff]
      %v646 = vld [vmem:[#allocation2 + $0x2a0] sm:$0xff]
      %v647 = vld [vmem:[#allocation2 + $0x2a8] sm:$0xff]
      %v648 = vld [vmem:[#allocation2 + $0x2b0] sm:$0xff]
      %v649 = vld [vmem:[#allocation2 + $0x2b8] sm:$0xff]
      %v650 = vld [vmem:[#allocation2 + $0x2c0] sm:$0xff]
      %v651 = vld [vmem:[#allocation2 + $0x2c8] sm:$0xff]
      %v652 = vld [vmem:[#allocation2 + $0x2d0] sm:$0xff]
      %v653 = vld [vmem:[#allocation2 + $0x2d8] sm:$0xff]
      %v654 = vld [vmem:[#allocation2 + $0x2e0] sm:$0xff]
      %v655 = vld [vmem:[#allocation2 + $0x2e8] sm:$0xff]
      %v656 = vld [vmem:[#allocation2 + $0x2f0] sm:$0xff]
      %v657 = vld [vmem:[#allocation2 + $0x2f8] sm:$0xff]
      %v658 = vld [vmem:[#allocation2 + $0x300] sm:$0xff]
      %v659 = vld [vmem:[#allocation2 + $0x308] sm:$0xff]
      %v660 = vld [vmem:[#allocation2 + $0x310] sm:$0xff]
      %v661 = vld [vmem:[#allocation2 + $0x318] sm:$0xff]
      %v662 = vld [vmem:[#allocation2 + $0x320] sm:$0xff]
      %v663 = vld [vmem:[#allocation2 + $0x328] sm:$0xff]
      %v664 = vld [vmem:[#allocation2 + $0x330] sm:$0xff]
      %v665 = vld [vmem:[#allocation2 + $0x338] sm:$0xff]
      %v666 = vld [vmem:[#allocation2 + $0x340] sm:$0xff]
      %v667 = vld [vmem:[#allocation2 + $0x348] sm:$0xff]
      %v668 = vld [vmem:[#allocation2 + $0x350] sm:$0xff]
      %v669 = vld [vmem:[#allocation2 + $0x358] sm:$0xff]
      %v670 = vld [vmem:[#allocation2 + $0x360] sm:$0xff]
      %v671 = vld [vmem:[#allocation2 + $0x368] sm:$0xff]
      %v672 = vld [vmem:[#allocation2 + $0x370] sm:$0xff]
      %v673 = vld [vmem:[#allocation2 + $0x378] sm:$0xff]
      %v674 = vld [vmem:[#allocation2 + $0x380] sm:$0xff]
      %v675 = vld [vmem:[#allocation2 + $0x388] sm:$0xff]
      %v676 = vld [vmem:[#allocation2 + $0x390] sm:$0xff]
      %v677 = vld [vmem:[#allocation2 + $0x398] sm:$0xff]
      %v678 = vld [vmem:[#allocation2 + $0x3a0] sm:$0xff]
      %v679 = vld [vmem:[#allocation2 + $0x3a8] sm:$0xff]
      %v680 = vld [vmem:[#allocation2 + $0x3b0] sm:$0xff]
      %v681 = vld [vmem:[#allocation2 + $0x3b8] sm:$0xff]
      %v682 = vld [vmem:[#allocation2 + $0x3c0] sm:$0xff]
      %v683 = vld [vmem:[#allocation2 + $0x3c8] sm:$0xff]
      %v684 = vld [vmem:[#allocation2 + $0x3d0] sm:$0xff]
      %v685 = vld [vmem:[#allocation2 + $0x3d8] sm:$0xff]
      %v686 = vld [vmem:[#allocation2 + $0x3e0] sm:$0xff]
      %v687 = vld [vmem:[#allocation2 + $0x3e8] sm:$0xff]
      %v688 = vld [vmem:[#allocation2 + $0x3f0] sm:$0xff]
      %v689 = vld [vmem:[#allocation2 + $0x3f8] sm:$0xff]
      %v690 = vld [vmem:[#allocation2 + $0x400] sm:$0xff]
      %v691 = vld [vmem:[#allocation2 + $0x408] sm:$0xff]
      %v692 = vld [vmem:[#allocation2 + $0x410] sm:$0xff]
      %v693 = vld [vmem:[#allocation2 + $0x418] sm:$0xff]
      %v694 = vld [vmem:[#allocation2 + $0x420] sm:$0xff]
      %v695 = vld [vmem:[#allocation2 + $0x428] sm:$0xff]
      %v696 = vld [vmem:[#allocation2 + $0x430] sm:$0xff]
      %v697 = vld [vmem:[#allocation2 + $0x438] sm:$0xff]
      %v698 = vld [vmem:[#allocation2 + $0x440] sm:$0xff]
      %v699 = vld [vmem:[#allocation2 + $0x448] sm:$0xff]
      %v700 = vld [vmem:[#allocation2 + $0x450] sm:$0xff]
      %v701 = vld [vmem:[#allocation2 + $0x458] sm:$0xff]
      %v702 = vld [vmem:[#allocation2 + $0x460] sm:$0xff]
      %v703 = vld [vmem:[#allocation2 + $0x468] sm:$0xff]
      %v704 = vld [vmem:[#allocation2 + $0x470] sm:$0xff]
      %v705 = vld [vmem:[#allocation2 + $0x478] sm:$0xff]
      %v706 = vld [vmem:[#allocation2 + $0x480] sm:$0xff]
      %v707 = vld [vmem:[#allocation2 + $0x488] sm:$0xff]
      %v708 = vld [vmem:[#allocation2 + $0x490] sm:$0xff]
      %v709 = vld [vmem:[#allocation2 + $0x498] sm:$0xff]
      %v710 = vld [vmem:[#allocation2 + $0x4a0] sm:$0xff]
      %v711 = vld [vmem:[#allocation2 + $0x4a8] sm:$0xff]
      %v712 = vld [vmem:[#allocation2 + $0x4b0] sm:$0xff]
      %v713 = vld [vmem:[#allocation2 + $0x4b8] sm:$0xff]
      %v714 = vld [vmem:[#allocation2 + $0x4c0] sm:$0xff]
      %v715 = vld [vmem:[#allocation2 + $0x4c8] sm:$0xff]
      %v716 = vld [vmem:[#allocation2 + $0x4d0] sm:$0xff]
      %v717 = vld [vmem:[#allocation2 + $0x4d8] sm:$0xff]
      %v718 = vld [vmem:[#allocation2 + $0x4e0] sm:$0xff]
      %v719 = vld [vmem:[#allocation2 + $0x4e8] sm:$0xff]
      %v720 = vld [vmem:[#allocation2 + $0x4f0] sm:$0xff]
      %v721 = vld [vmem:[#allocation2 + $0x4f8] sm:$0xff]
      %v722 = vld [vmem:[#allocation2 + $0x500] sm:$0xff]
      %v723 = vld [vmem:[#allocation2 + $0x508] sm:$0xff]
      %v724 = vld [vmem:[#allocation2 + $0x510] sm:$0xff]
      %v725 = vld [vmem:[#allocation2 + $0x518] sm:$0xff]
      %v726 = vld [vmem:[#allocation2 + $0x520] sm:$0xff]
      %v727 = vld [vmem:[#allocation2 + $0x528] sm:$0xff]
      %v728 = vld [vmem:[#allocation2 + $0x530] sm:$0xff]
      %v729 = vld [vmem:[#allocation2 + $0x538] sm:$0xff]
      %v730 = vld [vmem:[#allocation2 + $0x540] sm:$0xff]
      %v731 = vld [vmem:[#allocation2 + $0x548] sm:$0xff]
      %v732 = vld [vmem:[#allocation2 + $0x550] sm:$0xff]
      %v733 = vld [vmem:[#allocation2 + $0x558] sm:$0xff]
      %v734 = vld [vmem:[#allocation2 + $0x560] sm:$0xff]
      %v735 = vld [vmem:[#allocation2 + $0x568] sm:$0xff]
      %v736 = vld [vmem:[#allocation2 + $0x570] sm:$0xff]
      %v737 = vld [vmem:[#allocation2 + $0x578] sm:$0xff]
      %v738 = vld [vmem:[#allocation2 + $0x580] sm:$0xff]
      %v739 = vld [vmem:[#allocation2 + $0x588] sm:$0xff]
      %v740 = vld [vmem:[#allocation2 + $0x590] sm:$0xff]
      %v741 = vld [vmem:[#allocation2 + $0x598] sm:$0xff]
      %v742 = vld [vmem:[#allocation2 + $0x5a0] sm:$0xff]
      %v743 = vld [vmem:[#allocation2 + $0x5a8] sm:$0xff]
      %v744 = vld [vmem:[#allocation2 + $0x5b0] sm:$0xff]
      %v745 = vld [vmem:[#allocation2 + $0x5b8] sm:$0xff]
      %v746 = vld [vmem:[#allocation2 + $0x5c0] sm:$0xff]
      %v747 = vld [vmem:[#allocation2 + $0x5c8] sm:$0xff]
      %v748 = vld [vmem:[#allocation2 + $0x5d0] sm:$0xff]
      %v749 = vld [vmem:[#allocation2 + $0x5d8] sm:$0xff]
      %v750 = vld [vmem:[#allocation2 + $0x5e0] sm:$0xff]
      %v751 = vld [vmem:[#allocation2 + $0x5e8] sm:$0xff]
      %v752 = vld [vmem:[#allocation2 + $0x5f0] sm:$0xff]
      %v753 = vld [vmem:[#allocation2 + $0x5f8] sm:$0xff]
      %v754 = vld [vmem:[#allocation2 + $0x600] sm:$0xff]
      %v755 = vld [vmem:[#allocation2 + $0x608] sm:$0xff]
      %v756 = vld [vmem:[#allocation2 + $0x610] sm:$0xff]
      %v757 = vld [vmem:[#allocation2 + $0x618] sm:$0xff]
      %v758 = vld [vmem:[#allocation2 + $0x620] sm:$0xff]
      %v759 = vld [vmem:[#allocation2 + $0x628] sm:$0xff]
      %v760 = vld [vmem:[#allocation2 + $0x630] sm:$0xff]
      %v761 = vld [vmem:[#allocation2 + $0x638] sm:$0xff]
      %v762 = vld [vmem:[#allocation2 + $0x640] sm:$0xff]
      %v763 = vld [vmem:[#allocation2 + $0x648] sm:$0xff]
      %v764 = vld [vmem:[#allocation2 + $0x650] sm:$0xff]
      %v765 = vld [vmem:[#allocation2 + $0x658] sm:$0xff]
      %v766 = vld [vmem:[#allocation2 + $0x660] sm:$0xff]
      %v767 = vld [vmem:[#allocation2 + $0x668] sm:$0xff]
      %v768 = vld [vmem:[#allocation2 + $0x670] sm:$0xff]
      %v769 = vld [vmem:[#allocation2 + $0x678] sm:$0xff]
      %v770 = vld [vmem:[#allocation2 + $0x680] sm:$0xff]
      %v771 = vld [vmem:[#allocation2 + $0x688] sm:$0xff]
      %v772 = vld [vmem:[#allocation2 + $0x690] sm:$0xff]
      %v773 = vld [vmem:[#allocation2 + $0x698] sm:$0xff]
      %v774 = vld [vmem:[#allocation2 + $0x6a0] sm:$0xff]
      %v775 = vld [vmem:[#allocation2 + $0x6a8] sm:$0xff]
      %v776 = vld [vmem:[#allocation2 + $0x6b0] sm:$0xff]
      %v777 = vld [vmem:[#allocation2 + $0x6b8] sm:$0xff]
      %v778 = vld [vmem:[#allocation2 + $0x6c0] sm:$0xff]
      %v779 = vld [vmem:[#allocation2 + $0x6c8] sm:$0xff]
      %v780 = vld [vmem:[#allocation2 + $0x6d0] sm:$0xff]
      %v781 = vld [vmem:[#allocation2 + $0x6d8] sm:$0xff]
      %v782 = vld [vmem:[#allocation2 + $0x6e0] sm:$0xff]
      %v783 = vld [vmem:[#allocation2 + $0x6e8] sm:$0xff]
      %v784 = vld [vmem:[#allocation2 + $0x6f0] sm:$0xff]
      %v785 = vld [vmem:[#allocation2 + $0x6f8] sm:$0xff]
      %v786 = vld [vmem:[#allocation2 + $0x700] sm:$0xff]
      %v787 = vld [vmem:[#allocation2 + $0x708] sm:$0xff]
      %v788 = vld [vmem:[#allocation2 + $0x710] sm:$0xff]
      %v789 = vld [vmem:[#allocation2 + $0x718] sm:$0xff]
      %v790 = vld [vmem:[#allocation2 + $0x720] sm:$0xff]
      %v791 = vld [vmem:[#allocation2 + $0x728] sm:$0xff]
      %v792 = vld [vmem:[#allocation2 + $0x730] sm:$0xff]
      %v793 = vld [vmem:[#allocation2 + $0x738] sm:$0xff]
      %v794 = vld [vmem:[#allocation2 + $0x740] sm:$0xff]
      %v795 = vld [vmem:[#allocation2 + $0x748] sm:$0xff]
      %v796 = vld [vmem:[#allocation2 + $0x750] sm:$0xff]
      %v797 = vld [vmem:[#allocation2 + $0x758] sm:$0xff]
      %v798 = vld [vmem:[#allocation2 + $0x760] sm:$0xff]
      %v799 = vld [vmem:[#allocation2 + $0x768] sm:$0xff]
      %v800 = vld [vmem:[#allocation2 + $0x770] sm:$0xff]
      %v801 = vld [vmem:[#allocation2 + $0x778] sm:$0xff]
      %v802 = vld [vmem:[#allocation2 + $0x780] sm:$0xff]
      %v803 = vld [vmem:[#allocation2 + $0x788] sm:$0xff]
      %v804 = vld [vmem:[#allocation2 + $0x790] sm:$0xff]
      %v805 = vld [vmem:[#allocation2 + $0x798] sm:$0xff]
      %v806 = vld [vmem:[#allocation2 + $0x7a0] sm:$0xff]
      %v807 = vld [vmem:[#allocation2 + $0x7a8] sm:$0xff]
      %v808 = vld [vmem:[#allocation2 + $0x7b0] sm:$0xff]
      %v809 = vld [vmem:[#allocation2 + $0x7b8] sm:$0xff]
      %v810 = vld [vmem:[#allocation2 + $0x7c0] sm:$0xff]
      %v811 = vld [vmem:[#allocation2 + $0x7c8] sm:$0xff]
      %v812 = vld [vmem:[#allocation2 + $0x7d0] sm:$0xff]
      %v813 = vld [vmem:[#allocation2 + $0x7d8] sm:$0xff]
      %v814 = vld [vmem:[#allocation2 + $0x7e0] sm:$0xff]
      %v815 = vld [vmem:[#allocation2 + $0x7e8] sm:$0xff]
      %v816 = vld [vmem:[#allocation2 + $0x7f0] sm:$0xff]
      %v817 = vld [vmem:[#allocation2 + $0x7f8] sm:$0xff]
      %v818 = vld [vmem:[%s274] sm:$0xf]
      %v819 = vld [vmem:[%s274 + $0x4] sm:$0xf]
      %v820 = vld [vmem:[%s274 + $0x8] sm:$0xf]
      %v821 = vld [vmem:[%s274 + $0xc] sm:$0xf]
      %v822 = vld [vmem:[%s274 + $0x10] sm:$0xf]
      %v823 = vld [vmem:[%s274 + $0x14] sm:$0xf]
      %v824 = vld [vmem:[%s274 + $0x18] sm:$0xf]
      %v825 = vld [vmem:[%s274 + $0x1c] sm:$0xf]
      %v826 = vld [vmem:[%s274 + $0x20] sm:$0xf]
      %v827 = vld [vmem:[%s274 + $0x24] sm:$0xf]
      %v828 = vld [vmem:[%s274 + $0x28] sm:$0xf]
      %v829 = vld [vmem:[%s274 + $0x2c] sm:$0xf]
      %v830 = vld [vmem:[%s274 + $0x30] sm:$0xf]
      %v831 = vld [vmem:[%s274 + $0x34] sm:$0xf]
      %v832 = vld [vmem:[%s274 + $0x38] sm:$0xf]
      %v833 = vld [vmem:[%s274 + $0x3c] sm:$0xf]
      %v834 = vld [vmem:[%s274 + $0x40] sm:$0xf]
      %v835 = vld [vmem:[%s274 + $0x44] sm:$0xf]
      %v836 = vld [vmem:[%s274 + $0x48] sm:$0xf]
      %v837 = vld [vmem:[%s274 + $0x4c] sm:$0xf]
      %v838 = vld [vmem:[%s274 + $0x50] sm:$0xf]
      %v839 = vld [vmem:[%s274 + $0x54] sm:$0xf]
      %v840 = vld [vmem:[%s274 + $0x58] sm:$0xf]
      %v841 = vld [vmem:[%s274 + $0x5c] sm:$0xf]
      %v842 = vld [vmem:[%s274 + $0x60] sm:$0xf]
      %v843 = vld [vmem:[%s274 + $0x64] sm:$0xf]
      %v844 = vld [vmem:[%s274 + $0x68] sm:$0xf]
      %v845 = vld [vmem:[%s274 + $0x6c] sm:$0xf]
      %v846 = vld [vmem:[%s274 + $0x70] sm:$0xf]
      %v847 = vld [vmem:[%s274 + $0x74] sm:$0xf]
      %v848 = vld [vmem:[%s274 + $0x78] sm:$0xf]
      %v849 = vld [vmem:[%s274 + $0x7c] sm:$0xf]
      %v850 = vld [vmem:[%s274 + $0x80] sm:$0xf]
      %v851 = vld [vmem:[%s274 + $0x84] sm:$0xf]
      %v852 = vld [vmem:[%s274 + $0x88] sm:$0xf]
      %v853 = vld [vmem:[%s274 + $0x8c] sm:$0xf]
      %v854 = vld [vmem:[%s274 + $0x90] sm:$0xf]
      %v855 = vld [vmem:[%s274 + $0x94] sm:$0xf]
      %v856 = vld [vmem:[%s274 + $0x98] sm:$0xf]
      %v857 = vld [vmem:[%s274 + $0x9c] sm:$0xf]
      %v858 = vld [vmem:[%s274 + $0xa0] sm:$0xf]
      %v859 = vld [vmem:[%s274 + $0xa4] sm:$0xf]
      %v860 = vld [vmem:[%s274 + $0xa8] sm:$0xf]
      %v861 = vld [vmem:[%s274 + $0xac] sm:$0xf]
      %v862 = vld [vmem:[%s274 + $0xb0] sm:$0xf]
      %v863 = vld [vmem:[%s274 + $0xb4] sm:$0xf]
      %v864 = vld [vmem:[%s274 + $0xb8] sm:$0xf]
      %v865 = vld [vmem:[%s274 + $0xbc] sm:$0xf]
      %v866 = vld [vmem:[%s274 + $0xc0] sm:$0xf]
      %v867 = vld [vmem:[%s274 + $0xc4] sm:$0xf]
      %v868 = vld [vmem:[%s274 + $0xc8] sm:$0xf]
      %v869 = vld [vmem:[%s274 + $0xcc] sm:$0xf]
      %v870 = vld [vmem:[%s274 + $0xd0] sm:$0xf]
      %v871 = vld [vmem:[%s274 + $0xd4] sm:$0xf]
      %v872 = vld [vmem:[%s274 + $0xd8] sm:$0xf]
      %v873 = vld [vmem:[%s274 + $0xdc] sm:$0xf]
      %v874 = vld [vmem:[%s274 + $0xe0] sm:$0xf]
      %v875 = vld [vmem:[%s274 + $0xe4] sm:$0xf]
      %v876 = vld [vmem:[%s274 + $0xe8] sm:$0xf]
      %v877 = vld [vmem:[%s274 + $0xec] sm:$0xf]
      %v878 = vld [vmem:[%s274 + $0xf0] sm:$0xf]
      %v879 = vld [vmem:[%s274 + $0xf4] sm:$0xf]
      %v880 = vld [vmem:[%s274 + $0xf8] sm:$0xf]
      %v881 = vld [vmem:[%s274 + $0xfc] sm:$0xf]
      %v882 = vld [vmem:[%s274 + $0x100] sm:$0xf]
      %v883 = vld [vmem:[%s274 + $0x104] sm:$0xf]
      %v884 = vld [vmem:[%s274 + $0x108] sm:$0xf]
      %v885 = vld [vmem:[%s274 + $0x10c] sm:$0xf]
      %v886 = vld [vmem:[%s274 + $0x110] sm:$0xf]
      %v887 = vld [vmem:[%s274 + $0x114] sm:$0xf]
      %v888 = vld [vmem:[%s274 + $0x118] sm:$0xf]
      %v889 = vld [vmem:[%s274 + $0x11c] sm:$0xf]
      %v890 = vld [vmem:[%s274 + $0x120] sm:$0xf]
      %v891 = vld [vmem:[%s274 + $0x124] sm:$0xf]
      %v892 = vld [vmem:[%s274 + $0x128] sm:$0xf]
      %v893 = vld [vmem:[%s274 + $0x12c] sm:$0xf]
      %v894 = vld [vmem:[%s274 + $0x130] sm:$0xf]
      %v895 = vld [vmem:[%s274 + $0x134] sm:$0xf]
      %v896 = vld [vmem:[%s274 + $0x138] sm:$0xf]
      %v897 = vld [vmem:[%s274 + $0x13c] sm:$0xf]
      %v898 = vld [vmem:[%s274 + $0x140] sm:$0xf]
      %v899 = vld [vmem:[%s274 + $0x144] sm:$0xf]
      %v900 = vld [vmem:[%s274 + $0x148] sm:$0xf]
      %v901 = vld [vmem:[%s274 + $0x14c] sm:$0xf]
      %v902 = vld [vmem:[%s274 + $0x150] sm:$0xf]
      %v903 = vld [vmem:[%s274 + $0x154] sm:$0xf]
      %v904 = vld [vmem:[%s274 + $0x158] sm:$0xf]
      %v905 = vld [vmem:[%s274 + $0x15c] sm:$0xf]
      %v906 = vld [vmem:[%s274 + $0x160] sm:$0xf]
      %v907 = vld [vmem:[%s274 + $0x164] sm:$0xf]
      %v908 = vld [vmem:[%s274 + $0x168] sm:$0xf]
      %v909 = vld [vmem:[%s274 + $0x16c] sm:$0xf]
      %v910 = vld [vmem:[%s274 + $0x170] sm:$0xf]
      %v911 = vld [vmem:[%s274 + $0x174] sm:$0xf]
      %v912 = vld [vmem:[%s274 + $0x178] sm:$0xf]
      %v913 = vld [vmem:[%s274 + $0x17c] sm:$0xf]
      %v914 = vld [vmem:[%s274 + $0x180] sm:$0xf]
      %v915 = vld [vmem:[%s274 + $0x184] sm:$0xf]
      %v916 = vld [vmem:[%s274 + $0x188] sm:$0xf]
      %v917 = vld [vmem:[%s274 + $0x18c] sm:$0xf]
      %v918 = vld [vmem:[%s274 + $0x190] sm:$0xf]
      %v919 = vld [vmem:[%s274 + $0x194] sm:$0xf]
      %v920 = vld [vmem:[%s274 + $0x198] sm:$0xf]
      %v921 = vld [vmem:[%s274 + $0x19c] sm:$0xf]
      %v922 = vld [vmem:[%s274 + $0x1a0] sm:$0xf]
      %v923 = vld [vmem:[%s274 + $0x1a4] sm:$0xf]
      %v924 = vld [vmem:[%s274 + $0x1a8] sm:$0xf]
      %v925 = vld [vmem:[%s274 + $0x1ac] sm:$0xf]
      %v926 = vld [vmem:[%s274 + $0x1b0] sm:$0xf]
      %v927 = vld [vmem:[%s274 + $0x1b4] sm:$0xf]
      %v928 = vld [vmem:[%s274 + $0x1b8] sm:$0xf]
      %v929 = vld [vmem:[%s274 + $0x1bc] sm:$0xf]
      %v930 = vld [vmem:[%s274 + $0x1c0] sm:$0xf]
      %v931 = vld [vmem:[%s274 + $0x1c4] sm:$0xf]
      %v932 = vld [vmem:[%s274 + $0x1c8] sm:$0xf]
      %v933 = vld [vmem:[%s274 + $0x1cc] sm:$0xf]
      %v934 = vld [vmem:[%s274 + $0x1d0] sm:$0xf]
      %v935 = vld [vmem:[%s274 + $0x1d4] sm:$0xf]
      %v936 = vld [vmem:[%s274 + $0x1d8] sm:$0xf]
      %v937 = vld [vmem:[%s274 + $0x1dc] sm:$0xf]
      %v938 = vld [vmem:[%s274 + $0x1e0] sm:$0xf]
      %v939 = vld [vmem:[%s274 + $0x1e4] sm:$0xf]
      %v940 = vld [vmem:[%s274 + $0x1e8] sm:$0xf]
      %v941 = vld [vmem:[%s274 + $0x1ec] sm:$0xf]
      %v942 = vld [vmem:[%s274 + $0x1f0] sm:$0xf]
      %v943 = vld [vmem:[%s274 + $0x1f4] sm:$0xf]
      %v944 = vld [vmem:[%s274 + $0x1f8] sm:$0xf]
      %v945 = vld [vmem:[%s274 + $0x1fc] sm:$0xf]
      %v946 = vld [vmem:[%s274 + $0x200] sm:$0xf]
      %v947 = vld [vmem:[%s274 + $0x204] sm:$0xf]
      %v948 = vld [vmem:[%s274 + $0x208] sm:$0xf]
      %v949 = vld [vmem:[%s274 + $0x20c] sm:$0xf]
      %v950 = vld [vmem:[%s274 + $0x210] sm:$0xf]
      %v951 = vld [vmem:[%s274 + $0x214] sm:$0xf]
      %v952 = vld [vmem:[%s274 + $0x218] sm:$0xf]
      %v953 = vld [vmem:[%s274 + $0x21c] sm:$0xf]
      %v954 = vld [vmem:[%s274 + $0x220] sm:$0xf]
      %v955 = vld [vmem:[%s274 + $0x224] sm:$0xf]
      %v956 = vld [vmem:[%s274 + $0x228] sm:$0xf]
      %v957 = vld [vmem:[%s274 + $0x22c] sm:$0xf]
      %v958 = vld [vmem:[%s274 + $0x230] sm:$0xf]
      %v959 = vld [vmem:[%s274 + $0x234] sm:$0xf]
      %v960 = vld [vmem:[%s274 + $0x238] sm:$0xf]
      %v961 = vld [vmem:[%s274 + $0x23c] sm:$0xf]
      %v962 = vld [vmem:[%s274 + $0x240] sm:$0xf]
      %v963 = vld [vmem:[%s274 + $0x244] sm:$0xf]
      %v964 = vld [vmem:[%s274 + $0x248] sm:$0xf]
      %v965 = vld [vmem:[%s274 + $0x24c] sm:$0xf]
      %v966 = vld [vmem:[%s274 + $0x250] sm:$0xf]
      %v967 = vld [vmem:[%s274 + $0x254] sm:$0xf]
      %v968 = vld [vmem:[%s274 + $0x258] sm:$0xf]
      %v969 = vld [vmem:[%s274 + $0x25c] sm:$0xf]
      %v970 = vld [vmem:[%s274 + $0x260] sm:$0xf]
      %v971 = vld [vmem:[%s274 + $0x264] sm:$0xf]
      %v972 = vld [vmem:[%s274 + $0x268] sm:$0xf]
      %v973 = vld [vmem:[%s274 + $0x26c] sm:$0xf]
      %v974 = vld [vmem:[%s274 + $0x270] sm:$0xf]
      %v975 = vld [vmem:[%s274 + $0x274] sm:$0xf]
      %v976 = vld [vmem:[%s274 + $0x278] sm:$0xf]
      %v977 = vld [vmem:[%s274 + $0x27c] sm:$0xf]
      %v978 = vld [vmem:[%s274 + $0x280] sm:$0xf]
      %v979 = vld [vmem:[%s274 + $0x284] sm:$0xf]
      %v980 = vld [vmem:[%s274 + $0x288] sm:$0xf]
      %v981 = vld [vmem:[%s274 + $0x28c] sm:$0xf]
      %v982 = vld [vmem:[%s274 + $0x290] sm:$0xf]
      %v983 = vld [vmem:[%s274 + $0x294] sm:$0xf]
      %v984 = vld [vmem:[%s274 + $0x298] sm:$0xf]
      %v985 = vld [vmem:[%s274 + $0x29c] sm:$0xf]
      %v986 = vld [vmem:[%s274 + $0x2a0] sm:$0xf]
      %v987 = vld [vmem:[%s274 + $0x2a4] sm:$0xf]
      %v988 = vld [vmem:[%s274 + $0x2a8] sm:$0xf]
      %v989 = vld [vmem:[%s274 + $0x2ac] sm:$0xf]
      %v990 = vld [vmem:[%s274 + $0x2b0] sm:$0xf]
      %v991 = vld [vmem:[%s274 + $0x2b4] sm:$0xf]
      %v992 = vld [vmem:[%s274 + $0x2b8] sm:$0xf]
      %v993 = vld [vmem:[%s274 + $0x2bc] sm:$0xf]
      %v994 = vld [vmem:[%s274 + $0x2c0] sm:$0xf]
      %v995 = vld [vmem:[%s274 + $0x2c4] sm:$0xf]
      %v996 = vld [vmem:[%s274 + $0x2c8] sm:$0xf]
      %v997 = vld [vmem:[%s274 + $0x2cc] sm:$0xf]
      %v998 = vld [vmem:[%s274 + $0x2d0] sm:$0xf]
      %v999 = vld [vmem:[%s274 + $0x2d4] sm:$0xf]
      %v1000 = vld [vmem:[%s274 + $0x2d8] sm:$0xf]
      %v1001 = vld [vmem:[%s274 + $0x2dc] sm:$0xf]
      %v1002 = vld [vmem:[%s274 + $0x2e0] sm:$0xf]
      %v1003 = vld [vmem:[%s274 + $0x2e4] sm:$0xf]
      %v1004 = vld [vmem:[%s274 + $0x2e8] sm:$0xf]
      %v1005 = vld [vmem:[%s274 + $0x2ec] sm:$0xf]
      %v1006 = vld [vmem:[%s274 + $0x2f0] sm:$0xf]
      %v1007 = vld [vmem:[%s274 + $0x2f4] sm:$0xf]
      %v1008 = vld [vmem:[%s274 + $0x2f8] sm:$0xf]
      %v1009 = vld [vmem:[%s274 + $0x2fc] sm:$0xf]
      %v1010 = vld [vmem:[%s274 + $0x300] sm:$0xf]
      %v1011 = vld [vmem:[%s274 + $0x304] sm:$0xf]
      %v1012 = vld [vmem:[%s274 + $0x308] sm:$0xf]
      %v1013 = vld [vmem:[%s274 + $0x30c] sm:$0xf]
      %v1014 = vld [vmem:[%s274 + $0x310] sm:$0xf]
      %v1015 = vld [vmem:[%s274 + $0x314] sm:$0xf]
      %v1016 = vld [vmem:[%s274 + $0x318] sm:$0xf]
      %v1017 = vld [vmem:[%s274 + $0x31c] sm:$0xf]
      %v1018 = vld [vmem:[%s274 + $0x320] sm:$0xf]
      %v1019 = vld [vmem:[%s274 + $0x324] sm:$0xf]
      %v1020 = vld [vmem:[%s274 + $0x328] sm:$0xf]
      %v1021 = vld [vmem:[%s274 + $0x32c] sm:$0xf]
      %v1022 = vld [vmem:[%s274 + $0x330] sm:$0xf]
      %v1023 = vld [vmem:[%s274 + $0x334] sm:$0xf]
      %v1024 = vld [vmem:[%s274 + $0x338] sm:$0xf]
      %v1025 = vld [vmem:[%s274 + $0x33c] sm:$0xf]
      %v1026 = vld [vmem:[%s274 + $0x340] sm:$0xf]
      %v1027 = vld [vmem:[%s274 + $0x344] sm:$0xf]
      %v1028 = vld [vmem:[%s274 + $0x348] sm:$0xf]
      %v1029 = vld [vmem:[%s274 + $0x34c] sm:$0xf]
      %v1030 = vld [vmem:[%s274 + $0x350] sm:$0xf]
      %v1031 = vld [vmem:[%s274 + $0x354] sm:$0xf]
      %v1032 = vld [vmem:[%s274 + $0x358] sm:$0xf]
      %v1033 = vld [vmem:[%s274 + $0x35c] sm:$0xf]
      %v1034 = vld [vmem:[%s274 + $0x360] sm:$0xf]
      %v1035 = vld [vmem:[%s274 + $0x364] sm:$0xf]
      %v1036 = vld [vmem:[%s274 + $0x368] sm:$0xf]
      %v1037 = vld [vmem:[%s274 + $0x36c] sm:$0xf]
      %v1038 = vld [vmem:[%s274 + $0x370] sm:$0xf]
      %v1039 = vld [vmem:[%s274 + $0x374] sm:$0xf]
      %v1040 = vld [vmem:[%s274 + $0x378] sm:$0xf]
      %v1041 = vld [vmem:[%s274 + $0x37c] sm:$0xf]
      %v1042 = vld [vmem:[%s274 + $0x380] sm:$0xf]
      %v1043 = vld [vmem:[%s274 + $0x384] sm:$0xf]
      %v1044 = vld [vmem:[%s274 + $0x388] sm:$0xf]
      %v1045 = vld [vmem:[%s274 + $0x38c] sm:$0xf]
      %v1046 = vld [vmem:[%s274 + $0x390] sm:$0xf]
      %v1047 = vld [vmem:[%s274 + $0x394] sm:$0xf]
      %v1048 = vld [vmem:[%s274 + $0x398] sm:$0xf]
      %v1049 = vld [vmem:[%s274 + $0x39c] sm:$0xf]
      %v1050 = vld [vmem:[%s274 + $0x3a0] sm:$0xf]
      %v1051 = vld [vmem:[%s274 + $0x3a4] sm:$0xf]
      %v1052 = vld [vmem:[%s274 + $0x3a8] sm:$0xf]
      %v1053 = vld [vmem:[%s274 + $0x3ac] sm:$0xf]
      %v1054 = vld [vmem:[%s274 + $0x3b0] sm:$0xf]
      %v1055 = vld [vmem:[%s274 + $0x3b4] sm:$0xf]
      %v1056 = vld [vmem:[%s274 + $0x3b8] sm:$0xf]
      %v1057 = vld [vmem:[%s274 + $0x3bc] sm:$0xf]
      %v1058 = vld [vmem:[%s274 + $0x3c0] sm:$0xf]
      %v1059 = vld [vmem:[%s274 + $0x3c4] sm:$0xf]
      %v1060 = vld [vmem:[%s274 + $0x3c8] sm:$0xf]
      %v1061 = vld [vmem:[%s274 + $0x3cc] sm:$0xf]
      %v1062 = vld [vmem:[%s274 + $0x3d0] sm:$0xf]
      %v1063 = vld [vmem:[%s274 + $0x3d4] sm:$0xf]
      %v1064 = vld [vmem:[%s274 + $0x3d8] sm:$0xf]
      %v1065 = vld [vmem:[%s274 + $0x3dc] sm:$0xf]
      %v1066 = vld [vmem:[%s274 + $0x3e0] sm:$0xf]
      %v1067 = vld [vmem:[%s274 + $0x3e4] sm:$0xf]
      %v1068 = vld [vmem:[%s274 + $0x3e8] sm:$0xf]
      %v1069 = vld [vmem:[%s274 + $0x3ec] sm:$0xf]
      %v1070 = vld [vmem:[%s274 + $0x3f0] sm:$0xf]
      %v1071 = vld [vmem:[%s274 + $0x3f4] sm:$0xf]
      %v1072 = vld [vmem:[%s274 + $0x3f8] sm:$0xf]
      %v1073 = vld [vmem:[%s274 + $0x3fc] sm:$0xf]
      %v1074 = vld [vmem:[%s283] sm:$0xf]
      %v1075 = vld [vmem:[%s283 + $0x4] sm:$0xf]
      %v1076 = vld [vmem:[%s283 + $0x8] sm:$0xf]
      %v1077 = vld [vmem:[%s283 + $0xc] sm:$0xf]
      %v1334 = vunpack.c.l.b16 %v818
      %v1335 = vunpack.c.l.b16 %v819
      %v1336 = vunpack.c.l.b16 %v820
      %v1337 = vunpack.c.l.b16 %v821
      %v1338 = vunpack.c.l.b16 %v822
      %v1339 = vunpack.c.l.b16 %v823
      %v1340 = vunpack.c.l.b16 %v824
      %v1341 = vunpack.c.l.b16 %v825
      %v1342 = vunpack.c.l.b16 %v826
      %v1343 = vunpack.c.l.b16 %v827
      %v1344 = vunpack.c.l.b16 %v828
      %v1345 = vunpack.c.l.b16 %v829
      %v1346 = vunpack.c.l.b16 %v830
      %v1347 = vunpack.c.l.b16 %v831
      %v1348 = vunpack.c.l.b16 %v832
      %v1349 = vunpack.c.l.b16 %v833
      %v1350 = vunpack.c.l.b16 %v834
      %v1351 = vunpack.c.l.b16 %v835
      %v1352 = vunpack.c.l.b16 %v836
      %v1353 = vunpack.c.l.b16 %v837
      %v1354 = vunpack.c.l.b16 %v838
      %v1355 = vunpack.c.l.b16 %v839
      %v1356 = vunpack.c.l.b16 %v840
      %v1357 = vunpack.c.l.b16 %v841
      %v1358 = vunpack.c.l.b16 %v842
      %v1359 = vunpack.c.l.b16 %v843
      %v1360 = vunpack.c.l.b16 %v844
      %v1361 = vunpack.c.l.b16 %v845
      %v1362 = vunpack.c.l.b16 %v846
      %v1363 = vunpack.c.l.b16 %v847
      %v1364 = vunpack.c.l.b16 %v848
      %v1365 = vunpack.c.l.b16 %v849
      %v1366 = vunpack.c.l.b16 %v850
      %v1367 = vunpack.c.l.b16 %v851
      %v1368 = vunpack.c.l.b16 %v852
      %v1369 = vunpack.c.l.b16 %v853
      %v1370 = vunpack.c.l.b16 %v854
      %v1371 = vunpack.c.l.b16 %v855
      %v1372 = vunpack.c.l.b16 %v856
      %v1373 = vunpack.c.l.b16 %v857
      %v1374 = vunpack.c.l.b16 %v858
      %v1375 = vunpack.c.l.b16 %v859
      %v1376 = vunpack.c.l.b16 %v860
      %v1377 = vunpack.c.l.b16 %v861
      %v1378 = vunpack.c.l.b16 %v862
      %v1379 = vunpack.c.l.b16 %v863
      %v1380 = vunpack.c.l.b16 %v864
      %v1381 = vunpack.c.l.b16 %v865
      %v1382 = vunpack.c.l.b16 %v866
      %v1383 = vunpack.c.l.b16 %v867
      %v1384 = vunpack.c.l.b16 %v868
      %v1385 = vunpack.c.l.b16 %v869
      %v1386 = vunpack.c.l.b16 %v870
      %v1387 = vunpack.c.l.b16 %v871
      %v1388 = vunpack.c.l.b16 %v872
      %v1389 = vunpack.c.l.b16 %v873
      %v1390 = vunpack.c.l.b16 %v874
      %v1391 = vunpack.c.l.b16 %v875
      %v1392 = vunpack.c.l.b16 %v876
      %v1393 = vunpack.c.l.b16 %v877
      %v1394 = vunpack.c.l.b16 %v878
      %v1395 = vunpack.c.l.b16 %v879
      %v1396 = vunpack.c.l.b16 %v880
      %v1397 = vunpack.c.l.b16 %v881
      %v1398 = vunpack.c.l.b16 %v882
      %v1399 = vunpack.c.l.b16 %v883
      %v1400 = vunpack.c.l.b16 %v884
      %v1401 = vunpack.c.l.b16 %v885
      %v1402 = vunpack.c.l.b16 %v886
      %v1403 = vunpack.c.l.b16 %v887
      %v1404 = vunpack.c.l.b16 %v888
      %v1405 = vunpack.c.l.b16 %v889
      %v1406 = vunpack.c.l.b16 %v890
      %v1407 = vunpack.c.l.b16 %v891
      %v1408 = vunpack.c.l.b16 %v892
      %v1409 = vunpack.c.l.b16 %v893
      %v1410 = vunpack.c.l.b16 %v894
      %v1411 = vunpack.c.l.b16 %v895
      %v1412 = vunpack.c.l.b16 %v896
      %v1413 = vunpack.c.l.b16 %v897
      %v1414 = vunpack.c.l.b16 %v898
      %v1415 = vunpack.c.l.b16 %v899
      %v1416 = vunpack.c.l.b16 %v900
      %v1417 = vunpack.c.l.b16 %v901
      %v1418 = vunpack.c.l.b16 %v902
      %v1419 = vunpack.c.l.b16 %v903
      %v1420 = vunpack.c.l.b16 %v904
      %v1421 = vunpack.c.l.b16 %v905
      %v1422 = vunpack.c.l.b16 %v906
      %v1423 = vunpack.c.l.b16 %v907
      %v1424 = vunpack.c.l.b16 %v908
      %v1425 = vunpack.c.l.b16 %v909
      %v1426 = vunpack.c.l.b16 %v910
      %v1427 = vunpack.c.l.b16 %v911
      %v1428 = vunpack.c.l.b16 %v912
      %v1429 = vunpack.c.l.b16 %v913
      %v1430 = vunpack.c.l.b16 %v914
      %v1431 = vunpack.c.l.b16 %v915
      %v1432 = vunpack.c.l.b16 %v916
      %v1433 = vunpack.c.l.b16 %v917
      %v1434 = vunpack.c.l.b16 %v918
      %v1435 = vunpack.c.l.b16 %v919
      %v1436 = vunpack.c.l.b16 %v920
      %v1437 = vunpack.c.l.b16 %v921
      %v1438 = vunpack.c.l.b16 %v922
      %v1439 = vunpack.c.l.b16 %v923
      %v1440 = vunpack.c.l.b16 %v924
      %v1441 = vunpack.c.l.b16 %v925
      %v1442 = vunpack.c.l.b16 %v926
      %v1443 = vunpack.c.l.b16 %v927
      %v1444 = vunpack.c.l.b16 %v928
      %v1445 = vunpack.c.l.b16 %v929
      %v1446 = vunpack.c.l.b16 %v930
      %v1447 = vunpack.c.l.b16 %v931
      %v1448 = vunpack.c.l.b16 %v932
      %v1449 = vunpack.c.l.b16 %v933
      %v1450 = vunpack.c.l.b16 %v934
      %v1451 = vunpack.c.l.b16 %v935
      %v1452 = vunpack.c.l.b16 %v936
      %v1453 = vunpack.c.l.b16 %v937
      %v1454 = vunpack.c.l.b16 %v938
      %v1455 = vunpack.c.l.b16 %v939
      %v1456 = vunpack.c.l.b16 %v940
      %v1457 = vunpack.c.l.b16 %v941
      %v1458 = vunpack.c.l.b16 %v942
      %v1459 = vunpack.c.l.b16 %v943
      %v1460 = vunpack.c.l.b16 %v944
      %v1461 = vunpack.c.l.b16 %v945
      %v1462 = vunpack.c.l.b16 %v946
      %v1463 = vunpack.c.l.b16 %v947
      %v1464 = vunpack.c.l.b16 %v948
      %v1465 = vunpack.c.l.b16 %v949
      %v1466 = vunpack.c.l.b16 %v950
      %v1467 = vunpack.c.l.b16 %v951
      %v1468 = vunpack.c.l.b16 %v952
      %v1469 = vunpack.c.l.b16 %v953
      %v1470 = vunpack.c.l.b16 %v954
      %v1471 = vunpack.c.l.b16 %v955
      %v1472 = vunpack.c.l.b16 %v956
      %v1473 = vunpack.c.l.b16 %v957
      %v1474 = vunpack.c.l.b16 %v958
      %v1475 = vunpack.c.l.b16 %v959
      %v1476 = vunpack.c.l.b16 %v960
      %v1477 = vunpack.c.l.b16 %v961
      %v1478 = vunpack.c.l.b16 %v962
      %v1479 = vunpack.c.l.b16 %v963
      %v1480 = vunpack.c.l.b16 %v964
      %v1481 = vunpack.c.l.b16 %v965
      %v1482 = vunpack.c.l.b16 %v966
      %v1483 = vunpack.c.l.b16 %v967
      %v1484 = vunpack.c.l.b16 %v968
      %v1485 = vunpack.c.l.b16 %v969
      %v1486 = vunpack.c.l.b16 %v970
      %v1487 = vunpack.c.l.b16 %v971
      %v1488 = vunpack.c.l.b16 %v972
      %v1489 = vunpack.c.l.b16 %v973
      %v1490 = vunpack.c.l.b16 %v974
      %v1491 = vunpack.c.l.b16 %v975
      %v1492 = vunpack.c.l.b16 %v976
      %v1493 = vunpack.c.l.b16 %v977
      %v1494 = vunpack.c.l.b16 %v978
      %v1495 = vunpack.c.l.b16 %v979
      %v1496 = vunpack.c.l.b16 %v980
      %v1497 = vunpack.c.l.b16 %v981
      %v1498 = vunpack.c.l.b16 %v982
      %v1499 = vunpack.c.l.b16 %v983
      %v1500 = vunpack.c.l.b16 %v984
      %v1501 = vunpack.c.l.b16 %v985
      %v1502 = vunpack.c.l.b16 %v986
      %v1503 = vunpack.c.l.b16 %v987
      %v1504 = vunpack.c.l.b16 %v988
      %v1505 = vunpack.c.l.b16 %v989
      %v1506 = vunpack.c.l.b16 %v990
      %v1507 = vunpack.c.l.b16 %v991
      %v1508 = vunpack.c.l.b16 %v992
      %v1509 = vunpack.c.l.b16 %v993
      %v1510 = vunpack.c.l.b16 %v994
      %v1511 = vunpack.c.l.b16 %v995
      %v1512 = vunpack.c.l.b16 %v996
      %v1513 = vunpack.c.l.b16 %v997
      %v1514 = vunpack.c.l.b16 %v998
      %v1515 = vunpack.c.l.b16 %v999
      %v1516 = vunpack.c.l.b16 %v1000
      %v1517 = vunpack.c.l.b16 %v1001
      %v1518 = vunpack.c.l.b16 %v1002
      %v1519 = vunpack.c.l.b16 %v1003
      %v1520 = vunpack.c.l.b16 %v1004
      %v1521 = vunpack.c.l.b16 %v1005
      %v1522 = vunpack.c.l.b16 %v1006
      %v1523 = vunpack.c.l.b16 %v1007
      %v1524 = vunpack.c.l.b16 %v1008
      %v1525 = vunpack.c.l.b16 %v1009
      %v1526 = vunpack.c.l.b16 %v1010
      %v1527 = vunpack.c.l.b16 %v1011
      %v1528 = vunpack.c.l.b16 %v1012
      %v1529 = vunpack.c.l.b16 %v1013
      %v1530 = vunpack.c.l.b16 %v1014
      %v1531 = vunpack.c.l.b16 %v1015
      %v1532 = vunpack.c.l.b16 %v1016
      %v1533 = vunpack.c.l.b16 %v1017
      %v1534 = vunpack.c.l.b16 %v1018
      %v1535 = vunpack.c.l.b16 %v1019
      %v1536 = vunpack.c.l.b16 %v1020
      %v1537 = vunpack.c.l.b16 %v1021
      %v1538 = vunpack.c.l.b16 %v1022
      %v1539 = vunpack.c.l.b16 %v1023
      %v1540 = vunpack.c.l.b16 %v1024
      %v1541 = vunpack.c.l.b16 %v1025
      %v1542 = vunpack.c.l.b16 %v1026
      %v1543 = vunpack.c.l.b16 %v1027
      %v1544 = vunpack.c.l.b16 %v1028
      %v1545 = vunpack.c.l.b16 %v1029
      %v1546 = vunpack.c.l.b16 %v1030
      %v1547 = vunpack.c.l.b16 %v1031
      %v1548 = vunpack.c.l.b16 %v1032
      %v1549 = vunpack.c.l.b16 %v1033
      %v1550 = vunpack.c.l.b16 %v1034
      %v1551 = vunpack.c.l.b16 %v1035
      %v1552 = vunpack.c.l.b16 %v1036
      %v1553 = vunpack.c.l.b16 %v1037
      %v1554 = vunpack.c.l.b16 %v1038
      %v1555 = vunpack.c.l.b16 %v1039
      %v1556 = vunpack.c.l.b16 %v1040
      %v1557 = vunpack.c.l.b16 %v1041
      %v1558 = vunpack.c.l.b16 %v1042
      %v1559 = vunpack.c.l.b16 %v1043
      %v1560 = vunpack.c.l.b16 %v1044
      %v1561 = vunpack.c.l.b16 %v1045
      %v1562 = vunpack.c.l.b16 %v1046
      %v1563 = vunpack.c.l.b16 %v1047
      %v1564 = vunpack.c.l.b16 %v1048
      %v1565 = vunpack.c.l.b16 %v1049
      %v1566 = vunpack.c.l.b16 %v1050
      %v1567 = vunpack.c.l.b16 %v1051
      %v1568 = vunpack.c.l.b16 %v1052
      %v1569 = vunpack.c.l.b16 %v1053
      %v1570 = vunpack.c.l.b16 %v1054
      %v1571 = vunpack.c.l.b16 %v1055
      %v1572 = vunpack.c.l.b16 %v1056
      %v1573 = vunpack.c.l.b16 %v1057
      %v1574 = vunpack.c.l.b16 %v1058
      %v1575 = vunpack.c.l.b16 %v1059
      %v1576 = vunpack.c.l.b16 %v1060
      %v1577 = vunpack.c.l.b16 %v1061
      %v1578 = vunpack.c.l.b16 %v1062
      %v1579 = vunpack.c.l.b16 %v1063
      %v1580 = vunpack.c.l.b16 %v1064
      %v1581 = vunpack.c.l.b16 %v1065
      %v1582 = vunpack.c.l.b16 %v1066
      %v1583 = vunpack.c.l.b16 %v1067
      %v1584 = vunpack.c.l.b16 %v1068
      %v1585 = vunpack.c.l.b16 %v1069
      %v1586 = vunpack.c.l.b16 %v1070
      %v1587 = vunpack.c.l.b16 %v1071
      %v1588 = vunpack.c.l.b16 %v1072
      %v1589 = vunpack.c.l.b16 %v1073
      %v1590 = vpack.c.b16 %v1335, %v1334
      %v1591 = vpack.c.b16 %v1337, %v1336
      %v1592 = vpack.c.b16 %v1339, %v1338
      %v1593 = vpack.c.b16 %v1341, %v1340
      %v1594 = vpack.c.b16 %v1343, %v1342
      %v1595 = vpack.c.b16 %v1345, %v1344
      %v1596 = vpack.c.b16 %v1347, %v1346
      %v1597 = vpack.c.b16 %v1349, %v1348
      %v1598 = vpack.c.b16 %v1351, %v1350
      %v1599 = vpack.c.b16 %v1353, %v1352
      %v1600 = vpack.c.b16 %v1355, %v1354
      %v1601 = vpack.c.b16 %v1357, %v1356
      %v1602 = vpack.c.b16 %v1359, %v1358
      %v1603 = vpack.c.b16 %v1361, %v1360
      %v1604 = vpack.c.b16 %v1363, %v1362
      %v1605 = vpack.c.b16 %v1365, %v1364
      %v1606 = vpack.c.b16 %v1367, %v1366
      %v1607 = vpack.c.b16 %v1369, %v1368
      %v1608 = vpack.c.b16 %v1371, %v1370
      %v1609 = vpack.c.b16 %v1373, %v1372
      %v1610 = vpack.c.b16 %v1375, %v1374
      %v1611 = vpack.c.b16 %v1377, %v1376
      %v1612 = vpack.c.b16 %v1379, %v1378
      %v1613 = vpack.c.b16 %v1381, %v1380
      %v1614 = vpack.c.b16 %v1383, %v1382
      %v1615 = vpack.c.b16 %v1385, %v1384
      %v1616 = vpack.c.b16 %v1387, %v1386
      %v1617 = vpack.c.b16 %v1389, %v1388
      %v1618 = vpack.c.b16 %v1391, %v1390
      %v1619 = vpack.c.b16 %v1393, %v1392
      %v1620 = vpack.c.b16 %v1395, %v1394
      %v1621 = vpack.c.b16 %v1397, %v1396
      %v1622 = vpack.c.b16 %v1399, %v1398
      %v1623 = vpack.c.b16 %v1401, %v1400
      %v1624 = vpack.c.b16 %v1403, %v1402
      %v1625 = vpack.c.b16 %v1405, %v1404
      %v1626 = vpack.c.b16 %v1407, %v1406
      %v1627 = vpack.c.b16 %v1409, %v1408
      %v1628 = vpack.c.b16 %v1411, %v1410
      %v1629 = vpack.c.b16 %v1413, %v1412
      %v1630 = vpack.c.b16 %v1415, %v1414
      %v1631 = vpack.c.b16 %v1417, %v1416
      %v1632 = vpack.c.b16 %v1419, %v1418
      %v1633 = vpack.c.b16 %v1421, %v1420
      %v1634 = vpack.c.b16 %v1423, %v1422
      %v1635 = vpack.c.b16 %v1425, %v1424
      %v1636 = vpack.c.b16 %v1427, %v1426
      %v1637 = vpack.c.b16 %v1429, %v1428
      %v1638 = vpack.c.b16 %v1431, %v1430
      %v1639 = vpack.c.b16 %v1433, %v1432
      %v1640 = vpack.c.b16 %v1435, %v1434
      %v1641 = vpack.c.b16 %v1437, %v1436
      %v1642 = vpack.c.b16 %v1439, %v1438
      %v1643 = vpack.c.b16 %v1441, %v1440
      %v1644 = vpack.c.b16 %v1443, %v1442
      %v1645 = vpack.c.b16 %v1445, %v1444
      %v1646 = vpack.c.b16 %v1447, %v1446
      %v1647 = vpack.c.b16 %v1449, %v1448
      %v1648 = vpack.c.b16 %v1451, %v1450
      %v1649 = vpack.c.b16 %v1453, %v1452
      %v1650 = vpack.c.b16 %v1455, %v1454
      %v1651 = vpack.c.b16 %v1457, %v1456
      %v1652 = vpack.c.b16 %v1459, %v1458
      %v1653 = vpack.c.b16 %v1461, %v1460
      %v1654 = vpack.c.b16 %v1463, %v1462
      %v1655 = vpack.c.b16 %v1465, %v1464
      %v1656 = vpack.c.b16 %v1467, %v1466
      %v1657 = vpack.c.b16 %v1469, %v1468
      %v1658 = vpack.c.b16 %v1471, %v1470
      %v1659 = vpack.c.b16 %v1473, %v1472
      %v1660 = vpack.c.b16 %v1475, %v1474
      %v1661 = vpack.c.b16 %v1477, %v1476
      %v1662 = vpack.c.b16 %v1479, %v1478
      %v1663 = vpack.c.b16 %v1481, %v1480
      %v1664 = vpack.c.b16 %v1483, %v1482
      %v1665 = vpack.c.b16 %v1485, %v1484
      %v1666 = vpack.c.b16 %v1487, %v1486
      %v1667 = vpack.c.b16 %v1489, %v1488
      %v1668 = vpack.c.b16 %v1491, %v1490
      %v1669 = vpack.c.b16 %v1493, %v1492
      %v1670 = vpack.c.b16 %v1495, %v1494
      %v1671 = vpack.c.b16 %v1497, %v1496
      %v1672 = vpack.c.b16 %v1499, %v1498
      %v1673 = vpack.c.b16 %v1501, %v1500
      %v1674 = vpack.c.b16 %v1503, %v1502
      %v1675 = vpack.c.b16 %v1505, %v1504
      %v1676 = vpack.c.b16 %v1507, %v1506
      %v1677 = vpack.c.b16 %v1509, %v1508
      %v1678 = vpack.c.b16 %v1511, %v1510
      %v1679 = vpack.c.b16 %v1513, %v1512
      %v1680 = vpack.c.b16 %v1515, %v1514
      %v1681 = vpack.c.b16 %v1517, %v1516
      %v1682 = vpack.c.b16 %v1519, %v1518
      %v1683 = vpack.c.b16 %v1521, %v1520
      %v1684 = vpack.c.b16 %v1523, %v1522
      %v1685 = vpack.c.b16 %v1525, %v1524
      %v1686 = vpack.c.b16 %v1527, %v1526
      %v1687 = vpack.c.b16 %v1529, %v1528
      %v1688 = vpack.c.b16 %v1531, %v1530
      %v1689 = vpack.c.b16 %v1533, %v1532
      %v1690 = vpack.c.b16 %v1535, %v1534
      %v1691 = vpack.c.b16 %v1537, %v1536
      %v1692 = vpack.c.b16 %v1539, %v1538
      %v1693 = vpack.c.b16 %v1541, %v1540
      %v1694 = vpack.c.b16 %v1543, %v1542
      %v1695 = vpack.c.b16 %v1545, %v1544
      %v1696 = vpack.c.b16 %v1547, %v1546
      %v1697 = vpack.c.b16 %v1549, %v1548
      %v1698 = vpack.c.b16 %v1551, %v1550
      %v1699 = vpack.c.b16 %v1553, %v1552
      %v1700 = vpack.c.b16 %v1555, %v1554
      %v1701 = vpack.c.b16 %v1557, %v1556
      %v1702 = vpack.c.b16 %v1559, %v1558
      %v1703 = vpack.c.b16 %v1561, %v1560
      %v1704 = vpack.c.b16 %v1563, %v1562
      %v1705 = vpack.c.b16 %v1565, %v1564
      %v1706 = vpack.c.b16 %v1567, %v1566
      %v1707 = vpack.c.b16 %v1569, %v1568
      %v1708 = vpack.c.b16 %v1571, %v1570
      %v1709 = vpack.c.b16 %v1573, %v1572
      %v1710 = vpack.c.b16 %v1575, %v1574
      %v1711 = vpack.c.b16 %v1577, %v1576
      %v1712 = vpack.c.b16 %v1579, %v1578
      %v1713 = vpack.c.b16 %v1581, %v1580
      %v1714 = vpack.c.b16 %v1583, %v1582
      %v1715 = vpack.c.b16 %v1585, %v1584
      %v1716 = vpack.c.b16 %v1587, %v1586
      %v1717 = vpack.c.b16 %v1589, %v1588
      %v1722 = vunpack.c.l.b16 %v1074
      %v1723 = vunpack.c.l.b16 %v1075
      %v1724 = vunpack.c.l.b16 %v1076
      %v1725 = vunpack.c.l.b16 %v1077
      %v1726 = vpack.c.b16 %v1723, %v1722
      %v1727 = vpack.c.b16 %v1725, %v1724
      %vm1730 = vcmask 261120
      %v1732 = vsel %vm1730, %v1590, 0
      %v1735 = vsel %vm1730, %v1591, 0
      %v1738 = vsel %vm1730, %v1592, 0
      %v1741 = vsel %vm1730, %v1593, 0
      %v1744 = vsel %vm1730, %v1594, 0
      %v1747 = vsel %vm1730, %v1595, 0
      %v1750 = vsel %vm1730, %v1596, 0
      %v1753 = vsel %vm1730, %v1597, 0
      %v1756 = vsel %vm1730, %v1598, 0
      %v1759 = vsel %vm1730, %v1599, 0
      %v1762 = vsel %vm1730, %v1600, 0
      %v1765 = vsel %vm1730, %v1601, 0
      %v1768 = vsel %vm1730, %v1602, 0
      %v1771 = vsel %vm1730, %v1603, 0
      %v1774 = vsel %vm1730, %v1604, 0
      %v1777 = vsel %vm1730, %v1605, 0
      %v1780 = vsel %vm1730, %v1606, 0
      %v1783 = vsel %vm1730, %v1607, 0
      %v1786 = vsel %vm1730, %v1608, 0
      %v1789 = vsel %vm1730, %v1609, 0
      %v1792 = vsel %vm1730, %v1610, 0
      %v1795 = vsel %vm1730, %v1611, 0
      %v1798 = vsel %vm1730, %v1612, 0
      %v1801 = vsel %vm1730, %v1613, 0
      %v1804 = vsel %vm1730, %v1614, 0
      %v1807 = vsel %vm1730, %v1615, 0
      %v1810 = vsel %vm1730, %v1616, 0
      %v1813 = vsel %vm1730, %v1617, 0
      %v1816 = vsel %vm1730, %v1618, 0
      %v1819 = vsel %vm1730, %v1619, 0
      %v1822 = vsel %vm1730, %v1620, 0
      %v1825 = vsel %vm1730, %v1621, 0
      %v1828 = vsel %vm1730, %v1622, 0
      %v1831 = vsel %vm1730, %v1623, 0
      %v1834 = vsel %vm1730, %v1624, 0
      %v1837 = vsel %vm1730, %v1625, 0
      %v1840 = vsel %vm1730, %v1626, 0
      %v1843 = vsel %vm1730, %v1627, 0
      %v1846 = vsel %vm1730, %v1628, 0
      %v1849 = vsel %vm1730, %v1629, 0
      %v1852 = vsel %vm1730, %v1630, 0
      %v1855 = vsel %vm1730, %v1631, 0
      %v1858 = vsel %vm1730, %v1632, 0
      %v1861 = vsel %vm1730, %v1633, 0
      %v1864 = vsel %vm1730, %v1634, 0
      %v1867 = vsel %vm1730, %v1635, 0
      %v1870 = vsel %vm1730, %v1636, 0
      %v1873 = vsel %vm1730, %v1637, 0
      %v1876 = vsel %vm1730, %v1638, 0
      %v1879 = vsel %vm1730, %v1639, 0
      %v1882 = vsel %vm1730, %v1640, 0
      %v1885 = vsel %vm1730, %v1641, 0
      %v1888 = vsel %vm1730, %v1642, 0
      %v1891 = vsel %vm1730, %v1643, 0
      %v1894 = vsel %vm1730, %v1644, 0
      %v1897 = vsel %vm1730, %v1645, 0
      %v1900 = vsel %vm1730, %v1646, 0
      %v1903 = vsel %vm1730, %v1647, 0
      %v1906 = vsel %vm1730, %v1648, 0
      %v1909 = vsel %vm1730, %v1649, 0
      %v1912 = vsel %vm1730, %v1650, 0
      %v1915 = vsel %vm1730, %v1651, 0
      %v1918 = vsel %vm1730, %v1652, 0
      %v1921 = vsel %vm1730, %v1653, 0
      %v1924 = vsel %vm1730, %v1654, 0
      %v1927 = vsel %vm1730, %v1655, 0
      %v1930 = vsel %vm1730, %v1656, 0
      %v1933 = vsel %vm1730, %v1657, 0
      %v1936 = vsel %vm1730, %v1658, 0
      %v1939 = vsel %vm1730, %v1659, 0
      %v1942 = vsel %vm1730, %v1660, 0
      %v1945 = vsel %vm1730, %v1661, 0
      %v1948 = vsel %vm1730, %v1662, 0
      %v1951 = vsel %vm1730, %v1663, 0
      %v1954 = vsel %vm1730, %v1664, 0
      %v1957 = vsel %vm1730, %v1665, 0
      %v1960 = vsel %vm1730, %v1666, 0
      %v1963 = vsel %vm1730, %v1667, 0
      %v1966 = vsel %vm1730, %v1668, 0
      %v1969 = vsel %vm1730, %v1669, 0
      %v1972 = vsel %vm1730, %v1670, 0
      %v1975 = vsel %vm1730, %v1671, 0
      %v1978 = vsel %vm1730, %v1672, 0
      %v1981 = vsel %vm1730, %v1673, 0
      %v1984 = vsel %vm1730, %v1674, 0
      %v1987 = vsel %vm1730, %v1675, 0
      %v1990 = vsel %vm1730, %v1676, 0
      %v1993 = vsel %vm1730, %v1677, 0
      %v1996 = vsel %vm1730, %v1678, 0
      %v1999 = vsel %vm1730, %v1679, 0
      %v2002 = vsel %vm1730, %v1680, 0
      %v2005 = vsel %vm1730, %v1681, 0
      %v2008 = vsel %vm1730, %v1682, 0
      %v2011 = vsel %vm1730, %v1683, 0
      %v2014 = vsel %vm1730, %v1684, 0
      %v2017 = vsel %vm1730, %v1685, 0
      %v2020 = vsel %vm1730, %v1686, 0
      %v2023 = vsel %vm1730, %v1687, 0
      %v2026 = vsel %vm1730, %v1688, 0
      %v2029 = vsel %vm1730, %v1689, 0
      %v2032 = vsel %vm1730, %v1690, 0
      %v2035 = vsel %vm1730, %v1691, 0
      %v2038 = vsel %vm1730, %v1692, 0
      %v2041 = vsel %vm1730, %v1693, 0
      %v2044 = vsel %vm1730, %v1694, 0
      %v2047 = vsel %vm1730, %v1695, 0
      %v2050 = vsel %vm1730, %v1696, 0
      %v2053 = vsel %vm1730, %v1697, 0
      %v2056 = vsel %vm1730, %v1698, 0
      %v2059 = vsel %vm1730, %v1699, 0
      %v2062 = vsel %vm1730, %v1700, 0
      %v2065 = vsel %vm1730, %v1701, 0
      %v2068 = vsel %vm1730, %v1702, 0
      %v2071 = vsel %vm1730, %v1703, 0
      %v2074 = vsel %vm1730, %v1704, 0
      %v2077 = vsel %vm1730, %v1705, 0
      %v2080 = vsel %vm1730, %v1706, 0
      %v2083 = vsel %vm1730, %v1707, 0
      %v2086 = vsel %vm1730, %v1708, 0
      %v2089 = vsel %vm1730, %v1709, 0
      %v2092 = vsel %vm1730, %v1710, 0
      %v2095 = vsel %vm1730, %v1711, 0
      %v2098 = vsel %vm1730, %v1712, 0
      %v2101 = vsel %vm1730, %v1713, 0
      %v2104 = vsel %vm1730, %v1714, 0
      %v2107 = vsel %vm1730, %v1715, 0
      %v2110 = vsel %vm1730, %v1716, 0
      %v2113 = vsel %vm1730, %v1717, 0
      %2115 = vmatpush.bf16.msra.mxu0 0
      %2116 = vmatpush.bf16.msra.mxu0 0
      %2117 = vmatpush.bf16.msra.mxu0 0
      %2118 = vmatpush.bf16.msra.mxu0 0
      %2119 = vmatpush.bf16.msra.mxu0 0
      %2120 = vmatpush.bf16.msra.mxu0 0
      %2121 = vmatpush.bf16.msra.mxu0 %v1727
      %2122 = vmatpush.bf16.msra.mxu0 %v1726
      %2123 = vmatmul.bf16.gmra.mxu0 %v1732
      %v2124 = vpop.f32.mrf.mxu0
      %v2125 = vadd.f32 0.0, %v2124
      %v2126 = vpop.f32.mrf.mxu0
      %v2127 = vadd.f32 0.0, %v2126
      %2128 = vmatmul.bf16.gmra.mxu0 %v1735
      %v2129 = vpop.f32.mrf.mxu0
      %v2130 = vadd.f32 0.0, %v2129
      %v2131 = vpop.f32.mrf.mxu0
      %v2132 = vadd.f32 0.0, %v2131
      %2133 = vmatmul.bf16.gmra.mxu0 %v1738
      %v2134 = vpop.f32.mrf.mxu0
      %v2135 = vadd.f32 0.0, %v2134
      %v2136 = vpop.f32.mrf.mxu0
      %v2137 = vadd.f32 0.0, %v2136
      %2138 = vmatmul.bf16.gmra.mxu0 %v1741
      %v2139 = vpop.f32.mrf.mxu0
      %v2140 = vadd.f32 0.0, %v2139
      %v2141 = vpop.f32.mrf.mxu0
      %v2142 = vadd.f32 0.0, %v2141
      %2143 = vmatmul.bf16.gmra.mxu0 %v1744
      %v2144 = vpop.f32.mrf.mxu0
      %v2145 = vadd.f32 0.0, %v2144
      %v2146 = vpop.f32.mrf.mxu0
      %v2147 = vadd.f32 0.0, %v2146
      %2148 = vmatmul.bf16.gmra.mxu0 %v1747
      %v2149 = vpop.f32.mrf.mxu0
      %v2150 = vadd.f32 0.0, %v2149
      %v2151 = vpop.f32.mrf.mxu0
      %v2152 = vadd.f32 0.0, %v2151
      %2153 = vmatmul.bf16.gmra.mxu0 %v1750
      %v2154 = vpop.f32.mrf.mxu0
      %v2155 = vadd.f32 0.0, %v2154
      %v2156 = vpop.f32.mrf.mxu0
      %v2157 = vadd.f32 0.0, %v2156
      %2158 = vmatmul.bf16.gmra.mxu0 %v1753
      %v2159 = vpop.f32.mrf.mxu0
      %v2160 = vadd.f32 0.0, %v2159
      %v2161 = vpop.f32.mrf.mxu0
      %v2162 = vadd.f32 0.0, %v2161
      %2163 = vmatmul.bf16.gmra.mxu0 %v1756
      %v2164 = vpop.f32.mrf.mxu0
      %v2165 = vadd.f32 0.0, %v2164
      %v2166 = vpop.f32.mrf.mxu0
      %v2167 = vadd.f32 0.0, %v2166
      %2168 = vmatmul.bf16.gmra.mxu0 %v1759
      %v2169 = vpop.f32.mrf.mxu0
      %v2170 = vadd.f32 0.0, %v2169
      %v2171 = vpop.f32.mrf.mxu0
      %v2172 = vadd.f32 0.0, %v2171
      %2173 = vmatmul.bf16.gmra.mxu0 %v1762
      %v2174 = vpop.f32.mrf.mxu0
      %v2175 = vadd.f32 0.0, %v2174
      %v2176 = vpop.f32.mrf.mxu0
      %v2177 = vadd.f32 0.0, %v2176
      %2178 = vmatmul.bf16.gmra.mxu0 %v1765
      %v2179 = vpop.f32.mrf.mxu0
      %v2180 = vadd.f32 0.0, %v2179
      %v2181 = vpop.f32.mrf.mxu0
      %v2182 = vadd.f32 0.0, %v2181
      %2183 = vmatmul.bf16.gmra.mxu0 %v1768
      %v2184 = vpop.f32.mrf.mxu0
      %v2185 = vadd.f32 0.0, %v2184
      %v2186 = vpop.f32.mrf.mxu0
      %v2187 = vadd.f32 0.0, %v2186
      %2188 = vmatmul.bf16.gmra.mxu0 %v1771
      %v2189 = vpop.f32.mrf.mxu0
      %v2190 = vadd.f32 0.0, %v2189
      %v2191 = vpop.f32.mrf.mxu0
      %v2192 = vadd.f32 0.0, %v2191
      %2193 = vmatmul.bf16.gmra.mxu0 %v1774
      %v2194 = vpop.f32.mrf.mxu0
      %v2195 = vadd.f32 0.0, %v2194
      %v2196 = vpop.f32.mrf.mxu0
      %v2197 = vadd.f32 0.0, %v2196
      %2198 = vmatmul.bf16.gmra.mxu0 %v1777
      %v2199 = vpop.f32.mrf.mxu0
      %v2200 = vadd.f32 0.0, %v2199
      %v2201 = vpop.f32.mrf.mxu0
      %v2202 = vadd.f32 0.0, %v2201
      %2203 = vmatmul.bf16.gmra.mxu0 %v1780
      %v2204 = vpop.f32.mrf.mxu0
      %v2205 = vadd.f32 0.0, %v2204
      %v2206 = vpop.f32.mrf.mxu0
      %v2207 = vadd.f32 0.0, %v2206
      %2208 = vmatmul.bf16.gmra.mxu0 %v1783
      %v2209 = vpop.f32.mrf.mxu0
      %v2210 = vadd.f32 0.0, %v2209
      %v2211 = vpop.f32.mrf.mxu0
      %v2212 = vadd.f32 0.0, %v2211
      %2213 = vmatmul.bf16.gmra.mxu0 %v1786
      %v2214 = vpop.f32.mrf.mxu0
      %v2215 = vadd.f32 0.0, %v2214
      %v2216 = vpop.f32.mrf.mxu0
      %v2217 = vadd.f32 0.0, %v2216
      %2218 = vmatmul.bf16.gmra.mxu0 %v1789
      %v2219 = vpop.f32.mrf.mxu0
      %v2220 = vadd.f32 0.0, %v2219
      %v2221 = vpop.f32.mrf.mxu0
      %v2222 = vadd.f32 0.0, %v2221
      %2223 = vmatmul.bf16.gmra.mxu0 %v1792
      %v2224 = vpop.f32.mrf.mxu0
      %v2225 = vadd.f32 0.0, %v2224
      %v2226 = vpop.f32.mrf.mxu0
      %v2227 = vadd.f32 0.0, %v2226
      %2228 = vmatmul.bf16.gmra.mxu0 %v1795
      %v2229 = vpop.f32.mrf.mxu0
      %v2230 = vadd.f32 0.0, %v2229
      %v2231 = vpop.f32.mrf.mxu0
      %v2232 = vadd.f32 0.0, %v2231
      %2233 = vmatmul.bf16.gmra.mxu0 %v1798
      %v2234 = vpop.f32.mrf.mxu0
      %v2235 = vadd.f32 0.0, %v2234
      %v2236 = vpop.f32.mrf.mxu0
      %v2237 = vadd.f32 0.0, %v2236
      %2238 = vmatmul.bf16.gmra.mxu0 %v1801
      %v2239 = vpop.f32.mrf.mxu0
      %v2240 = vadd.f32 0.0, %v2239
      %v2241 = vpop.f32.mrf.mxu0
      %v2242 = vadd.f32 0.0, %v2241
      %2243 = vmatmul.bf16.gmra.mxu0 %v1804
      %v2244 = vpop.f32.mrf.mxu0
      %v2245 = vadd.f32 0.0, %v2244
      %v2246 = vpop.f32.mrf.mxu0
      %v2247 = vadd.f32 0.0, %v2246
      %2248 = vmatmul.bf16.gmra.mxu0 %v1807
      %v2249 = vpop.f32.mrf.mxu0
      %v2250 = vadd.f32 0.0, %v2249
      %v2251 = vpop.f32.mrf.mxu0
      %v2252 = vadd.f32 0.0, %v2251
      %2253 = vmatmul.bf16.gmra.mxu0 %v1810
      %v2254 = vpop.f32.mrf.mxu0
      %v2255 = vadd.f32 0.0, %v2254
      %v2256 = vpop.f32.mrf.mxu0
      %v2257 = vadd.f32 0.0, %v2256
      %2258 = vmatmul.bf16.gmra.mxu0 %v1813
      %v2259 = vpop.f32.mrf.mxu0
      %v2260 = vadd.f32 0.0, %v2259
      %v2261 = vpop.f32.mrf.mxu0
      %v2262 = vadd.f32 0.0, %v2261
      %2263 = vmatmul.bf16.gmra.mxu0 %v1816
      %v2264 = vpop.f32.mrf.mxu0
      %v2265 = vadd.f32 0.0, %v2264
      %v2266 = vpop.f32.mrf.mxu0
      %v2267 = vadd.f32 0.0, %v2266
      %2268 = vmatmul.bf16.gmra.mxu0 %v1819
      %v2269 = vpop.f32.mrf.mxu0
      %v2270 = vadd.f32 0.0, %v2269
      %v2271 = vpop.f32.mrf.mxu0
      %v2272 = vadd.f32 0.0, %v2271
      %2273 = vmatmul.bf16.gmra.mxu0 %v1822
      %v2274 = vpop.f32.mrf.mxu0
      %v2275 = vadd.f32 0.0, %v2274
      %v2276 = vpop.f32.mrf.mxu0
      %v2277 = vadd.f32 0.0, %v2276
      %2278 = vmatmul.bf16.gmra.mxu0 %v1825
      %v2279 = vpop.f32.mrf.mxu0
      %v2280 = vadd.f32 0.0, %v2279
      %v2281 = vpop.f32.mrf.mxu0
      %v2282 = vadd.f32 0.0, %v2281
      %2283 = vmatmul.bf16.gmra.mxu0 %v1828
      %v2284 = vpop.f32.mrf.mxu0
      %v2285 = vadd.f32 0.0, %v2284
      %v2286 = vpop.f32.mrf.mxu0
      %v2287 = vadd.f32 0.0, %v2286
      %2288 = vmatmul.bf16.gmra.mxu0 %v1831
      %v2289 = vpop.f32.mrf.mxu0
      %v2290 = vadd.f32 0.0, %v2289
      %v2291 = vpop.f32.mrf.mxu0
      %v2292 = vadd.f32 0.0, %v2291
      %2293 = vmatmul.bf16.gmra.mxu0 %v1834
      %v2294 = vpop.f32.mrf.mxu0
      %v2295 = vadd.f32 0.0, %v2294
      %v2296 = vpop.f32.mrf.mxu0
      %v2297 = vadd.f32 0.0, %v2296
      %2298 = vmatmul.bf16.gmra.mxu0 %v1837
      %v2299 = vpop.f32.mrf.mxu0
      %v2300 = vadd.f32 0.0, %v2299
      %v2301 = vpop.f32.mrf.mxu0
      %v2302 = vadd.f32 0.0, %v2301
      %2303 = vmatmul.bf16.gmra.mxu0 %v1840
      %v2304 = vpop.f32.mrf.mxu0
      %v2305 = vadd.f32 0.0, %v2304
      %v2306 = vpop.f32.mrf.mxu0
      %v2307 = vadd.f32 0.0, %v2306
      %2308 = vmatmul.bf16.gmra.mxu0 %v1843
      %v2309 = vpop.f32.mrf.mxu0
      %v2310 = vadd.f32 0.0, %v2309
      %v2311 = vpop.f32.mrf.mxu0
      %v2312 = vadd.f32 0.0, %v2311
      %2313 = vmatmul.bf16.gmra.mxu0 %v1846
      %v2314 = vpop.f32.mrf.mxu0
      %v2315 = vadd.f32 0.0, %v2314
      %v2316 = vpop.f32.mrf.mxu0
      %v2317 = vadd.f32 0.0, %v2316
      %2318 = vmatmul.bf16.gmra.mxu0 %v1849
      %v2319 = vpop.f32.mrf.mxu0
      %v2320 = vadd.f32 0.0, %v2319
      %v2321 = vpop.f32.mrf.mxu0
      %v2322 = vadd.f32 0.0, %v2321
      %2323 = vmatmul.bf16.gmra.mxu0 %v1852
      %v2324 = vpop.f32.mrf.mxu0
      %v2325 = vadd.f32 0.0, %v2324
      %v2326 = vpop.f32.mrf.mxu0
      %v2327 = vadd.f32 0.0, %v2326
      %2328 = vmatmul.bf16.gmra.mxu0 %v1855
      %v2329 = vpop.f32.mrf.mxu0
      %v2330 = vadd.f32 0.0, %v2329
      %v2331 = vpop.f32.mrf.mxu0
      %v2332 = vadd.f32 0.0, %v2331
      %2333 = vmatmul.bf16.gmra.mxu0 %v1858
      %v2334 = vpop.f32.mrf.mxu0
      %v2335 = vadd.f32 0.0, %v2334
      %v2336 = vpop.f32.mrf.mxu0
      %v2337 = vadd.f32 0.0, %v2336
      %2338 = vmatmul.bf16.gmra.mxu0 %v1861
      %v2339 = vpop.f32.mrf.mxu0
      %v2340 = vadd.f32 0.0, %v2339
      %v2341 = vpop.f32.mrf.mxu0
      %v2342 = vadd.f32 0.0, %v2341
      %2343 = vmatmul.bf16.gmra.mxu0 %v1864
      %v2344 = vpop.f32.mrf.mxu0
      %v2345 = vadd.f32 0.0, %v2344
      %v2346 = vpop.f32.mrf.mxu0
      %v2347 = vadd.f32 0.0, %v2346
      %2348 = vmatmul.bf16.gmra.mxu0 %v1867
      %v2349 = vpop.f32.mrf.mxu0
      %v2350 = vadd.f32 0.0, %v2349
      %v2351 = vpop.f32.mrf.mxu0
      %v2352 = vadd.f32 0.0, %v2351
      %2353 = vmatmul.bf16.gmra.mxu0 %v1870
      %v2354 = vpop.f32.mrf.mxu0
      %v2355 = vadd.f32 0.0, %v2354
      %v2356 = vpop.f32.mrf.mxu0
      %v2357 = vadd.f32 0.0, %v2356
      %2358 = vmatmul.bf16.gmra.mxu0 %v1873
      %v2359 = vpop.f32.mrf.mxu0
      %v2360 = vadd.f32 0.0, %v2359
      %v2361 = vpop.f32.mrf.mxu0
      %v2362 = vadd.f32 0.0, %v2361
      %2363 = vmatmul.bf16.gmra.mxu0 %v1876
      %v2364 = vpop.f32.mrf.mxu0
      %v2365 = vadd.f32 0.0, %v2364
      %v2366 = vpop.f32.mrf.mxu0
      %v2367 = vadd.f32 0.0, %v2366
      %2368 = vmatmul.bf16.gmra.mxu0 %v1879
      %v2369 = vpop.f32.mrf.mxu0
      %v2370 = vadd.f32 0.0, %v2369
      %v2371 = vpop.f32.mrf.mxu0
      %v2372 = vadd.f32 0.0, %v2371
      %2373 = vmatmul.bf16.gmra.mxu0 %v1882
      %v2374 = vpop.f32.mrf.mxu0
      %v2375 = vadd.f32 0.0, %v2374
      %v2376 = vpop.f32.mrf.mxu0
      %v2377 = vadd.f32 0.0, %v2376
      %2378 = vmatmul.bf16.gmra.mxu0 %v1885
      %v2379 = vpop.f32.mrf.mxu0
      %v2380 = vadd.f32 0.0, %v2379
      %v2381 = vpop.f32.mrf.mxu0
      %v2382 = vadd.f32 0.0, %v2381
      %2383 = vmatmul.bf16.gmra.mxu0 %v1888
      %v2384 = vpop.f32.mrf.mxu0
      %v2385 = vadd.f32 0.0, %v2384
      %v2386 = vpop.f32.mrf.mxu0
      %v2387 = vadd.f32 0.0, %v2386
      %2388 = vmatmul.bf16.gmra.mxu0 %v1891
      %v2389 = vpop.f32.mrf.mxu0
      %v2390 = vadd.f32 0.0, %v2389
      %v2391 = vpop.f32.mrf.mxu0
      %v2392 = vadd.f32 0.0, %v2391
      %2393 = vmatmul.bf16.gmra.mxu0 %v1894
      %v2394 = vpop.f32.mrf.mxu0
      %v2395 = vadd.f32 0.0, %v2394
      %v2396 = vpop.f32.mrf.mxu0
      %v2397 = vadd.f32 0.0, %v2396
      %2398 = vmatmul.bf16.gmra.mxu0 %v1897
      %v2399 = vpop.f32.mrf.mxu0
      %v2400 = vadd.f32 0.0, %v2399
      %v2401 = vpop.f32.mrf.mxu0
      %v2402 = vadd.f32 0.0, %v2401
      %2403 = vmatmul.bf16.gmra.mxu0 %v1900
      %v2404 = vpop.f32.mrf.mxu0
      %v2405 = vadd.f32 0.0, %v2404
      %v2406 = vpop.f32.mrf.mxu0
      %v2407 = vadd.f32 0.0, %v2406
      %2408 = vmatmul.bf16.gmra.mxu0 %v1903
      %v2409 = vpop.f32.mrf.mxu0
      %v2410 = vadd.f32 0.0, %v2409
      %v2411 = vpop.f32.mrf.mxu0
      %v2412 = vadd.f32 0.0, %v2411
      %2413 = vmatmul.bf16.gmra.mxu0 %v1906
      %v2414 = vpop.f32.mrf.mxu0
      %v2415 = vadd.f32 0.0, %v2414
      %v2416 = vpop.f32.mrf.mxu0
      %v2417 = vadd.f32 0.0, %v2416
      %2418 = vmatmul.bf16.gmra.mxu0 %v1909
      %v2419 = vpop.f32.mrf.mxu0
      %v2420 = vadd.f32 0.0, %v2419
      %v2421 = vpop.f32.mrf.mxu0
      %v2422 = vadd.f32 0.0, %v2421
      %2423 = vmatmul.bf16.gmra.mxu0 %v1912
      %v2424 = vpop.f32.mrf.mxu0
      %v2425 = vadd.f32 0.0, %v2424
      %v2426 = vpop.f32.mrf.mxu0
      %v2427 = vadd.f32 0.0, %v2426
      %2428 = vmatmul.bf16.gmra.mxu0 %v1915
      %v2429 = vpop.f32.mrf.mxu0
      %v2430 = vadd.f32 0.0, %v2429
      %v2431 = vpop.f32.mrf.mxu0
      %v2432 = vadd.f32 0.0, %v2431
      %2433 = vmatmul.bf16.gmra.mxu0 %v1918
      %v2434 = vpop.f32.mrf.mxu0
      %v2435 = vadd.f32 0.0, %v2434
      %v2436 = vpop.f32.mrf.mxu0
      %v2437 = vadd.f32 0.0, %v2436
      %2438 = vmatmul.bf16.gmra.mxu0 %v1921
      %v2439 = vpop.f32.mrf.mxu0
      %v2440 = vadd.f32 0.0, %v2439
      %v2441 = vpop.f32.mrf.mxu0
      %v2442 = vadd.f32 0.0, %v2441
      %2443 = vmatmul.bf16.gmra.mxu0 %v1924
      %v2444 = vpop.f32.mrf.mxu0
      %v2445 = vadd.f32 0.0, %v2444
      %v2446 = vpop.f32.mrf.mxu0
      %v2447 = vadd.f32 0.0, %v2446
      %2448 = vmatmul.bf16.gmra.mxu0 %v1927
      %v2449 = vpop.f32.mrf.mxu0
      %v2450 = vadd.f32 0.0, %v2449
      %v2451 = vpop.f32.mrf.mxu0
      %v2452 = vadd.f32 0.0, %v2451
      %2453 = vmatmul.bf16.gmra.mxu0 %v1930
      %v2454 = vpop.f32.mrf.mxu0
      %v2455 = vadd.f32 0.0, %v2454
      %v2456 = vpop.f32.mrf.mxu0
      %v2457 = vadd.f32 0.0, %v2456
      %2458 = vmatmul.bf16.gmra.mxu0 %v1933
      %v2459 = vpop.f32.mrf.mxu0
      %v2460 = vadd.f32 0.0, %v2459
      %v2461 = vpop.f32.mrf.mxu0
      %v2462 = vadd.f32 0.0, %v2461
      %2463 = vmatmul.bf16.gmra.mxu0 %v1936
      %v2464 = vpop.f32.mrf.mxu0
      %v2465 = vadd.f32 0.0, %v2464
      %v2466 = vpop.f32.mrf.mxu0
      %v2467 = vadd.f32 0.0, %v2466
      %2468 = vmatmul.bf16.gmra.mxu0 %v1939
      %v2469 = vpop.f32.mrf.mxu0
      %v2470 = vadd.f32 0.0, %v2469
      %v2471 = vpop.f32.mrf.mxu0
      %v2472 = vadd.f32 0.0, %v2471
      %2473 = vmatmul.bf16.gmra.mxu0 %v1942
      %v2474 = vpop.f32.mrf.mxu0
      %v2475 = vadd.f32 0.0, %v2474
      %v2476 = vpop.f32.mrf.mxu0
      %v2477 = vadd.f32 0.0, %v2476
      %2478 = vmatmul.bf16.gmra.mxu0 %v1945
      %v2479 = vpop.f32.mrf.mxu0
      %v2480 = vadd.f32 0.0, %v2479
      %v2481 = vpop.f32.mrf.mxu0
      %v2482 = vadd.f32 0.0, %v2481
      %2483 = vmatmul.bf16.gmra.mxu0 %v1948
      %v2484 = vpop.f32.mrf.mxu0
      %v2485 = vadd.f32 0.0, %v2484
      %v2486 = vpop.f32.mrf.mxu0
      %v2487 = vadd.f32 0.0, %v2486
      %2488 = vmatmul.bf16.gmra.mxu0 %v1951
      %v2489 = vpop.f32.mrf.mxu0
      %v2490 = vadd.f32 0.0, %v2489
      %v2491 = vpop.f32.mrf.mxu0
      %v2492 = vadd.f32 0.0, %v2491
      %2493 = vmatmul.bf16.gmra.mxu0 %v1954
      %v2494 = vpop.f32.mrf.mxu0
      %v2495 = vadd.f32 0.0, %v2494
      %v2496 = vpop.f32.mrf.mxu0
      %v2497 = vadd.f32 0.0, %v2496
      %2498 = vmatmul.bf16.gmra.mxu0 %v1957
      %v2499 = vpop.f32.mrf.mxu0
      %v2500 = vadd.f32 0.0, %v2499
      %v2501 = vpop.f32.mrf.mxu0
      %v2502 = vadd.f32 0.0, %v2501
      %2503 = vmatmul.bf16.gmra.mxu0 %v1960
      %v2504 = vpop.f32.mrf.mxu0
      %v2505 = vadd.f32 0.0, %v2504
      %v2506 = vpop.f32.mrf.mxu0
      %v2507 = vadd.f32 0.0, %v2506
      %2508 = vmatmul.bf16.gmra.mxu0 %v1963
      %v2509 = vpop.f32.mrf.mxu0
      %v2510 = vadd.f32 0.0, %v2509
      %v2511 = vpop.f32.mrf.mxu0
      %v2512 = vadd.f32 0.0, %v2511
      %2513 = vmatmul.bf16.gmra.mxu0 %v1966
      %v2514 = vpop.f32.mrf.mxu0
      %v2515 = vadd.f32 0.0, %v2514
      %v2516 = vpop.f32.mrf.mxu0
      %v2517 = vadd.f32 0.0, %v2516
      %2518 = vmatmul.bf16.gmra.mxu0 %v1969
      %v2519 = vpop.f32.mrf.mxu0
      %v2520 = vadd.f32 0.0, %v2519
      %v2521 = vpop.f32.mrf.mxu0
      %v2522 = vadd.f32 0.0, %v2521
      %2523 = vmatmul.bf16.gmra.mxu0 %v1972
      %v2524 = vpop.f32.mrf.mxu0
      %v2525 = vadd.f32 0.0, %v2524
      %v2526 = vpop.f32.mrf.mxu0
      %v2527 = vadd.f32 0.0, %v2526
      %2528 = vmatmul.bf16.gmra.mxu0 %v1975
      %v2529 = vpop.f32.mrf.mxu0
      %v2530 = vadd.f32 0.0, %v2529
      %v2531 = vpop.f32.mrf.mxu0
      %v2532 = vadd.f32 0.0, %v2531
      %2533 = vmatmul.bf16.gmra.mxu0 %v1978
      %v2534 = vpop.f32.mrf.mxu0
      %v2535 = vadd.f32 0.0, %v2534
      %v2536 = vpop.f32.mrf.mxu0
      %v2537 = vadd.f32 0.0, %v2536
      %2538 = vmatmul.bf16.gmra.mxu0 %v1981
      %v2539 = vpop.f32.mrf.mxu0
      %v2540 = vadd.f32 0.0, %v2539
      %v2541 = vpop.f32.mrf.mxu0
      %v2542 = vadd.f32 0.0, %v2541
      %2543 = vmatmul.bf16.gmra.mxu0 %v1984
      %v2544 = vpop.f32.mrf.mxu0
      %v2545 = vadd.f32 0.0, %v2544
      %v2546 = vpop.f32.mrf.mxu0
      %v2547 = vadd.f32 0.0, %v2546
      %2548 = vmatmul.bf16.gmra.mxu0 %v1987
      %v2549 = vpop.f32.mrf.mxu0
      %v2550 = vadd.f32 0.0, %v2549
      %v2551 = vpop.f32.mrf.mxu0
      %v2552 = vadd.f32 0.0, %v2551
      %2553 = vmatmul.bf16.gmra.mxu0 %v1990
      %v2554 = vpop.f32.mrf.mxu0
      %v2555 = vadd.f32 0.0, %v2554
      %v2556 = vpop.f32.mrf.mxu0
      %v2557 = vadd.f32 0.0, %v2556
      %2558 = vmatmul.bf16.gmra.mxu0 %v1993
      %v2559 = vpop.f32.mrf.mxu0
      %v2560 = vadd.f32 0.0, %v2559
      %v2561 = vpop.f32.mrf.mxu0
      %v2562 = vadd.f32 0.0, %v2561
      %2563 = vmatmul.bf16.gmra.mxu0 %v1996
      %v2564 = vpop.f32.mrf.mxu0
      %v2565 = vadd.f32 0.0, %v2564
      %v2566 = vpop.f32.mrf.mxu0
      %v2567 = vadd.f32 0.0, %v2566
      %2568 = vmatmul.bf16.gmra.mxu0 %v1999
      %v2569 = vpop.f32.mrf.mxu0
      %v2570 = vadd.f32 0.0, %v2569
      %v2571 = vpop.f32.mrf.mxu0
      %v2572 = vadd.f32 0.0, %v2571
      %2573 = vmatmul.bf16.gmra.mxu0 %v2002
      %v2574 = vpop.f32.mrf.mxu0
      %v2575 = vadd.f32 0.0, %v2574
      %v2576 = vpop.f32.mrf.mxu0
      %v2577 = vadd.f32 0.0, %v2576
      %2578 = vmatmul.bf16.gmra.mxu0 %v2005
      %v2579 = vpop.f32.mrf.mxu0
      %v2580 = vadd.f32 0.0, %v2579
      %v2581 = vpop.f32.mrf.mxu0
      %v2582 = vadd.f32 0.0, %v2581
      %2583 = vmatmul.bf16.gmra.mxu0 %v2008
      %v2584 = vpop.f32.mrf.mxu0
      %v2585 = vadd.f32 0.0, %v2584
      %v2586 = vpop.f32.mrf.mxu0
      %v2587 = vadd.f32 0.0, %v2586
      %2588 = vmatmul.bf16.gmra.mxu0 %v2011
      %v2589 = vpop.f32.mrf.mxu0
      %v2590 = vadd.f32 0.0, %v2589
      %v2591 = vpop.f32.mrf.mxu0
      %v2592 = vadd.f32 0.0, %v2591
      %2593 = vmatmul.bf16.gmra.mxu0 %v2014
      %v2594 = vpop.f32.mrf.mxu0
      %v2595 = vadd.f32 0.0, %v2594
      %v2596 = vpop.f32.mrf.mxu0
      %v2597 = vadd.f32 0.0, %v2596
      %2598 = vmatmul.bf16.gmra.mxu0 %v2017
      %v2599 = vpop.f32.mrf.mxu0
      %v2600 = vadd.f32 0.0, %v2599
      %v2601 = vpop.f32.mrf.mxu0
      %v2602 = vadd.f32 0.0, %v2601
      %2603 = vmatmul.bf16.gmra.mxu0 %v2020
      %v2604 = vpop.f32.mrf.mxu0
      %v2605 = vadd.f32 0.0, %v2604
      %v2606 = vpop.f32.mrf.mxu0
      %v2607 = vadd.f32 0.0, %v2606
      %2608 = vmatmul.bf16.gmra.mxu0 %v2023
      %v2609 = vpop.f32.mrf.mxu0
      %v2610 = vadd.f32 0.0, %v2609
      %v2611 = vpop.f32.mrf.mxu0
      %v2612 = vadd.f32 0.0, %v2611
      %2613 = vmatmul.bf16.gmra.mxu0 %v2026
      %v2614 = vpop.f32.mrf.mxu0
      %v2615 = vadd.f32 0.0, %v2614
      %v2616 = vpop.f32.mrf.mxu0
      %v2617 = vadd.f32 0.0, %v2616
      %2618 = vmatmul.bf16.gmra.mxu0 %v2029
      %v2619 = vpop.f32.mrf.mxu0
      %v2620 = vadd.f32 0.0, %v2619
      %v2621 = vpop.f32.mrf.mxu0
      %v2622 = vadd.f32 0.0, %v2621
      %2623 = vmatmul.bf16.gmra.mxu0 %v2032
      %v2624 = vpop.f32.mrf.mxu0
      %v2625 = vadd.f32 0.0, %v2624
      %v2626 = vpop.f32.mrf.mxu0
      %v2627 = vadd.f32 0.0, %v2626
      %2628 = vmatmul.bf16.gmra.mxu0 %v2035
      %v2629 = vpop.f32.mrf.mxu0
      %v2630 = vadd.f32 0.0, %v2629
      %v2631 = vpop.f32.mrf.mxu0
      %v2632 = vadd.f32 0.0, %v2631
      %2633 = vmatmul.bf16.gmra.mxu0 %v2038
      %v2634 = vpop.f32.mrf.mxu0
      %v2635 = vadd.f32 0.0, %v2634
      %v2636 = vpop.f32.mrf.mxu0
      %v2637 = vadd.f32 0.0, %v2636
      %2638 = vmatmul.bf16.gmra.mxu0 %v2041
      %v2639 = vpop.f32.mrf.mxu0
      %v2640 = vadd.f32 0.0, %v2639
      %v2641 = vpop.f32.mrf.mxu0
      %v2642 = vadd.f32 0.0, %v2641
      %2643 = vmatmul.bf16.gmra.mxu0 %v2044
      %v2644 = vpop.f32.mrf.mxu0
      %v2645 = vadd.f32 0.0, %v2644
      %v2646 = vpop.f32.mrf.mxu0
      %v2647 = vadd.f32 0.0, %v2646
      %2648 = vmatmul.bf16.gmra.mxu0 %v2047
      %v2649 = vpop.f32.mrf.mxu0
      %v2650 = vadd.f32 0.0, %v2649
      %v2651 = vpop.f32.mrf.mxu0
      %v2652 = vadd.f32 0.0, %v2651
      %2653 = vmatmul.bf16.gmra.mxu0 %v2050
      %v2654 = vpop.f32.mrf.mxu0
      %v2655 = vadd.f32 0.0, %v2654
      %v2656 = vpop.f32.mrf.mxu0
      %v2657 = vadd.f32 0.0, %v2656
      %2658 = vmatmul.bf16.gmra.mxu0 %v2053
      %v2659 = vpop.f32.mrf.mxu0
      %v2660 = vadd.f32 0.0, %v2659
      %v2661 = vpop.f32.mrf.mxu0
      %v2662 = vadd.f32 0.0, %v2661
      %2663 = vmatmul.bf16.gmra.mxu0 %v2056
      %v2664 = vpop.f32.mrf.mxu0
      %v2665 = vadd.f32 0.0, %v2664
      %v2666 = vpop.f32.mrf.mxu0
      %v2667 = vadd.f32 0.0, %v2666
      %2668 = vmatmul.bf16.gmra.mxu0 %v2059
      %v2669 = vpop.f32.mrf.mxu0
      %v2670 = vadd.f32 0.0, %v2669
      %v2671 = vpop.f32.mrf.mxu0
      %v2672 = vadd.f32 0.0, %v2671
      %2673 = vmatmul.bf16.gmra.mxu0 %v2062
      %v2674 = vpop.f32.mrf.mxu0
      %v2675 = vadd.f32 0.0, %v2674
      %v2676 = vpop.f32.mrf.mxu0
      %v2677 = vadd.f32 0.0, %v2676
      %2678 = vmatmul.bf16.gmra.mxu0 %v2065
      %v2679 = vpop.f32.mrf.mxu0
      %v2680 = vadd.f32 0.0, %v2679
      %v2681 = vpop.f32.mrf.mxu0
      %v2682 = vadd.f32 0.0, %v2681
      %2683 = vmatmul.bf16.gmra.mxu0 %v2068
      %v2684 = vpop.f32.mrf.mxu0
      %v2685 = vadd.f32 0.0, %v2684
      %v2686 = vpop.f32.mrf.mxu0
      %v2687 = vadd.f32 0.0, %v2686
      %2688 = vmatmul.bf16.gmra.mxu0 %v2071
      %v2689 = vpop.f32.mrf.mxu0
      %v2690 = vadd.f32 0.0, %v2689
      %v2691 = vpop.f32.mrf.mxu0
      %v2692 = vadd.f32 0.0, %v2691
      %2693 = vmatmul.bf16.gmra.mxu0 %v2074
      %v2694 = vpop.f32.mrf.mxu0
      %v2695 = vadd.f32 0.0, %v2694
      %v2696 = vpop.f32.mrf.mxu0
      %v2697 = vadd.f32 0.0, %v2696
      %2698 = vmatmul.bf16.gmra.mxu0 %v2077
      %v2699 = vpop.f32.mrf.mxu0
      %v2700 = vadd.f32 0.0, %v2699
      %v2701 = vpop.f32.mrf.mxu0
      %v2702 = vadd.f32 0.0, %v2701
      %2703 = vmatmul.bf16.gmra.mxu0 %v2080
      %v2704 = vpop.f32.mrf.mxu0
      %v2705 = vadd.f32 0.0, %v2704
      %v2706 = vpop.f32.mrf.mxu0
      %v2707 = vadd.f32 0.0, %v2706
      %2708 = vmatmul.bf16.gmra.mxu0 %v2083
      %v2709 = vpop.f32.mrf.mxu0
      %v2710 = vadd.f32 0.0, %v2709
      %v2711 = vpop.f32.mrf.mxu0
      %v2712 = vadd.f32 0.0, %v2711
      %2713 = vmatmul.bf16.gmra.mxu0 %v2086
      %v2714 = vpop.f32.mrf.mxu0
      %v2715 = vadd.f32 0.0, %v2714
      %v2716 = vpop.f32.mrf.mxu0
      %v2717 = vadd.f32 0.0, %v2716
      %2718 = vmatmul.bf16.gmra.mxu0 %v2089
      %v2719 = vpop.f32.mrf.mxu0
      %v2720 = vadd.f32 0.0, %v2719
      %v2721 = vpop.f32.mrf.mxu0
      %v2722 = vadd.f32 0.0, %v2721
      %2723 = vmatmul.bf16.gmra.mxu0 %v2092
      %v2724 = vpop.f32.mrf.mxu0
      %v2725 = vadd.f32 0.0, %v2724
      %v2726 = vpop.f32.mrf.mxu0
      %v2727 = vadd.f32 0.0, %v2726
      %2728 = vmatmul.bf16.gmra.mxu0 %v2095
      %v2729 = vpop.f32.mrf.mxu0
      %v2730 = vadd.f32 0.0, %v2729
      %v2731 = vpop.f32.mrf.mxu0
      %v2732 = vadd.f32 0.0, %v2731
      %2733 = vmatmul.bf16.gmra.mxu0 %v2098
      %v2734 = vpop.f32.mrf.mxu0
      %v2735 = vadd.f32 0.0, %v2734
      %v2736 = vpop.f32.mrf.mxu0
      %v2737 = vadd.f32 0.0, %v2736
      %2738 = vmatmul.bf16.gmra.mxu0 %v2101
      %v2739 = vpop.f32.mrf.mxu0
      %v2740 = vadd.f32 0.0, %v2739
      %v2741 = vpop.f32.mrf.mxu0
      %v2742 = vadd.f32 0.0, %v2741
      %2743 = vmatmul.bf16.gmra.mxu0 %v2104
      %v2744 = vpop.f32.mrf.mxu0
      %v2745 = vadd.f32 0.0, %v2744
      %v2746 = vpop.f32.mrf.mxu0
      %v2747 = vadd.f32 0.0, %v2746
      %2748 = vmatmul.bf16.gmra.mxu0 %v2107
      %v2749 = vpop.f32.mrf.mxu0
      %v2750 = vadd.f32 0.0, %v2749
      %v2751 = vpop.f32.mrf.mxu0
      %v2752 = vadd.f32 0.0, %v2751
      %2753 = vmatmul.bf16.gmra.mxu0 %v2110
      %v2754 = vpop.f32.mrf.mxu0
      %v2755 = vadd.f32 0.0, %v2754
      %v2756 = vpop.f32.mrf.mxu0
      %v2757 = vadd.f32 0.0, %v2756
      %2758 = vmatmul.bf16.gmra.mxu0 %v2113
      %v2759 = vpop.f32.mrf.mxu0
      %v2760 = vadd.f32 0.0, %v2759
      %v2761 = vpop.f32.mrf.mxu0
      %v2762 = vadd.f32 0.0, %v2761
      %2763 = vdwg.mxu0
      %v2764 = vadd.f32 %v562, %v2125
      %v2765 = vadd.f32 %v563, %v2127
      %v2766 = vadd.f32 %v564, %v2130
      %v2767 = vadd.f32 %v565, %v2132
      %v2768 = vadd.f32 %v566, %v2135
      %v2769 = vadd.f32 %v567, %v2137
      %v2770 = vadd.f32 %v568, %v2140
      %v2771 = vadd.f32 %v569, %v2142
      %v2772 = vadd.f32 %v570, %v2145
      %v2773 = vadd.f32 %v571, %v2147
      %v2774 = vadd.f32 %v572, %v2150
      %v2775 = vadd.f32 %v573, %v2152
      %v2776 = vadd.f32 %v574, %v2155
      %v2777 = vadd.f32 %v575, %v2157
      %v2778 = vadd.f32 %v576, %v2160
      %v2779 = vadd.f32 %v577, %v2162
      %v2780 = vadd.f32 %v578, %v2165
      %v2781 = vadd.f32 %v579, %v2167
      %v2782 = vadd.f32 %v580, %v2170
      %v2783 = vadd.f32 %v581, %v2172
      %v2784 = vadd.f32 %v582, %v2175
      %v2785 = vadd.f32 %v583, %v2177
      %v2786 = vadd.f32 %v584, %v2180
      %v2787 = vadd.f32 %v585, %v2182
      %v2788 = vadd.f32 %v586, %v2185
      %v2789 = vadd.f32 %v587, %v2187
      %v2790 = vadd.f32 %v588, %v2190
      %v2791 = vadd.f32 %v589, %v2192
      %v2792 = vadd.f32 %v590, %v2195
      %v2793 = vadd.f32 %v591, %v2197
      %v2794 = vadd.f32 %v592, %v2200
      %v2795 = vadd.f32 %v593, %v2202
      %v2796 = vadd.f32 %v594, %v2205
      %v2797 = vadd.f32 %v595, %v2207
      %v2798 = vadd.f32 %v596, %v2210
      %v2799 = vadd.f32 %v597, %v2212
      %v2800 = vadd.f32 %v598, %v2215
      %v2801 = vadd.f32 %v599, %v2217
      %v2802 = vadd.f32 %v600, %v2220
      %v2803 = vadd.f32 %v601, %v2222
      %v2804 = vadd.f32 %v602, %v2225
      %v2805 = vadd.f32 %v603, %v2227
      %v2806 = vadd.f32 %v604, %v2230
      %v2807 = vadd.f32 %v605, %v2232
      %v2808 = vadd.f32 %v606, %v2235
      %v2809 = vadd.f32 %v607, %v2237
      %v2810 = vadd.f32 %v608, %v2240
      %v2811 = vadd.f32 %v609, %v2242
      %v2812 = vadd.f32 %v610, %v2245
      %v2813 = vadd.f32 %v611, %v2247
      %v2814 = vadd.f32 %v612, %v2250
      %v2815 = vadd.f32 %v613, %v2252
      %v2816 = vadd.f32 %v614, %v2255
      %v2817 = vadd.f32 %v615, %v2257
      %v2818 = vadd.f32 %v616, %v2260
      %v2819 = vadd.f32 %v617, %v2262
      %v2820 = vadd.f32 %v618, %v2265
      %v2821 = vadd.f32 %v619, %v2267
      %v2822 = vadd.f32 %v620, %v2270
      %v2823 = vadd.f32 %v621, %v2272
      %v2824 = vadd.f32 %v622, %v2275
      %v2825 = vadd.f32 %v623, %v2277
      %v2826 = vadd.f32 %v624, %v2280
      %v2827 = vadd.f32 %v625, %v2282
      %v2828 = vadd.f32 %v626, %v2285
      %v2829 = vadd.f32 %v627, %v2287
      %v2830 = vadd.f32 %v628, %v2290
      %v2831 = vadd.f32 %v629, %v2292
      %v2832 = vadd.f32 %v630, %v2295
      %v2833 = vadd.f32 %v631, %v2297
      %v2834 = vadd.f32 %v632, %v2300
      %v2835 = vadd.f32 %v633, %v2302
      %v2836 = vadd.f32 %v634, %v2305
      %v2837 = vadd.f32 %v635, %v2307
      %v2838 = vadd.f32 %v636, %v2310
      %v2839 = vadd.f32 %v637, %v2312
      %v2840 = vadd.f32 %v638, %v2315
      %v2841 = vadd.f32 %v639, %v2317
      %v2842 = vadd.f32 %v640, %v2320
      %v2843 = vadd.f32 %v641, %v2322
      %v2844 = vadd.f32 %v642, %v2325
      %v2845 = vadd.f32 %v643, %v2327
      %v2846 = vadd.f32 %v644, %v2330
      %v2847 = vadd.f32 %v645, %v2332
      %v2848 = vadd.f32 %v646, %v2335
      %v2849 = vadd.f32 %v647, %v2337
      %v2850 = vadd.f32 %v648, %v2340
      %v2851 = vadd.f32 %v649, %v2342
      %v2852 = vadd.f32 %v650, %v2345
      %v2853 = vadd.f32 %v651, %v2347
      %v2854 = vadd.f32 %v652, %v2350
      %v2855 = vadd.f32 %v653, %v2352
      %v2856 = vadd.f32 %v654, %v2355
      %v2857 = vadd.f32 %v655, %v2357
      %v2858 = vadd.f32 %v656, %v2360
      %v2859 = vadd.f32 %v657, %v2362
      %v2860 = vadd.f32 %v658, %v2365
      %v2861 = vadd.f32 %v659, %v2367
      %v2862 = vadd.f32 %v660, %v2370
      %v2863 = vadd.f32 %v661, %v2372
      %v2864 = vadd.f32 %v662, %v2375
      %v2865 = vadd.f32 %v663, %v2377
      %v2866 = vadd.f32 %v664, %v2380
      %v2867 = vadd.f32 %v665, %v2382
      %v2868 = vadd.f32 %v666, %v2385
      %v2869 = vadd.f32 %v667, %v2387
      %v2870 = vadd.f32 %v668, %v2390
      %v2871 = vadd.f32 %v669, %v2392
      %v2872 = vadd.f32 %v670, %v2395
      %v2873 = vadd.f32 %v671, %v2397
      %v2874 = vadd.f32 %v672, %v2400
      %v2875 = vadd.f32 %v673, %v2402
      %v2876 = vadd.f32 %v674, %v2405
      %v2877 = vadd.f32 %v675, %v2407
      %v2878 = vadd.f32 %v676, %v2410
      %v2879 = vadd.f32 %v677, %v2412
      %v2880 = vadd.f32 %v678, %v2415
      %v2881 = vadd.f32 %v679, %v2417
      %v2882 = vadd.f32 %v680, %v2420
      %v2883 = vadd.f32 %v681, %v2422
      %v2884 = vadd.f32 %v682, %v2425
      %v2885 = vadd.f32 %v683, %v2427
      %v2886 = vadd.f32 %v684, %v2430
      %v2887 = vadd.f32 %v685, %v2432
      %v2888 = vadd.f32 %v686, %v2435
      %v2889 = vadd.f32 %v687, %v2437
      %v2890 = vadd.f32 %v688, %v2440
      %v2891 = vadd.f32 %v689, %v2442
      %v2892 = vadd.f32 %v690, %v2445
      %v2893 = vadd.f32 %v691, %v2447
      %v2894 = vadd.f32 %v692, %v2450
      %v2895 = vadd.f32 %v693, %v2452
      %v2896 = vadd.f32 %v694, %v2455
      %v2897 = vadd.f32 %v695, %v2457
      %v2898 = vadd.f32 %v696, %v2460
      %v2899 = vadd.f32 %v697, %v2462
      %v2900 = vadd.f32 %v698, %v2465
      %v2901 = vadd.f32 %v699, %v2467
      %v2902 = vadd.f32 %v700, %v2470
      %v2903 = vadd.f32 %v701, %v2472
      %v2904 = vadd.f32 %v702, %v2475
      %v2905 = vadd.f32 %v703, %v2477
      %v2906 = vadd.f32 %v704, %v2480
      %v2907 = vadd.f32 %v705, %v2482
      %v2908 = vadd.f32 %v706, %v2485
      %v2909 = vadd.f32 %v707, %v2487
      %v2910 = vadd.f32 %v708, %v2490
      %v2911 = vadd.f32 %v709, %v2492
      %v2912 = vadd.f32 %v710, %v2495
      %v2913 = vadd.f32 %v711, %v2497
      %v2914 = vadd.f32 %v712, %v2500
      %v2915 = vadd.f32 %v713, %v2502
      %v2916 = vadd.f32 %v714, %v2505
      %v2917 = vadd.f32 %v715, %v2507
      %v2918 = vadd.f32 %v716, %v2510
      %v2919 = vadd.f32 %v717, %v2512
      %v2920 = vadd.f32 %v718, %v2515
      %v2921 = vadd.f32 %v719, %v2517
      %v2922 = vadd.f32 %v720, %v2520
      %v2923 = vadd.f32 %v721, %v2522
      %v2924 = vadd.f32 %v722, %v2525
      %v2925 = vadd.f32 %v723, %v2527
      %v2926 = vadd.f32 %v724, %v2530
      %v2927 = vadd.f32 %v725, %v2532
      %v2928 = vadd.f32 %v726, %v2535
      %v2929 = vadd.f32 %v727, %v2537
      %v2930 = vadd.f32 %v728, %v2540
      %v2931 = vadd.f32 %v729, %v2542
      %v2932 = vadd.f32 %v730, %v2545
      %v2933 = vadd.f32 %v731, %v2547
      %v2934 = vadd.f32 %v732, %v2550
      %v2935 = vadd.f32 %v733, %v2552
      %v2936 = vadd.f32 %v734, %v2555
      %v2937 = vadd.f32 %v735, %v2557
      %v2938 = vadd.f32 %v736, %v2560
      %v2939 = vadd.f32 %v737, %v2562
      %v2940 = vadd.f32 %v738, %v2565
      %v2941 = vadd.f32 %v739, %v2567
      %v2942 = vadd.f32 %v740, %v2570
      %v2943 = vadd.f32 %v741, %v2572
      %v2944 = vadd.f32 %v742, %v2575
      %v2945 = vadd.f32 %v743, %v2577
      %v2946 = vadd.f32 %v744, %v2580
      %v2947 = vadd.f32 %v745, %v2582
      %v2948 = vadd.f32 %v746, %v2585
      %v2949 = vadd.f32 %v747, %v2587
      %v2950 = vadd.f32 %v748, %v2590
      %v2951 = vadd.f32 %v749, %v2592
      %v2952 = vadd.f32 %v750, %v2595
      %v2953 = vadd.f32 %v751, %v2597
      %v2954 = vadd.f32 %v752, %v2600
      %v2955 = vadd.f32 %v753, %v2602
      %v2956 = vadd.f32 %v754, %v2605
      %v2957 = vadd.f32 %v755, %v2607
      %v2958 = vadd.f32 %v756, %v2610
      %v2959 = vadd.f32 %v757, %v2612
      %v2960 = vadd.f32 %v758, %v2615
      %v2961 = vadd.f32 %v759, %v2617
      %v2962 = vadd.f32 %v760, %v2620
      %v2963 = vadd.f32 %v761, %v2622
      %v2964 = vadd.f32 %v762, %v2625
      %v2965 = vadd.f32 %v763, %v2627
      %v2966 = vadd.f32 %v764, %v2630
      %v2967 = vadd.f32 %v765, %v2632
      %v2968 = vadd.f32 %v766, %v2635
      %v2969 = vadd.f32 %v767, %v2637
      %v2970 = vadd.f32 %v768, %v2640
      %v2971 = vadd.f32 %v769, %v2642
      %v2972 = vadd.f32 %v770, %v2645
      %v2973 = vadd.f32 %v771, %v2647
      %v2974 = vadd.f32 %v772, %v2650
      %v2975 = vadd.f32 %v773, %v2652
      %v2976 = vadd.f32 %v774, %v2655
      %v2977 = vadd.f32 %v775, %v2657
      %v2978 = vadd.f32 %v776, %v2660
      %v2979 = vadd.f32 %v777, %v2662
      %v2980 = vadd.f32 %v778, %v2665
      %v2981 = vadd.f32 %v779, %v2667
      %v2982 = vadd.f32 %v780, %v2670
      %v2983 = vadd.f32 %v781, %v2672
      %v2984 = vadd.f32 %v782, %v2675
      %v2985 = vadd.f32 %v783, %v2677
      %v2986 = vadd.f32 %v784, %v2680
      %v2987 = vadd.f32 %v785, %v2682
      %v2988 = vadd.f32 %v786, %v2685
      %v2989 = vadd.f32 %v787, %v2687
      %v2990 = vadd.f32 %v788, %v2690
      %v2991 = vadd.f32 %v789, %v2692
      %v2992 = vadd.f32 %v790, %v2695
      %v2993 = vadd.f32 %v791, %v2697
      %v2994 = vadd.f32 %v792, %v2700
      %v2995 = vadd.f32 %v793, %v2702
      %v2996 = vadd.f32 %v794, %v2705
      %v2997 = vadd.f32 %v795, %v2707
      %v2998 = vadd.f32 %v796, %v2710
      %v2999 = vadd.f32 %v797, %v2712
      %v3000 = vadd.f32 %v798, %v2715
      %v3001 = vadd.f32 %v799, %v2717
      %v3002 = vadd.f32 %v800, %v2720
      %v3003 = vadd.f32 %v801, %v2722
      %v3004 = vadd.f32 %v802, %v2725
      %v3005 = vadd.f32 %v803, %v2727
      %v3006 = vadd.f32 %v804, %v2730
      %v3007 = vadd.f32 %v805, %v2732
      %v3008 = vadd.f32 %v806, %v2735
      %v3009 = vadd.f32 %v807, %v2737
      %v3010 = vadd.f32 %v808, %v2740
      %v3011 = vadd.f32 %v809, %v2742
      %v3012 = vadd.f32 %v810, %v2745
      %v3013 = vadd.f32 %v811, %v2747
      %v3014 = vadd.f32 %v812, %v2750
      %v3015 = vadd.f32 %v813, %v2752
      %v3016 = vadd.f32 %v814, %v2755
      %v3017 = vadd.f32 %v815, %v2757
      %v3018 = vadd.f32 %v816, %v2760
      %v3019 = vadd.f32 %v817, %v2762
      %vm3020 = vcmask 130048
      %3021 = vst.msk [vmem:[#allocation2] sm:$0xff] %vm3020, %v2764
      %3022 = vst.msk [vmem:[#allocation2 + $0x8] sm:$0xff] %vm3020, %v2765
      %3023 = vst.msk [vmem:[#allocation2 + $0x10] sm:$0xff] %vm3020, %v2766
      %3024 = vst.msk [vmem:[#allocation2 + $0x18] sm:$0xff] %vm3020, %v2767
      %3025 = vst.msk [vmem:[#allocation2 + $0x20] sm:$0xff] %vm3020, %v2768
      %3026 = vst.msk [vmem:[#allocation2 + $0x28] sm:$0xff] %vm3020, %v2769
      %3027 = vst.msk [vmem:[#allocation2 + $0x30] sm:$0xff] %vm3020, %v2770
      %3028 = vst.msk [vmem:[#allocation2 + $0x38] sm:$0xff] %vm3020, %v2771
      %3029 = vst.msk [vmem:[#allocation2 + $0x40] sm:$0xff] %vm3020, %v2772
      %3030 = vst.msk [vmem:[#allocation2 + $0x48] sm:$0xff] %vm3020, %v2773
      %3031 = vst.msk [vmem:[#allocation2 + $0x50] sm:$0xff] %vm3020, %v2774
      %3032 = vst.msk [vmem:[#allocation2 + $0x58] sm:$0xff] %vm3020, %v2775
      %3033 = vst.msk [vmem:[#allocation2 + $0x60] sm:$0xff] %vm3020, %v2776
      %3034 = vst.msk [vmem:[#allocation2 + $0x68] sm:$0xff] %vm3020, %v2777
      %3035 = vst.msk [vmem:[#allocation2 + $0x70] sm:$0xff] %vm3020, %v2778
      %3036 = vst.msk [vmem:[#allocation2 + $0x78] sm:$0xff] %vm3020, %v2779
      %3037 = vst.msk [vmem:[#allocation2 + $0x80] sm:$0xff] %vm3020, %v2780
      %3038 = vst.msk [vmem:[#allocation2 + $0x88] sm:$0xff] %vm3020, %v2781
      %3039 = vst.msk [vmem:[#allocation2 + $0x90] sm:$0xff] %vm3020, %v2782
      %3040 = vst.msk [vmem:[#allocation2 + $0x98] sm:$0xff] %vm3020, %v2783
      %3041 = vst.msk [vmem:[#allocation2 + $0xa0] sm:$0xff] %vm3020, %v2784
      %3042 = vst.msk [vmem:[#allocation2 + $0xa8] sm:$0xff] %vm3020, %v2785
      %3043 = vst.msk [vmem:[#allocation2 + $0xb0] sm:$0xff] %vm3020, %v2786
      %3044 = vst.msk [vmem:[#allocation2 + $0xb8] sm:$0xff] %vm3020, %v2787
      %3045 = vst.msk [vmem:[#allocation2 + $0xc0] sm:$0xff] %vm3020, %v2788
      %3046 = vst.msk [vmem:[#allocation2 + $0xc8] sm:$0xff] %vm3020, %v2789
      %3047 = vst.msk [vmem:[#allocation2 + $0xd0] sm:$0xff] %vm3020, %v2790
      %3048 = vst.msk [vmem:[#allocation2 + $0xd8] sm:$0xff] %vm3020, %v2791
      %3049 = vst.msk [vmem:[#allocation2 + $0xe0] sm:$0xff] %vm3020, %v2792
      %3050 = vst.msk [vmem:[#allocation2 + $0xe8] sm:$0xff] %vm3020, %v2793
      %3051 = vst.msk [vmem:[#allocation2 + $0xf0] sm:$0xff] %vm3020, %v2794
      %3052 = vst.msk [vmem:[#allocation2 + $0xf8] sm:$0xff] %vm3020, %v2795
      %3053 = vst.msk [vmem:[#allocation2 + $0x100] sm:$0xff] %vm3020, %v2796
      %3054 = vst.msk [vmem:[#allocation2 + $0x108] sm:$0xff] %vm3020, %v2797
      %3055 = vst.msk [vmem:[#allocation2 + $0x110] sm:$0xff] %vm3020, %v2798
      %3056 = vst.msk [vmem:[#allocation2 + $0x118] sm:$0xff] %vm3020, %v2799
      %3057 = vst.msk [vmem:[#allocation2 + $0x120] sm:$0xff] %vm3020, %v2800
      %3058 = vst.msk [vmem:[#allocation2 + $0x128] sm:$0xff] %vm3020, %v2801
      %3059 = vst.msk [vmem:[#allocation2 + $0x130] sm:$0xff] %vm3020, %v2802
      %3060 = vst.msk [vmem:[#allocation2 + $0x138] sm:$0xff] %vm3020, %v2803
      %3061 = vst.msk [vmem:[#allocation2 + $0x140] sm:$0xff] %vm3020, %v2804
      %3062 = vst.msk [vmem:[#allocation2 + $0x148] sm:$0xff] %vm3020, %v2805
      %3063 = vst.msk [vmem:[#allocation2 + $0x150] sm:$0xff] %vm3020, %v2806
      %3064 = vst.msk [vmem:[#allocation2 + $0x158] sm:$0xff] %vm3020, %v2807
      %3065 = vst.msk [vmem:[#allocation2 + $0x160] sm:$0xff] %vm3020, %v2808
      %3066 = vst.msk [vmem:[#allocation2 + $0x168] sm:$0xff] %vm3020, %v2809
      %3067 = vst.msk [vmem:[#allocation2 + $0x170] sm:$0xff] %vm3020, %v2810
      %3068 = vst.msk [vmem:[#allocation2 + $0x178] sm:$0xff] %vm3020, %v2811
      %3069 = vst.msk [vmem:[#allocation2 + $0x180] sm:$0xff] %vm3020, %v2812
      %3070 = vst.msk [vmem:[#allocation2 + $0x188] sm:$0xff] %vm3020, %v2813
      %3071 = vst.msk [vmem:[#allocation2 + $0x190] sm:$0xff] %vm3020, %v2814
      %3072 = vst.msk [vmem:[#allocation2 + $0x198] sm:$0xff] %vm3020, %v2815
      %3073 = vst.msk [vmem:[#allocation2 + $0x1a0] sm:$0xff] %vm3020, %v2816
      %3074 = vst.msk [vmem:[#allocation2 + $0x1a8] sm:$0xff] %vm3020, %v2817
      %3075 = vst.msk [vmem:[#allocation2 + $0x1b0] sm:$0xff] %vm3020, %v2818
      %3076 = vst.msk [vmem:[#allocation2 + $0x1b8] sm:$0xff] %vm3020, %v2819
      %3077 = vst.msk [vmem:[#allocation2 + $0x1c0] sm:$0xff] %vm3020, %v2820
      %3078 = vst.msk [vmem:[#allocation2 + $0x1c8] sm:$0xff] %vm3020, %v2821
      %3079 = vst.msk [vmem:[#allocation2 + $0x1d0] sm:$0xff] %vm3020, %v2822
      %3080 = vst.msk [vmem:[#allocation2 + $0x1d8] sm:$0xff] %vm3020, %v2823
      %3081 = vst.msk [vmem:[#allocation2 + $0x1e0] sm:$0xff] %vm3020, %v2824
      %3082 = vst.msk [vmem:[#allocation2 + $0x1e8] sm:$0xff] %vm3020, %v2825
      %3083 = vst.msk [vmem:[#allocation2 + $0x1f0] sm:$0xff] %vm3020, %v2826
      %3084 = vst.msk [vmem:[#allocation2 + $0x1f8] sm:$0xff] %vm3020, %v2827
      %3085 = vst.msk [vmem:[#allocation2 + $0x200] sm:$0xff] %vm3020, %v2828
      %3086 = vst.msk [vmem:[#allocation2 + $0x208] sm:$0xff] %vm3020, %v2829
      %3087 = vst.msk [vmem:[#allocation2 + $0x210] sm:$0xff] %vm3020, %v2830
      %3088 = vst.msk [vmem:[#allocation2 + $0x218] sm:$0xff] %vm3020, %v2831
      %3089 = vst.msk [vmem:[#allocation2 + $0x220] sm:$0xff] %vm3020, %v2832
      %3090 = vst.msk [vmem:[#allocation2 + $0x228] sm:$0xff] %vm3020, %v2833
      %3091 = vst.msk [vmem:[#allocation2 + $0x230] sm:$0xff] %vm3020, %v2834
      %3092 = vst.msk [vmem:[#allocation2 + $0x238] sm:$0xff] %vm3020, %v2835
      %3093 = vst.msk [vmem:[#allocation2 + $0x240] sm:$0xff] %vm3020, %v2836
      %3094 = vst.msk [vmem:[#allocation2 + $0x248] sm:$0xff] %vm3020, %v2837
      %3095 = vst.msk [vmem:[#allocation2 + $0x250] sm:$0xff] %vm3020, %v2838
      %3096 = vst.msk [vmem:[#allocation2 + $0x258] sm:$0xff] %vm3020, %v2839
      %3097 = vst.msk [vmem:[#allocation2 + $0x260] sm:$0xff] %vm3020, %v2840
      %3098 = vst.msk [vmem:[#allocation2 + $0x268] sm:$0xff] %vm3020, %v2841
      %3099 = vst.msk [vmem:[#allocation2 + $0x270] sm:$0xff] %vm3020, %v2842
      %3100 = vst.msk [vmem:[#allocation2 + $0x278] sm:$0xff] %vm3020, %v2843
      %3101 = vst.msk [vmem:[#allocation2 + $0x280] sm:$0xff] %vm3020, %v2844
      %3102 = vst.msk [vmem:[#allocation2 + $0x288] sm:$0xff] %vm3020, %v2845
      %3103 = vst.msk [vmem:[#allocation2 + $0x290] sm:$0xff] %vm3020, %v2846
      %3104 = vst.msk [vmem:[#allocation2 + $0x298] sm:$0xff] %vm3020, %v2847
      %3105 = vst.msk [vmem:[#allocation2 + $0x2a0] sm:$0xff] %vm3020, %v2848
      %3106 = vst.msk [vmem:[#allocation2 + $0x2a8] sm:$0xff] %vm3020, %v2849
      %3107 = vst.msk [vmem:[#allocation2 + $0x2b0] sm:$0xff] %vm3020, %v2850
      %3108 = vst.msk [vmem:[#allocation2 + $0x2b8] sm:$0xff] %vm3020, %v2851
      %3109 = vst.msk [vmem:[#allocation2 + $0x2c0] sm:$0xff] %vm3020, %v2852
      %3110 = vst.msk [vmem:[#allocation2 + $0x2c8] sm:$0xff] %vm3020, %v2853
      %3111 = vst.msk [vmem:[#allocation2 + $0x2d0] sm:$0xff] %vm3020, %v2854
      %3112 = vst.msk [vmem:[#allocation2 + $0x2d8] sm:$0xff] %vm3020, %v2855
      %3113 = vst.msk [vmem:[#allocation2 + $0x2e0] sm:$0xff] %vm3020, %v2856
      %3114 = vst.msk [vmem:[#allocation2 + $0x2e8] sm:$0xff] %vm3020, %v2857
      %3115 = vst.msk [vmem:[#allocation2 + $0x2f0] sm:$0xff] %vm3020, %v2858
      %3116 = vst.msk [vmem:[#allocation2 + $0x2f8] sm:$0xff] %vm3020, %v2859
      %3117 = vst.msk [vmem:[#allocation2 + $0x300] sm:$0xff] %vm3020, %v2860
      %3118 = vst.msk [vmem:[#allocation2 + $0x308] sm:$0xff] %vm3020, %v2861
      %3119 = vst.msk [vmem:[#allocation2 + $0x310] sm:$0xff] %vm3020, %v2862
      %3120 = vst.msk [vmem:[#allocation2 + $0x318] sm:$0xff] %vm3020, %v2863
      %3121 = vst.msk [vmem:[#allocation2 + $0x320] sm:$0xff] %vm3020, %v2864
      %3122 = vst.msk [vmem:[#allocation2 + $0x328] sm:$0xff] %vm3020, %v2865
      %3123 = vst.msk [vmem:[#allocation2 + $0x330] sm:$0xff] %vm3020, %v2866
      %3124 = vst.msk [vmem:[#allocation2 + $0x338] sm:$0xff] %vm3020, %v2867
      %3125 = vst.msk [vmem:[#allocation2 + $0x340] sm:$0xff] %vm3020, %v2868
      %3126 = vst.msk [vmem:[#allocation2 + $0x348] sm:$0xff] %vm3020, %v2869
      %3127 = vst.msk [vmem:[#allocation2 + $0x350] sm:$0xff] %vm3020, %v2870
      %3128 = vst.msk [vmem:[#allocation2 + $0x358] sm:$0xff] %vm3020, %v2871
      %3129 = vst.msk [vmem:[#allocation2 + $0x360] sm:$0xff] %vm3020, %v2872
      %3130 = vst.msk [vmem:[#allocation2 + $0x368] sm:$0xff] %vm3020, %v2873
      %3131 = vst.msk [vmem:[#allocation2 + $0x370] sm:$0xff] %vm3020, %v2874
      %3132 = vst.msk [vmem:[#allocation2 + $0x378] sm:$0xff] %vm3020, %v2875
      %3133 = vst.msk [vmem:[#allocation2 + $0x380] sm:$0xff] %vm3020, %v2876
      %3134 = vst.msk [vmem:[#allocation2 + $0x388] sm:$0xff] %vm3020, %v2877
      %3135 = vst.msk [vmem:[#allocation2 + $0x390] sm:$0xff] %vm3020, %v2878
      %3136 = vst.msk [vmem:[#allocation2 + $0x398] sm:$0xff] %vm3020, %v2879
      %3137 = vst.msk [vmem:[#allocation2 + $0x3a0] sm:$0xff] %vm3020, %v2880
      %3138 = vst.msk [vmem:[#allocation2 + $0x3a8] sm:$0xff] %vm3020, %v2881
      %3139 = vst.msk [vmem:[#allocation2 + $0x3b0] sm:$0xff] %vm3020, %v2882
      %3140 = vst.msk [vmem:[#allocation2 + $0x3b8] sm:$0xff] %vm3020, %v2883
      %3141 = vst.msk [vmem:[#allocation2 + $0x3c0] sm:$0xff] %vm3020, %v2884
      %3142 = vst.msk [vmem:[#allocation2 + $0x3c8] sm:$0xff] %vm3020, %v2885
      %3143 = vst.msk [vmem:[#allocation2 + $0x3d0] sm:$0xff] %vm3020, %v2886
      %3144 = vst.msk [vmem:[#allocation2 + $0x3d8] sm:$0xff] %vm3020, %v2887
      %3145 = vst.msk [vmem:[#allocation2 + $0x3e0] sm:$0xff] %vm3020, %v2888
      %3146 = vst.msk [vmem:[#allocation2 + $0x3e8] sm:$0xff] %vm3020, %v2889
      %3147 = vst.msk [vmem:[#allocation2 + $0x3f0] sm:$0xff] %vm3020, %v2890
      %3148 = vst.msk [vmem:[#allocation2 + $0x3f8] sm:$0xff] %vm3020, %v2891
      %3149 = vst.msk [vmem:[#allocation2 + $0x400] sm:$0xff] %vm3020, %v2892
      %3150 = vst.msk [vmem:[#allocation2 + $0x408] sm:$0xff] %vm3020, %v2893
      %3151 = vst.msk [vmem:[#allocation2 + $0x410] sm:$0xff] %vm3020, %v2894
      %3152 = vst.msk [vmem:[#allocation2 + $0x418] sm:$0xff] %vm3020, %v2895
      %3153 = vst.msk [vmem:[#allocation2 + $0x420] sm:$0xff] %vm3020, %v2896
      %3154 = vst.msk [vmem:[#allocation2 + $0x428] sm:$0xff] %vm3020, %v2897
      %3155 = vst.msk [vmem:[#allocation2 + $0x430] sm:$0xff] %vm3020, %v2898
      %3156 = vst.msk [vmem:[#allocation2 + $0x438] sm:$0xff] %vm3020, %v2899
      %3157 = vst.msk [vmem:[#allocation2 + $0x440] sm:$0xff] %vm3020, %v2900
      %3158 = vst.msk [vmem:[#allocation2 + $0x448] sm:$0xff] %vm3020, %v2901
      %3159 = vst.msk [vmem:[#allocation2 + $0x450] sm:$0xff] %vm3020, %v2902
      %3160 = vst.msk [vmem:[#allocation2 + $0x458] sm:$0xff] %vm3020, %v2903
      %3161 = vst.msk [vmem:[#allocation2 + $0x460] sm:$0xff] %vm3020, %v2904
      %3162 = vst.msk [vmem:[#allocation2 + $0x468] sm:$0xff] %vm3020, %v2905
      %3163 = vst.msk [vmem:[#allocation2 + $0x470] sm:$0xff] %vm3020, %v2906
      %3164 = vst.msk [vmem:[#allocation2 + $0x478] sm:$0xff] %vm3020, %v2907
      %3165 = vst.msk [vmem:[#allocation2 + $0x480] sm:$0xff] %vm3020, %v2908
      %3166 = vst.msk [vmem:[#allocation2 + $0x488] sm:$0xff] %vm3020, %v2909
      %3167 = vst.msk [vmem:[#allocation2 + $0x490] sm:$0xff] %vm3020, %v2910
      %3168 = vst.msk [vmem:[#allocation2 + $0x498] sm:$0xff] %vm3020, %v2911
      %3169 = vst.msk [vmem:[#allocation2 + $0x4a0] sm:$0xff] %vm3020, %v2912
      %3170 = vst.msk [vmem:[#allocation2 + $0x4a8] sm:$0xff] %vm3020, %v2913
      %3171 = vst.msk [vmem:[#allocation2 + $0x4b0] sm:$0xff] %vm3020, %v2914
      %3172 = vst.msk [vmem:[#allocation2 + $0x4b8] sm:$0xff] %vm3020, %v2915
      %3173 = vst.msk [vmem:[#allocation2 + $0x4c0] sm:$0xff] %vm3020, %v2916
      %3174 = vst.msk [vmem:[#allocation2 + $0x4c8] sm:$0xff] %vm3020, %v2917
      %3175 = vst.msk [vmem:[#allocation2 + $0x4d0] sm:$0xff] %vm3020, %v2918
      %3176 = vst.msk [vmem:[#allocation2 + $0x4d8] sm:$0xff] %vm3020, %v2919
      %3177 = vst.msk [vmem:[#allocation2 + $0x4e0] sm:$0xff] %vm3020, %v2920
      %3178 = vst.msk [vmem:[#allocation2 + $0x4e8] sm:$0xff] %vm3020, %v2921
      %3179 = vst.msk [vmem:[#allocation2 + $0x4f0] sm:$0xff] %vm3020, %v2922
      %3180 = vst.msk [vmem:[#allocation2 + $0x4f8] sm:$0xff] %vm3020, %v2923
      %3181 = vst.msk [vmem:[#allocation2 + $0x500] sm:$0xff] %vm3020, %v2924
      %3182 = vst.msk [vmem:[#allocation2 + $0x508] sm:$0xff] %vm3020, %v2925
      %3183 = vst.msk [vmem:[#allocation2 + $0x510] sm:$0xff] %vm3020, %v2926
      %3184 = vst.msk [vmem:[#allocation2 + $0x518] sm:$0xff] %vm3020, %v2927
      %3185 = vst.msk [vmem:[#allocation2 + $0x520] sm:$0xff] %vm3020, %v2928
      %3186 = vst.msk [vmem:[#allocation2 + $0x528] sm:$0xff] %vm3020, %v2929
      %3187 = vst.msk [vmem:[#allocation2 + $0x530] sm:$0xff] %vm3020, %v2930
      %3188 = vst.msk [vmem:[#allocation2 + $0x538] sm:$0xff] %vm3020, %v2931
      %3189 = vst.msk [vmem:[#allocation2 + $0x540] sm:$0xff] %vm3020, %v2932
      %3190 = vst.msk [vmem:[#allocation2 + $0x548] sm:$0xff] %vm3020, %v2933
      %3191 = vst.msk [vmem:[#allocation2 + $0x550] sm:$0xff] %vm3020, %v2934
      %3192 = vst.msk [vmem:[#allocation2 + $0x558] sm:$0xff] %vm3020, %v2935
      %3193 = vst.msk [vmem:[#allocation2 + $0x560] sm:$0xff] %vm3020, %v2936
      %3194 = vst.msk [vmem:[#allocation2 + $0x568] sm:$0xff] %vm3020, %v2937
      %3195 = vst.msk [vmem:[#allocation2 + $0x570] sm:$0xff] %vm3020, %v2938
      %3196 = vst.msk [vmem:[#allocation2 + $0x578] sm:$0xff] %vm3020, %v2939
      %3197 = vst.msk [vmem:[#allocation2 + $0x580] sm:$0xff] %vm3020, %v2940
      %3198 = vst.msk [vmem:[#allocation2 + $0x588] sm:$0xff] %vm3020, %v2941
      %3199 = vst.msk [vmem:[#allocation2 + $0x590] sm:$0xff] %vm3020, %v2942
      %3200 = vst.msk [vmem:[#allocation2 + $0x598] sm:$0xff] %vm3020, %v2943
      %3201 = vst.msk [vmem:[#allocation2 + $0x5a0] sm:$0xff] %vm3020, %v2944
      %3202 = vst.msk [vmem:[#allocation2 + $0x5a8] sm:$0xff] %vm3020, %v2945
      %3203 = vst.msk [vmem:[#allocation2 + $0x5b0] sm:$0xff] %vm3020, %v2946
      %3204 = vst.msk [vmem:[#allocation2 + $0x5b8] sm:$0xff] %vm3020, %v2947
      %3205 = vst.msk [vmem:[#allocation2 + $0x5c0] sm:$0xff] %vm3020, %v2948
      %3206 = vst.msk [vmem:[#allocation2 + $0x5c8] sm:$0xff] %vm3020, %v2949
      %3207 = vst.msk [vmem:[#allocation2 + $0x5d0] sm:$0xff] %vm3020, %v2950
      %3208 = vst.msk [vmem:[#allocation2 + $0x5d8] sm:$0xff] %vm3020, %v2951
      %3209 = vst.msk [vmem:[#allocation2 + $0x5e0] sm:$0xff] %vm3020, %v2952
      %3210 = vst.msk [vmem:[#allocation2 + $0x5e8] sm:$0xff] %vm3020, %v2953
      %3211 = vst.msk [vmem:[#allocation2 + $0x5f0] sm:$0xff] %vm3020, %v2954
      %3212 = vst.msk [vmem:[#allocation2 + $0x5f8] sm:$0xff] %vm3020, %v2955
      %3213 = vst.msk [vmem:[#allocation2 + $0x600] sm:$0xff] %vm3020, %v2956
      %3214 = vst.msk [vmem:[#allocation2 + $0x608] sm:$0xff] %vm3020, %v2957
      %3215 = vst.msk [vmem:[#allocation2 + $0x610] sm:$0xff] %vm3020, %v2958
      %3216 = vst.msk [vmem:[#allocation2 + $0x618] sm:$0xff] %vm3020, %v2959
      %3217 = vst.msk [vmem:[#allocation2 + $0x620] sm:$0xff] %vm3020, %v2960
      %3218 = vst.msk [vmem:[#allocation2 + $0x628] sm:$0xff] %vm3020, %v2961
      %3219 = vst.msk [vmem:[#allocation2 + $0x630] sm:$0xff] %vm3020, %v2962
      %3220 = vst.msk [vmem:[#allocation2 + $0x638] sm:$0xff] %vm3020, %v2963
      %3221 = vst.msk [vmem:[#allocation2 + $0x640] sm:$0xff] %vm3020, %v2964
      %3222 = vst.msk [vmem:[#allocation2 + $0x648] sm:$0xff] %vm3020, %v2965
      %3223 = vst.msk [vmem:[#allocation2 + $0x650] sm:$0xff] %vm3020, %v2966
      %3224 = vst.msk [vmem:[#allocation2 + $0x658] sm:$0xff] %vm3020, %v2967
      %3225 = vst.msk [vmem:[#allocation2 + $0x660] sm:$0xff] %vm3020, %v2968
      %3226 = vst.msk [vmem:[#allocation2 + $0x668] sm:$0xff] %vm3020, %v2969
      %3227 = vst.msk [vmem:[#allocation2 + $0x670] sm:$0xff] %vm3020, %v2970
      %3228 = vst.msk [vmem:[#allocation2 + $0x678] sm:$0xff] %vm3020, %v2971
      %3229 = vst.msk [vmem:[#allocation2 + $0x680] sm:$0xff] %vm3020, %v2972
      %3230 = vst.msk [vmem:[#allocation2 + $0x688] sm:$0xff] %vm3020, %v2973
      %3231 = vst.msk [vmem:[#allocation2 + $0x690] sm:$0xff] %vm3020, %v2974
      %3232 = vst.msk [vmem:[#allocation2 + $0x698] sm:$0xff] %vm3020, %v2975
      %3233 = vst.msk [vmem:[#allocation2 + $0x6a0] sm:$0xff] %vm3020, %v2976
      %3234 = vst.msk [vmem:[#allocation2 + $0x6a8] sm:$0xff] %vm3020, %v2977
      %3235 = vst.msk [vmem:[#allocation2 + $0x6b0] sm:$0xff] %vm3020, %v2978
      %3236 = vst.msk [vmem:[#allocation2 + $0x6b8] sm:$0xff] %vm3020, %v2979
      %3237 = vst.msk [vmem:[#allocation2 + $0x6c0] sm:$0xff] %vm3020, %v2980
      %3238 = vst.msk [vmem:[#allocation2 + $0x6c8] sm:$0xff] %vm3020, %v2981
      %3239 = vst.msk [vmem:[#allocation2 + $0x6d0] sm:$0xff] %vm3020, %v2982
      %3240 = vst.msk [vmem:[#allocation2 + $0x6d8] sm:$0xff] %vm3020, %v2983
      %3241 = vst.msk [vmem:[#allocation2 + $0x6e0] sm:$0xff] %vm3020, %v2984
      %3242 = vst.msk [vmem:[#allocation2 + $0x6e8] sm:$0xff] %vm3020, %v2985
      %3243 = vst.msk [vmem:[#allocation2 + $0x6f0] sm:$0xff] %vm3020, %v2986
      %3244 = vst.msk [vmem:[#allocation2 + $0x6f8] sm:$0xff] %vm3020, %v2987
      %3245 = vst.msk [vmem:[#allocation2 + $0x700] sm:$0xff] %vm3020, %v2988
      %3246 = vst.msk [vmem:[#allocation2 + $0x708] sm:$0xff] %vm3020, %v2989
      %3247 = vst.msk [vmem:[#allocation2 + $0x710] sm:$0xff] %vm3020, %v2990
      %3248 = vst.msk [vmem:[#allocation2 + $0x718] sm:$0xff] %vm3020, %v2991
      %3249 = vst.msk [vmem:[#allocation2 + $0x720] sm:$0xff] %vm3020, %v2992
      %3250 = vst.msk [vmem:[#allocation2 + $0x728] sm:$0xff] %vm3020, %v2993
      %3251 = vst.msk [vmem:[#allocation2 + $0x730] sm:$0xff] %vm3020, %v2994
      %3252 = vst.msk [vmem:[#allocation2 + $0x738] sm:$0xff] %vm3020, %v2995
      %3253 = vst.msk [vmem:[#allocation2 + $0x740] sm:$0xff] %vm3020, %v2996
      %3254 = vst.msk [vmem:[#allocation2 + $0x748] sm:$0xff] %vm3020, %v2997
      %3255 = vst.msk [vmem:[#allocation2 + $0x750] sm:$0xff] %vm3020, %v2998
      %3256 = vst.msk [vmem:[#allocation2 + $0x758] sm:$0xff] %vm3020, %v2999
      %3257 = vst.msk [vmem:[#allocation2 + $0x760] sm:$0xff] %vm3020, %v3000
      %3258 = vst.msk [vmem:[#allocation2 + $0x768] sm:$0xff] %vm3020, %v3001
      %3259 = vst.msk [vmem:[#allocation2 + $0x770] sm:$0xff] %vm3020, %v3002
      %3260 = vst.msk [vmem:[#allocation2 + $0x778] sm:$0xff] %vm3020, %v3003
      %3261 = vst.msk [vmem:[#allocation2 + $0x780] sm:$0xff] %vm3020, %v3004
      %3262 = vst.msk [vmem:[#allocation2 + $0x788] sm:$0xff] %vm3020, %v3005
      %3263 = vst.msk [vmem:[#allocation2 + $0x790] sm:$0xff] %vm3020, %v3006
      %3264 = vst.msk [vmem:[#allocation2 + $0x798] sm:$0xff] %vm3020, %v3007
      %3265 = vst.msk [vmem:[#allocation2 + $0x7a0] sm:$0xff] %vm3020, %v3008
      %3266 = vst.msk [vmem:[#allocation2 + $0x7a8] sm:$0xff] %vm3020, %v3009
      %3267 = vst.msk [vmem:[#allocation2 + $0x7b0] sm:$0xff] %vm3020, %v3010
      %3268 = vst.msk [vmem:[#allocation2 + $0x7b8] sm:$0xff] %vm3020, %v3011
      %3269 = vst.msk [vmem:[#allocation2 + $0x7c0] sm:$0xff] %vm3020, %v3012
      %3270 = vst.msk [vmem:[#allocation2 + $0x7c8] sm:$0xff] %vm3020, %v3013
      %3271 = vst.msk [vmem:[#allocation2 + $0x7d0] sm:$0xff] %vm3020, %v3014
      %3272 = vst.msk [vmem:[#allocation2 + $0x7d8] sm:$0xff] %vm3020, %v3015
      %3273 = vst.msk [vmem:[#allocation2 + $0x7e0] sm:$0xff] %vm3020, %v3016
      %3274 = vst.msk [vmem:[#allocation2 + $0x7e8] sm:$0xff] %vm3020, %v3017
      %3275 = vst.msk [vmem:[#allocation2 + $0x7f0] sm:$0xff] %vm3020, %v3018
      %3276 = vst.msk [vmem:[#allocation2 + $0x7f8] sm:$0xff] %vm3020, %v3019
      // Predicated region
      $region41: #{matmul_fused.1} parent=35 // pred_check
        %p3277 = pneg %p301
      $region42: #{matmul_fused.1} parent=35 // pred_check_branch
        %3279 = sbr.rel (%p3277) target = $region44
      $region43: #{matmul_fused.1} parent=35 // pred_region
        %v3280 = vld [vmem:[#allocation2] sm:$0xff]
        %v3281 = vld [vmem:[#allocation2 + $0x8] sm:$0xff]
        %v3282 = vld [vmem:[#allocation2 + $0x10] sm:$0xff]
        %v3283 = vld [vmem:[#allocation2 + $0x18] sm:$0xff]
        %v3284 = vld [vmem:[#allocation2 + $0x20] sm:$0xff]
        %v3285 = vld [vmem:[#allocation2 + $0x28] sm:$0xff]
        %v3286 = vld [vmem:[#allocation2 + $0x30] sm:$0xff]
        %v3287 = vld [vmem:[#allocation2 + $0x38] sm:$0xff]
        %v3288 = vld [vmem:[#allocation2 + $0x40] sm:$0xff]
        %v3289 = vld [vmem:[#allocation2 + $0x48] sm:$0xff]
        %v3290 = vld [vmem:[#allocation2 + $0x50] sm:$0xff]
        %v3291 = vld [vmem:[#allocation2 + $0x58] sm:$0xff]
        %v3292 = vld [vmem:[#allocation2 + $0x60] sm:$0xff]
        %v3293 = vld [vmem:[#allocation2 + $0x68] sm:$0xff]
        %v3294 = vld [vmem:[#allocation2 + $0x70] sm:$0xff]
        %v3295 = vld [vmem:[#allocation2 + $0x78] sm:$0xff]
        %v3296 = vld [vmem:[#allocation2 + $0x80] sm:$0xff]
        %v3297 = vld [vmem:[#allocation2 + $0x88] sm:$0xff]
        %v3298 = vld [vmem:[#allocation2 + $0x90] sm:$0xff]
        %v3299 = vld [vmem:[#allocation2 + $0x98] sm:$0xff]
        %v3300 = vld [vmem:[#allocation2 + $0xa0] sm:$0xff]
        %v3301 = vld [vmem:[#allocation2 + $0xa8] sm:$0xff]
        %v3302 = vld [vmem:[#allocation2 + $0xb0] sm:$0xff]
        %v3303 = vld [vmem:[#allocation2 + $0xb8] sm:$0xff]
        %v3304 = vld [vmem:[#allocation2 + $0xc0] sm:$0xff]
        %v3305 = vld [vmem:[#allocation2 + $0xc8] sm:$0xff]
        %v3306 = vld [vmem:[#allocation2 + $0xd0] sm:$0xff]
        %v3307 = vld [vmem:[#allocation2 + $0xd8] sm:$0xff]
        %v3308 = vld [vmem:[#allocation2 + $0xe0] sm:$0xff]
        %v3309 = vld [vmem:[#allocation2 + $0xe8] sm:$0xff]
        %v3310 = vld [vmem:[#allocation2 + $0xf0] sm:$0xff]
        %v3311 = vld [vmem:[#allocation2 + $0xf8] sm:$0xff]
        %v3312 = vld [vmem:[#allocation2 + $0x100] sm:$0xff]
        %v3313 = vld [vmem:[#allocation2 + $0x108] sm:$0xff]
        %v3314 = vld [vmem:[#allocation2 + $0x110] sm:$0xff]
        %v3315 = vld [vmem:[#allocation2 + $0x118] sm:$0xff]
        %v3316 = vld [vmem:[#allocation2 + $0x120] sm:$0xff]
        %v3317 = vld [vmem:[#allocation2 + $0x128] sm:$0xff]
        %v3318 = vld [vmem:[#allocation2 + $0x130] sm:$0xff]
        %v3319 = vld [vmem:[#allocation2 + $0x138] sm:$0xff]
        %v3320 = vld [vmem:[#allocation2 + $0x140] sm:$0xff]
        %v3321 = vld [vmem:[#allocation2 + $0x148] sm:$0xff]
        %v3322 = vld [vmem:[#allocation2 + $0x150] sm:$0xff]
        %v3323 = vld [vmem:[#allocation2 + $0x158] sm:$0xff]
        %v3324 = vld [vmem:[#allocation2 + $0x160] sm:$0xff]
        %v3325 = vld [vmem:[#allocation2 + $0x168] sm:$0xff]
        %v3326 = vld [vmem:[#allocation2 + $0x170] sm:$0xff]
        %v3327 = vld [vmem:[#allocation2 + $0x178] sm:$0xff]
        %v3328 = vld [vmem:[#allocation2 + $0x180] sm:$0xff]
        %v3329 = vld [vmem:[#allocation2 + $0x188] sm:$0xff]
        %v3330 = vld [vmem:[#allocation2 + $0x190] sm:$0xff]
        %v3331 = vld [vmem:[#allocation2 + $0x198] sm:$0xff]
        %v3332 = vld [vmem:[#allocation2 + $0x1a0] sm:$0xff]
        %v3333 = vld [vmem:[#allocation2 + $0x1a8] sm:$0xff]
        %v3334 = vld [vmem:[#allocation2 + $0x1b0] sm:$0xff]
        %v3335 = vld [vmem:[#allocation2 + $0x1b8] sm:$0xff]
        %v3336 = vld [vmem:[#allocation2 + $0x1c0] sm:$0xff]
        %v3337 = vld [vmem:[#allocation2 + $0x1c8] sm:$0xff]
        %v3338 = vld [vmem:[#allocation2 + $0x1d0] sm:$0xff]
        %v3339 = vld [vmem:[#allocation2 + $0x1d8] sm:$0xff]
        %v3340 = vld [vmem:[#allocation2 + $0x1e0] sm:$0xff]
        %v3341 = vld [vmem:[#allocation2 + $0x1e8] sm:$0xff]
        %v3342 = vld [vmem:[#allocation2 + $0x1f0] sm:$0xff]
        %v3343 = vld [vmem:[#allocation2 + $0x1f8] sm:$0xff]
        %v3344 = vld [vmem:[#allocation2 + $0x200] sm:$0xff]
        %v3345 = vld [vmem:[#allocation2 + $0x208] sm:$0xff]
        %v3346 = vld [vmem:[#allocation2 + $0x210] sm:$0xff]
        %v3347 = vld [vmem:[#allocation2 + $0x218] sm:$0xff]
        %v3348 = vld [vmem:[#allocation2 + $0x220] sm:$0xff]
        %v3349 = vld [vmem:[#allocation2 + $0x228] sm:$0xff]
        %v3350 = vld [vmem:[#allocation2 + $0x230] sm:$0xff]
        %v3351 = vld [vmem:[#allocation2 + $0x238] sm:$0xff]
        %v3352 = vld [vmem:[#allocation2 + $0x240] sm:$0xff]
        %v3353 = vld [vmem:[#allocation2 + $0x248] sm:$0xff]
        %v3354 = vld [vmem:[#allocation2 + $0x250] sm:$0xff]
        %v3355 = vld [vmem:[#allocation2 + $0x258] sm:$0xff]
        %v3356 = vld [vmem:[#allocation2 + $0x260] sm:$0xff]
        %v3357 = vld [vmem:[#allocation2 + $0x268] sm:$0xff]
        %v3358 = vld [vmem:[#allocation2 + $0x270] sm:$0xff]
        %v3359 = vld [vmem:[#allocation2 + $0x278] sm:$0xff]
        %v3360 = vld [vmem:[#allocation2 + $0x280] sm:$0xff]
        %v3361 = vld [vmem:[#allocation2 + $0x288] sm:$0xff]
        %v3362 = vld [vmem:[#allocation2 + $0x290] sm:$0xff]
        %v3363 = vld [vmem:[#allocation2 + $0x298] sm:$0xff]
        %v3364 = vld [vmem:[#allocation2 + $0x2a0] sm:$0xff]
        %v3365 = vld [vmem:[#allocation2 + $0x2a8] sm:$0xff]
        %v3366 = vld [vmem:[#allocation2 + $0x2b0] sm:$0xff]
        %v3367 = vld [vmem:[#allocation2 + $0x2b8] sm:$0xff]
        %v3368 = vld [vmem:[#allocation2 + $0x2c0] sm:$0xff]
        %v3369 = vld [vmem:[#allocation2 + $0x2c8] sm:$0xff]
        %v3370 = vld [vmem:[#allocation2 + $0x2d0] sm:$0xff]
        %v3371 = vld [vmem:[#allocation2 + $0x2d8] sm:$0xff]
        %v3372 = vld [vmem:[#allocation2 + $0x2e0] sm:$0xff]
        %v3373 = vld [vmem:[#allocation2 + $0x2e8] sm:$0xff]
        %v3374 = vld [vmem:[#allocation2 + $0x2f0] sm:$0xff]
        %v3375 = vld [vmem:[#allocation2 + $0x2f8] sm:$0xff]
        %v3376 = vld [vmem:[#allocation2 + $0x300] sm:$0xff]
        %v3377 = vld [vmem:[#allocation2 + $0x308] sm:$0xff]
        %v3378 = vld [vmem:[#allocation2 + $0x310] sm:$0xff]
        %v3379 = vld [vmem:[#allocation2 + $0x318] sm:$0xff]
        %v3380 = vld [vmem:[#allocation2 + $0x320] sm:$0xff]
        %v3381 = vld [vmem:[#allocation2 + $0x328] sm:$0xff]
        %v3382 = vld [vmem:[#allocation2 + $0x330] sm:$0xff]
        %v3383 = vld [vmem:[#allocation2 + $0x338] sm:$0xff]
        %v3384 = vld [vmem:[#allocation2 + $0x340] sm:$0xff]
        %v3385 = vld [vmem:[#allocation2 + $0x348] sm:$0xff]
        %v3386 = vld [vmem:[#allocation2 + $0x350] sm:$0xff]
        %v3387 = vld [vmem:[#allocation2 + $0x358] sm:$0xff]
        %v3388 = vld [vmem:[#allocation2 + $0x360] sm:$0xff]
        %v3389 = vld [vmem:[#allocation2 + $0x368] sm:$0xff]
        %v3390 = vld [vmem:[#allocation2 + $0x370] sm:$0xff]
        %v3391 = vld [vmem:[#allocation2 + $0x378] sm:$0xff]
        %v3392 = vld [vmem:[#allocation2 + $0x380] sm:$0xff]
        %v3393 = vld [vmem:[#allocation2 + $0x388] sm:$0xff]
        %v3394 = vld [vmem:[#allocation2 + $0x390] sm:$0xff]
        %v3395 = vld [vmem:[#allocation2 + $0x398] sm:$0xff]
        %v3396 = vld [vmem:[#allocation2 + $0x3a0] sm:$0xff]
        %v3397 = vld [vmem:[#allocation2 + $0x3a8] sm:$0xff]
        %v3398 = vld [vmem:[#allocation2 + $0x3b0] sm:$0xff]
        %v3399 = vld [vmem:[#allocation2 + $0x3b8] sm:$0xff]
        %v3400 = vld [vmem:[#allocation2 + $0x3c0] sm:$0xff]
        %v3401 = vld [vmem:[#allocation2 + $0x3c8] sm:$0xff]
        %v3402 = vld [vmem:[#allocation2 + $0x3d0] sm:$0xff]
        %v3403 = vld [vmem:[#allocation2 + $0x3d8] sm:$0xff]
        %v3404 = vld [vmem:[#allocation2 + $0x3e0] sm:$0xff]
        %v3405 = vld [vmem:[#allocation2 + $0x3e8] sm:$0xff]
        %v3406 = vld [vmem:[#allocation2 + $0x3f0] sm:$0xff]
        %v3407 = vld [vmem:[#allocation2 + $0x3f8] sm:$0xff]
        %v3408 = vld [vmem:[#allocation2 + $0x400] sm:$0xff]
        %v3409 = vld [vmem:[#allocation2 + $0x408] sm:$0xff]
        %v3410 = vld [vmem:[#allocation2 + $0x410] sm:$0xff]
        %v3411 = vld [vmem:[#allocation2 + $0x418] sm:$0xff]
        %v3412 = vld [vmem:[#allocation2 + $0x420] sm:$0xff]
        %v3413 = vld [vmem:[#allocation2 + $0x428] sm:$0xff]
        %v3414 = vld [vmem:[#allocation2 + $0x430] sm:$0xff]
        %v3415 = vld [vmem:[#allocation2 + $0x438] sm:$0xff]
        %v3416 = vld [vmem:[#allocation2 + $0x440] sm:$0xff]
        %v3417 = vld [vmem:[#allocation2 + $0x448] sm:$0xff]
        %v3418 = vld [vmem:[#allocation2 + $0x450] sm:$0xff]
        %v3419 = vld [vmem:[#allocation2 + $0x458] sm:$0xff]
        %v3420 = vld [vmem:[#allocation2 + $0x460] sm:$0xff]
        %v3421 = vld [vmem:[#allocation2 + $0x468] sm:$0xff]
        %v3422 = vld [vmem:[#allocation2 + $0x470] sm:$0xff]
        %v3423 = vld [vmem:[#allocation2 + $0x478] sm:$0xff]
        %v3424 = vld [vmem:[#allocation2 + $0x480] sm:$0xff]
        %v3425 = vld [vmem:[#allocation2 + $0x488] sm:$0xff]
        %v3426 = vld [vmem:[#allocation2 + $0x490] sm:$0xff]
        %v3427 = vld [vmem:[#allocation2 + $0x498] sm:$0xff]
        %v3428 = vld [vmem:[#allocation2 + $0x4a0] sm:$0xff]
        %v3429 = vld [vmem:[#allocation2 + $0x4a8] sm:$0xff]
        %v3430 = vld [vmem:[#allocation2 + $0x4b0] sm:$0xff]
        %v3431 = vld [vmem:[#allocation2 + $0x4b8] sm:$0xff]
        %v3432 = vld [vmem:[#allocation2 + $0x4c0] sm:$0xff]
        %v3433 = vld [vmem:[#allocation2 + $0x4c8] sm:$0xff]
        %v3434 = vld [vmem:[#allocation2 + $0x4d0] sm:$0xff]
        %v3435 = vld [vmem:[#allocation2 + $0x4d8] sm:$0xff]
        %v3436 = vld [vmem:[#allocation2 + $0x4e0] sm:$0xff]
        %v3437 = vld [vmem:[#allocation2 + $0x4e8] sm:$0xff]
        %v3438 = vld [vmem:[#allocation2 + $0x4f0] sm:$0xff]
        %v3439 = vld [vmem:[#allocation2 + $0x4f8] sm:$0xff]
        %v3440 = vld [vmem:[#allocation2 + $0x500] sm:$0xff]
        %v3441 = vld [vmem:[#allocation2 + $0x508] sm:$0xff]
        %v3442 = vld [vmem:[#allocation2 + $0x510] sm:$0xff]
        %v3443 = vld [vmem:[#allocation2 + $0x518] sm:$0xff]
        %v3444 = vld [vmem:[#allocation2 + $0x520] sm:$0xff]
        %v3445 = vld [vmem:[#allocation2 + $0x528] sm:$0xff]
        %v3446 = vld [vmem:[#allocation2 + $0x530] sm:$0xff]
        %v3447 = vld [vmem:[#allocation2 + $0x538] sm:$0xff]
        %v3448 = vld [vmem:[#allocation2 + $0x540] sm:$0xff]
        %v3449 = vld [vmem:[#allocation2 + $0x548] sm:$0xff]
        %v3450 = vld [vmem:[#allocation2 + $0x550] sm:$0xff]
        %v3451 = vld [vmem:[#allocation2 + $0x558] sm:$0xff]
        %v3452 = vld [vmem:[#allocation2 + $0x560] sm:$0xff]
        %v3453 = vld [vmem:[#allocation2 + $0x568] sm:$0xff]
        %v3454 = vld [vmem:[#allocation2 + $0x570] sm:$0xff]
        %v3455 = vld [vmem:[#allocation2 + $0x578] sm:$0xff]
        %v3456 = vld [vmem:[#allocation2 + $0x580] sm:$0xff]
        %v3457 = vld [vmem:[#allocation2 + $0x588] sm:$0xff]
        %v3458 = vld [vmem:[#allocation2 + $0x590] sm:$0xff]
        %v3459 = vld [vmem:[#allocation2 + $0x598] sm:$0xff]
        %v3460 = vld [vmem:[#allocation2 + $0x5a0] sm:$0xff]
        %v3461 = vld [vmem:[#allocation2 + $0x5a8] sm:$0xff]
        %v3462 = vld [vmem:[#allocation2 + $0x5b0] sm:$0xff]
        %v3463 = vld [vmem:[#allocation2 + $0x5b8] sm:$0xff]
        %v3464 = vld [vmem:[#allocation2 + $0x5c0] sm:$0xff]
        %v3465 = vld [vmem:[#allocation2 + $0x5c8] sm:$0xff]
        %v3466 = vld [vmem:[#allocation2 + $0x5d0] sm:$0xff]
        %v3467 = vld [vmem:[#allocation2 + $0x5d8] sm:$0xff]
        %v3468 = vld [vmem:[#allocation2 + $0x5e0] sm:$0xff]
        %v3469 = vld [vmem:[#allocation2 + $0x5e8] sm:$0xff]
        %v3470 = vld [vmem:[#allocation2 + $0x5f0] sm:$0xff]
        %v3471 = vld [vmem:[#allocation2 + $0x5f8] sm:$0xff]
        %v3472 = vld [vmem:[#allocation2 + $0x600] sm:$0xff]
        %v3473 = vld [vmem:[#allocation2 + $0x608] sm:$0xff]
        %v3474 = vld [vmem:[#allocation2 + $0x610] sm:$0xff]
        %v3475 = vld [vmem:[#allocation2 + $0x618] sm:$0xff]
        %v3476 = vld [vmem:[#allocation2 + $0x620] sm:$0xff]
        %v3477 = vld [vmem:[#allocation2 + $0x628] sm:$0xff]
        %v3478 = vld [vmem:[#allocation2 + $0x630] sm:$0xff]
        %v3479 = vld [vmem:[#allocation2 + $0x638] sm:$0xff]
        %v3480 = vld [vmem:[#allocation2 + $0x640] sm:$0xff]
        %v3481 = vld [vmem:[#allocation2 + $0x648] sm:$0xff]
        %v3482 = vld [vmem:[#allocation2 + $0x650] sm:$0xff]
        %v3483 = vld [vmem:[#allocation2 + $0x658] sm:$0xff]
        %v3484 = vld [vmem:[#allocation2 + $0x660] sm:$0xff]
        %v3485 = vld [vmem:[#allocation2 + $0x668] sm:$0xff]
        %v3486 = vld [vmem:[#allocation2 + $0x670] sm:$0xff]
        %v3487 = vld [vmem:[#allocation2 + $0x678] sm:$0xff]
        %v3488 = vld [vmem:[#allocation2 + $0x680] sm:$0xff]
        %v3489 = vld [vmem:[#allocation2 + $0x688] sm:$0xff]
        %v3490 = vld [vmem:[#allocation2 + $0x690] sm:$0xff]
        %v3491 = vld [vmem:[#allocation2 + $0x698] sm:$0xff]
        %v3492 = vld [vmem:[#allocation2 + $0x6a0] sm:$0xff]
        %v3493 = vld [vmem:[#allocation2 + $0x6a8] sm:$0xff]
        %v3494 = vld [vmem:[#allocation2 + $0x6b0] sm:$0xff]
        %v3495 = vld [vmem:[#allocation2 + $0x6b8] sm:$0xff]
        %v3496 = vld [vmem:[#allocation2 + $0x6c0] sm:$0xff]
        %v3497 = vld [vmem:[#allocation2 + $0x6c8] sm:$0xff]
        %v3498 = vld [vmem:[#allocation2 + $0x6d0] sm:$0xff]
        %v3499 = vld [vmem:[#allocation2 + $0x6d8] sm:$0xff]
        %v3500 = vld [vmem:[#allocation2 + $0x6e0] sm:$0xff]
        %v3501 = vld [vmem:[#allocation2 + $0x6e8] sm:$0xff]
        %v3502 = vld [vmem:[#allocation2 + $0x6f0] sm:$0xff]
        %v3503 = vld [vmem:[#allocation2 + $0x6f8] sm:$0xff]
        %v3504 = vld [vmem:[#allocation2 + $0x700] sm:$0xff]
        %v3505 = vld [vmem:[#allocation2 + $0x708] sm:$0xff]
        %v3506 = vld [vmem:[#allocation2 + $0x710] sm:$0xff]
        %v3507 = vld [vmem:[#allocation2 + $0x718] sm:$0xff]
        %v3508 = vld [vmem:[#allocation2 + $0x720] sm:$0xff]
        %v3509 = vld [vmem:[#allocation2 + $0x728] sm:$0xff]
        %v3510 = vld [vmem:[#allocation2 + $0x730] sm:$0xff]
        %v3511 = vld [vmem:[#allocation2 + $0x738] sm:$0xff]
        %v3512 = vld [vmem:[#allocation2 + $0x740] sm:$0xff]
        %v3513 = vld [vmem:[#allocation2 + $0x748] sm:$0xff]
        %v3514 = vld [vmem:[#allocation2 + $0x750] sm:$0xff]
        %v3515 = vld [vmem:[#allocation2 + $0x758] sm:$0xff]
        %v3516 = vld [vmem:[#allocation2 + $0x760] sm:$0xff]
        %v3517 = vld [vmem:[#allocation2 + $0x768] sm:$0xff]
        %v3518 = vld [vmem:[#allocation2 + $0x770] sm:$0xff]
        %v3519 = vld [vmem:[#allocation2 + $0x778] sm:$0xff]
        %v3520 = vld [vmem:[#allocation2 + $0x780] sm:$0xff]
        %v3521 = vld [vmem:[#allocation2 + $0x788] sm:$0xff]
        %v3522 = vld [vmem:[#allocation2 + $0x790] sm:$0xff]
        %v3523 = vld [vmem:[#allocation2 + $0x798] sm:$0xff]
        %v3524 = vld [vmem:[#allocation2 + $0x7a0] sm:$0xff]
        %v3525 = vld [vmem:[#allocation2 + $0x7a8] sm:$0xff]
        %v3526 = vld [vmem:[#allocation2 + $0x7b0] sm:$0xff]
        %v3527 = vld [vmem:[#allocation2 + $0x7b8] sm:$0xff]
        %v3528 = vld [vmem:[#allocation2 + $0x7c0] sm:$0xff]
        %v3529 = vld [vmem:[#allocation2 + $0x7c8] sm:$0xff]
        %v3530 = vld [vmem:[#allocation2 + $0x7d0] sm:$0xff]
        %v3531 = vld [vmem:[#allocation2 + $0x7d8] sm:$0xff]
        %v3532 = vld [vmem:[#allocation2 + $0x7e0] sm:$0xff]
        %v3533 = vld [vmem:[#allocation2 + $0x7e8] sm:$0xff]
        %v3534 = vld [vmem:[#allocation2 + $0x7f0] sm:$0xff]
        %v3535 = vld [vmem:[#allocation2 + $0x7f8] sm:$0xff]
        %v3536 = vld [vmem:[%s287] sm:$0x1]
        %v3538 = vperm.slane %v3536, 0
        %v3540 = vmul.f32 %v3280, %v3538
        %v3541 = vmul.f32 %v3281, %v3538
        %v3542 = vmul.f32 %v3282, %v3538
        %v3543 = vmul.f32 %v3283, %v3538
        %v3544 = vmul.f32 %v3284, %v3538
        %v3545 = vmul.f32 %v3285, %v3538
        %v3546 = vmul.f32 %v3286, %v3538
        %v3547 = vmul.f32 %v3287, %v3538
        %v3548 = vmul.f32 %v3288, %v3538
        %v3549 = vmul.f32 %v3289, %v3538
        %v3550 = vmul.f32 %v3290, %v3538
        %v3551 = vmul.f32 %v3291, %v3538
        %v3552 = vmul.f32 %v3292, %v3538
        %v3553 = vmul.f32 %v3293, %v3538
        %v3554 = vmul.f32 %v3294, %v3538
        %v3555 = vmul.f32 %v3295, %v3538
        %v3556 = vmul.f32 %v3296, %v3538
        %v3557 = vmul.f32 %v3297, %v3538
        %v3558 = vmul.f32 %v3298, %v3538
        %v3559 = vmul.f32 %v3299, %v3538
        %v3560 = vmul.f32 %v3300, %v3538
        %v3561 = vmul.f32 %v3301, %v3538
        %v3562 = vmul.f32 %v3302, %v3538
        %v3563 = vmul.f32 %v3303, %v3538
        %v3564 = vmul.f32 %v3304, %v3538
        %v3565 = vmul.f32 %v3305, %v3538
        %v3566 = vmul.f32 %v3306, %v3538
        %v3567 = vmul.f32 %v3307, %v3538
        %v3568 = vmul.f32 %v3308, %v3538
        %v3569 = vmul.f32 %v3309, %v3538
        %v3570 = vmul.f32 %v3310, %v3538
        %v3571 = vmul.f32 %v3311, %v3538
        %v3572 = vmul.f32 %v3312, %v3538
        %v3573 = vmul.f32 %v3313, %v3538
        %v3574 = vmul.f32 %v3314, %v3538
        %v3575 = vmul.f32 %v3315, %v3538
        %v3576 = vmul.f32 %v3316, %v3538
        %v3577 = vmul.f32 %v3317, %v3538
        %v3578 = vmul.f32 %v3318, %v3538
        %v3579 = vmul.f32 %v3319, %v3538
        %v3580 = vmul.f32 %v3320, %v3538
        %v3581 = vmul.f32 %v3321, %v3538
        %v3582 = vmul.f32 %v3322, %v3538
        %v3583 = vmul.f32 %v3323, %v3538
        %v3584 = vmul.f32 %v3324, %v3538
        %v3585 = vmul.f32 %v3325, %v3538
        %v3586 = vmul.f32 %v3326, %v3538
        %v3587 = vmul.f32 %v3327, %v3538
        %v3588 = vmul.f32 %v3328, %v3538
        %v3589 = vmul.f32 %v3329, %v3538
        %v3590 = vmul.f32 %v3330, %v3538
        %v3591 = vmul.f32 %v3331, %v3538
        %v3592 = vmul.f32 %v3332, %v3538
        %v3593 = vmul.f32 %v3333, %v3538
        %v3594 = vmul.f32 %v3334, %v3538
        %v3595 = vmul.f32 %v3335, %v3538
        %v3596 = vmul.f32 %v3336, %v3538
        %v3597 = vmul.f32 %v3337, %v3538
        %v3598 = vmul.f32 %v3338, %v3538
        %v3599 = vmul.f32 %v3339, %v3538
        %v3600 = vmul.f32 %v3340, %v3538
        %v3601 = vmul.f32 %v3341, %v3538
        %v3602 = vmul.f32 %v3342, %v3538
        %v3603 = vmul.f32 %v3343, %v3538
        %v3604 = vmul.f32 %v3344, %v3538
        %v3605 = vmul.f32 %v3345, %v3538
        %v3606 = vmul.f32 %v3346, %v3538
        %v3607 = vmul.f32 %v3347, %v3538
        %v3608 = vmul.f32 %v3348, %v3538
        %v3609 = vmul.f32 %v3349, %v3538
        %v3610 = vmul.f32 %v3350, %v3538
        %v3611 = vmul.f32 %v3351, %v3538
        %v3612 = vmul.f32 %v3352, %v3538
        %v3613 = vmul.f32 %v3353, %v3538
        %v3614 = vmul.f32 %v3354, %v3538
        %v3615 = vmul.f32 %v3355, %v3538
        %v3616 = vmul.f32 %v3356, %v3538
        %v3617 = vmul.f32 %v3357, %v3538
        %v3618 = vmul.f32 %v3358, %v3538
        %v3619 = vmul.f32 %v3359, %v3538
        %v3620 = vmul.f32 %v3360, %v3538
        %v3621 = vmul.f32 %v3361, %v3538
        %v3622 = vmul.f32 %v3362, %v3538
        %v3623 = vmul.f32 %v3363, %v3538
        %v3624 = vmul.f32 %v3364, %v3538
        %v3625 = vmul.f32 %v3365, %v3538
        %v3626 = vmul.f32 %v3366, %v3538
        %v3627 = vmul.f32 %v3367, %v3538
        %v3628 = vmul.f32 %v3368, %v3538
        %v3629 = vmul.f32 %v3369, %v3538
        %v3630 = vmul.f32 %v3370, %v3538
        %v3631 = vmul.f32 %v3371, %v3538
        %v3632 = vmul.f32 %v3372, %v3538
        %v3633 = vmul.f32 %v3373, %v3538
        %v3634 = vmul.f32 %v3374, %v3538
        %v3635 = vmul.f32 %v3375, %v3538
        %v3636 = vmul.f32 %v3376, %v3538
        %v3637 = vmul.f32 %v3377, %v3538
        %v3638 = vmul.f32 %v3378, %v3538
        %v3639 = vmul.f32 %v3379, %v3538
        %v3640 = vmul.f32 %v3380, %v3538
        %v3641 = vmul.f32 %v3381, %v3538
        %v3642 = vmul.f32 %v3382, %v3538
        %v3643 = vmul.f32 %v3383, %v3538
        %v3644 = vmul.f32 %v3384, %v3538
        %v3645 = vmul.f32 %v3385, %v3538
        %v3646 = vmul.f32 %v3386, %v3538
        %v3647 = vmul.f32 %v3387, %v3538
        %v3648 = vmul.f32 %v3388, %v3538
        %v3649 = vmul.f32 %v3389, %v3538
        %v3650 = vmul.f32 %v3390, %v3538
        %v3651 = vmul.f32 %v3391, %v3538
        %v3652 = vmul.f32 %v3392, %v3538
        %v3653 = vmul.f32 %v3393, %v3538
        %v3654 = vmul.f32 %v3394, %v3538
        %v3655 = vmul.f32 %v3395, %v3538
        %v3656 = vmul.f32 %v3396, %v3538
        %v3657 = vmul.f32 %v3397, %v3538
        %v3658 = vmul.f32 %v3398, %v3538
        %v3659 = vmul.f32 %v3399, %v3538
        %v3660 = vmul.f32 %v3400, %v3538
        %v3661 = vmul.f32 %v3401, %v3538
        %v3662 = vmul.f32 %v3402, %v3538
        %v3663 = vmul.f32 %v3403, %v3538
        %v3664 = vmul.f32 %v3404, %v3538
        %v3665 = vmul.f32 %v3405, %v3538
        %v3666 = vmul.f32 %v3406, %v3538
        %v3667 = vmul.f32 %v3407, %v3538
        %v3668 = vmul.f32 %v3408, %v3538
        %v3669 = vmul.f32 %v3409, %v3538
        %v3670 = vmul.f32 %v3410, %v3538
        %v3671 = vmul.f32 %v3411, %v3538
        %v3672 = vmul.f32 %v3412, %v3538
        %v3673 = vmul.f32 %v3413, %v3538
        %v3674 = vmul.f32 %v3414, %v3538
        %v3675 = vmul.f32 %v3415, %v3538
        %v3676 = vmul.f32 %v3416, %v3538
        %v3677 = vmul.f32 %v3417, %v3538
        %v3678 = vmul.f32 %v3418, %v3538
        %v3679 = vmul.f32 %v3419, %v3538
        %v3680 = vmul.f32 %v3420, %v3538
        %v3681 = vmul.f32 %v3421, %v3538
        %v3682 = vmul.f32 %v3422, %v3538
        %v3683 = vmul.f32 %v3423, %v3538
        %v3684 = vmul.f32 %v3424, %v3538
        %v3685 = vmul.f32 %v3425, %v3538
        %v3686 = vmul.f32 %v3426, %v3538
        %v3687 = vmul.f32 %v3427, %v3538
        %v3688 = vmul.f32 %v3428, %v3538
        %v3689 = vmul.f32 %v3429, %v3538
        %v3690 = vmul.f32 %v3430, %v3538
        %v3691 = vmul.f32 %v3431, %v3538
        %v3692 = vmul.f32 %v3432, %v3538
        %v3693 = vmul.f32 %v3433, %v3538
        %v3694 = vmul.f32 %v3434, %v3538
        %v3695 = vmul.f32 %v3435, %v3538
        %v3696 = vmul.f32 %v3436, %v3538
        %v3697 = vmul.f32 %v3437, %v3538
        %v3698 = vmul.f32 %v3438, %v3538
        %v3699 = vmul.f32 %v3439, %v3538
        %v3700 = vmul.f32 %v3440, %v3538
        %v3701 = vmul.f32 %v3441, %v3538
        %v3702 = vmul.f32 %v3442, %v3538
        %v3703 = vmul.f32 %v3443, %v3538
        %v3704 = vmul.f32 %v3444, %v3538
        %v3705 = vmul.f32 %v3445, %v3538
        %v3706 = vmul.f32 %v3446, %v3538
        %v3707 = vmul.f32 %v3447, %v3538
        %v3708 = vmul.f32 %v3448, %v3538
        %v3709 = vmul.f32 %v3449, %v3538
        %v3710 = vmul.f32 %v3450, %v3538
        %v3711 = vmul.f32 %v3451, %v3538
        %v3712 = vmul.f32 %v3452, %v3538
        %v3713 = vmul.f32 %v3453, %v3538
        %v3714 = vmul.f32 %v3454, %v3538
        %v3715 = vmul.f32 %v3455, %v3538
        %v3716 = vmul.f32 %v3456, %v3538
        %v3717 = vmul.f32 %v3457, %v3538
        %v3718 = vmul.f32 %v3458, %v3538
        %v3719 = vmul.f32 %v3459, %v3538
        %v3720 = vmul.f32 %v3460, %v3538
        %v3721 = vmul.f32 %v3461, %v3538
        %v3722 = vmul.f32 %v3462, %v3538
        %v3723 = vmul.f32 %v3463, %v3538
        %v3724 = vmul.f32 %v3464, %v3538
        %v3725 = vmul.f32 %v3465, %v3538
        %v3726 = vmul.f32 %v3466, %v3538
        %v3727 = vmul.f32 %v3467, %v3538
        %v3728 = vmul.f32 %v3468, %v3538
        %v3729 = vmul.f32 %v3469, %v3538
        %v3730 = vmul.f32 %v3470, %v3538
        %v3731 = vmul.f32 %v3471, %v3538
        %v3732 = vmul.f32 %v3472, %v3538
        %v3733 = vmul.f32 %v3473, %v3538
        %v3734 = vmul.f32 %v3474, %v3538
        %v3735 = vmul.f32 %v3475, %v3538
        %v3736 = vmul.f32 %v3476, %v3538
        %v3737 = vmul.f32 %v3477, %v3538
        %v3738 = vmul.f32 %v3478, %v3538
        %v3739 = vmul.f32 %v3479, %v3538
        %v3740 = vmul.f32 %v3480, %v3538
        %v3741 = vmul.f32 %v3481, %v3538
        %v3742 = vmul.f32 %v3482, %v3538
        %v3743 = vmul.f32 %v3483, %v3538
        %v3744 = vmul.f32 %v3484, %v3538
        %v3745 = vmul.f32 %v3485, %v3538
        %v3746 = vmul.f32 %v3486, %v3538
        %v3747 = vmul.f32 %v3487, %v3538
        %v3748 = vmul.f32 %v3488, %v3538
        %v3749 = vmul.f32 %v3489, %v3538
        %v3750 = vmul.f32 %v3490, %v3538
        %v3751 = vmul.f32 %v3491, %v3538
        %v3752 = vmul.f32 %v3492, %v3538
        %v3753 = vmul.f32 %v3493, %v3538
        %v3754 = vmul.f32 %v3494, %v3538
        %v3755 = vmul.f32 %v3495, %v3538
        %v3756 = vmul.f32 %v3496, %v3538
        %v3757 = vmul.f32 %v3497, %v3538
        %v3758 = vmul.f32 %v3498, %v3538
        %v3759 = vmul.f32 %v3499, %v3538
        %v3760 = vmul.f32 %v3500, %v3538
        %v3761 = vmul.f32 %v3501, %v3538
        %v3762 = vmul.f32 %v3502, %v3538
        %v3763 = vmul.f32 %v3503, %v3538
        %v3764 = vmul.f32 %v3504, %v3538
        %v3765 = vmul.f32 %v3505, %v3538
        %v3766 = vmul.f32 %v3506, %v3538
        %v3767 = vmul.f32 %v3507, %v3538
        %v3768 = vmul.f32 %v3508, %v3538
        %v3769 = vmul.f32 %v3509, %v3538
        %v3770 = vmul.f32 %v3510, %v3538
        %v3771 = vmul.f32 %v3511, %v3538
        %v3772 = vmul.f32 %v3512, %v3538
        %v3773 = vmul.f32 %v3513, %v3538
        %v3774 = vmul.f32 %v3514, %v3538
        %v3775 = vmul.f32 %v3515, %v3538
        %v3776 = vmul.f32 %v3516, %v3538
        %v3777 = vmul.f32 %v3517, %v3538
        %v3778 = vmul.f32 %v3518, %v3538
        %v3779 = vmul.f32 %v3519, %v3538
        %v3780 = vmul.f32 %v3520, %v3538
        %v3781 = vmul.f32 %v3521, %v3538
        %v3782 = vmul.f32 %v3522, %v3538
        %v3783 = vmul.f32 %v3523, %v3538
        %v3784 = vmul.f32 %v3524, %v3538
        %v3785 = vmul.f32 %v3525, %v3538
        %v3786 = vmul.f32 %v3526, %v3538
        %v3787 = vmul.f32 %v3527, %v3538
        %v3788 = vmul.f32 %v3528, %v3538
        %v3789 = vmul.f32 %v3529, %v3538
        %v3790 = vmul.f32 %v3530, %v3538
        %v3791 = vmul.f32 %v3531, %v3538
        %v3792 = vmul.f32 %v3532, %v3538
        %v3793 = vmul.f32 %v3533, %v3538
        %v3794 = vmul.f32 %v3534, %v3538
        %v3795 = vmul.f32 %v3535, %v3538
        %v3796 = vld [vmem:[%s290] sm:$0x1]
        %v3798 = vperm.slane %v3796, 0
        %v3800 = vadd.f32 %v3540, %v3798
        %v3801 = vadd.f32 %v3541, %v3798
        %v3802 = vadd.f32 %v3542, %v3798
        %v3803 = vadd.f32 %v3543, %v3798
        %v3804 = vadd.f32 %v3544, %v3798
        %v3805 = vadd.f32 %v3545, %v3798
        %v3806 = vadd.f32 %v3546, %v3798
        %v3807 = vadd.f32 %v3547, %v3798
        %v3808 = vadd.f32 %v3548, %v3798
        %v3809 = vadd.f32 %v3549, %v3798
        %v3810 = vadd.f32 %v3550, %v3798
        %v3811 = vadd.f32 %v3551, %v3798
        %v3812 = vadd.f32 %v3552, %v3798
        %v3813 = vadd.f32 %v3553, %v3798
        %v3814 = vadd.f32 %v3554, %v3798
        %v3815 = vadd.f32 %v3555, %v3798
        %v3816 = vadd.f32 %v3556, %v3798
        %v3817 = vadd.f32 %v3557, %v3798
        %v3818 = vadd.f32 %v3558, %v3798
        %v3819 = vadd.f32 %v3559, %v3798
        %v3820 = vadd.f32 %v3560, %v3798
        %v3821 = vadd.f32 %v3561, %v3798
        %v3822 = vadd.f32 %v3562, %v3798
        %v3823 = vadd.f32 %v3563, %v3798
        %v3824 = vadd.f32 %v3564, %v3798
        %v3825 = vadd.f32 %v3565, %v3798
        %v3826 = vadd.f32 %v3566, %v3798
        %v3827 = vadd.f32 %v3567, %v3798
        %v3828 = vadd.f32 %v3568, %v3798
        %v3829 = vadd.f32 %v3569, %v3798
        %v3830 = vadd.f32 %v3570, %v3798
        %v3831 = vadd.f32 %v3571, %v3798
        %v3832 = vadd.f32 %v3572, %v3798
        %v3833 = vadd.f32 %v3573, %v3798
        %v3834 = vadd.f32 %v3574, %v3798
        %v3835 = vadd.f32 %v3575, %v3798
        %v3836 = vadd.f32 %v3576, %v3798
        %v3837 = vadd.f32 %v3577, %v3798
        %v3838 = vadd.f32 %v3578, %v3798
        %v3839 = vadd.f32 %v3579, %v3798
        %v3840 = vadd.f32 %v3580, %v3798
        %v3841 = vadd.f32 %v3581, %v3798
        %v3842 = vadd.f32 %v3582, %v3798
        %v3843 = vadd.f32 %v3583, %v3798
        %v3844 = vadd.f32 %v3584, %v3798
        %v3845 = vadd.f32 %v3585, %v3798
        %v3846 = vadd.f32 %v3586, %v3798
        %v3847 = vadd.f32 %v3587, %v3798
        %v3848 = vadd.f32 %v3588, %v3798
        %v3849 = vadd.f32 %v3589, %v3798
        %v3850 = vadd.f32 %v3590, %v3798
        %v3851 = vadd.f32 %v3591, %v3798
        %v3852 = vadd.f32 %v3592, %v3798
        %v3853 = vadd.f32 %v3593, %v3798
        %v3854 = vadd.f32 %v3594, %v3798
        %v3855 = vadd.f32 %v3595, %v3798
        %v3856 = vadd.f32 %v3596, %v3798
        %v3857 = vadd.f32 %v3597, %v3798
        %v3858 = vadd.f32 %v3598, %v3798
        %v3859 = vadd.f32 %v3599, %v3798
        %v3860 = vadd.f32 %v3600, %v3798
        %v3861 = vadd.f32 %v3601, %v3798
        %v3862 = vadd.f32 %v3602, %v3798
        %v3863 = vadd.f32 %v3603, %v3798
        %v3864 = vadd.f32 %v3604, %v3798
        %v3865 = vadd.f32 %v3605, %v3798
        %v3866 = vadd.f32 %v3606, %v3798
        %v3867 = vadd.f32 %v3607, %v3798
        %v3868 = vadd.f32 %v3608, %v3798
        %v3869 = vadd.f32 %v3609, %v3798
        %v3870 = vadd.f32 %v3610, %v3798
        %v3871 = vadd.f32 %v3611, %v3798
        %v3872 = vadd.f32 %v3612, %v3798
        %v3873 = vadd.f32 %v3613, %v3798
        %v3874 = vadd.f32 %v3614, %v3798
        %v3875 = vadd.f32 %v3615, %v3798
        %v3876 = vadd.f32 %v3616, %v3798
        %v3877 = vadd.f32 %v3617, %v3798
        %v3878 = vadd.f32 %v3618, %v3798
        %v3879 = vadd.f32 %v3619, %v3798
        %v3880 = vadd.f32 %v3620, %v3798
        %v3881 = vadd.f32 %v3621, %v3798
        %v3882 = vadd.f32 %v3622, %v3798
        %v3883 = vadd.f32 %v3623, %v3798
        %v3884 = vadd.f32 %v3624, %v3798
        %v3885 = vadd.f32 %v3625, %v3798
        %v3886 = vadd.f32 %v3626, %v3798
        %v3887 = vadd.f32 %v3627, %v3798
        %v3888 = vadd.f32 %v3628, %v3798
        %v3889 = vadd.f32 %v3629, %v3798
        %v3890 = vadd.f32 %v3630, %v3798
        %v3891 = vadd.f32 %v3631, %v3798
        %v3892 = vadd.f32 %v3632, %v3798
        %v3893 = vadd.f32 %v3633, %v3798
        %v3894 = vadd.f32 %v3634, %v3798
        %v3895 = vadd.f32 %v3635, %v3798
        %v3896 = vadd.f32 %v3636, %v3798
        %v3897 = vadd.f32 %v3637, %v3798
        %v3898 = vadd.f32 %v3638, %v3798
        %v3899 = vadd.f32 %v3639, %v3798
        %v3900 = vadd.f32 %v3640, %v3798
        %v3901 = vadd.f32 %v3641, %v3798
        %v3902 = vadd.f32 %v3642, %v3798
        %v3903 = vadd.f32 %v3643, %v3798
        %v3904 = vadd.f32 %v3644, %v3798
        %v3905 = vadd.f32 %v3645, %v3798
        %v3906 = vadd.f32 %v3646, %v3798
        %v3907 = vadd.f32 %v3647, %v3798
        %v3908 = vadd.f32 %v3648, %v3798
        %v3909 = vadd.f32 %v3649, %v3798
        %v3910 = vadd.f32 %v3650, %v3798
        %v3911 = vadd.f32 %v3651, %v3798
        %v3912 = vadd.f32 %v3652, %v3798
        %v3913 = vadd.f32 %v3653, %v3798
        %v3914 = vadd.f32 %v3654, %v3798
        %v3915 = vadd.f32 %v3655, %v3798
        %v3916 = vadd.f32 %v3656, %v3798
        %v3917 = vadd.f32 %v3657, %v3798
        %v3918 = vadd.f32 %v3658, %v3798
        %v3919 = vadd.f32 %v3659, %v3798
        %v3920 = vadd.f32 %v3660, %v3798
        %v3921 = vadd.f32 %v3661, %v3798
        %v3922 = vadd.f32 %v3662, %v3798
        %v3923 = vadd.f32 %v3663, %v3798
        %v3924 = vadd.f32 %v3664, %v3798
        %v3925 = vadd.f32 %v3665, %v3798
        %v3926 = vadd.f32 %v3666, %v3798
        %v3927 = vadd.f32 %v3667, %v3798
        %v3928 = vadd.f32 %v3668, %v3798
        %v3929 = vadd.f32 %v3669, %v3798
        %v3930 = vadd.f32 %v3670, %v3798
        %v3931 = vadd.f32 %v3671, %v3798
        %v3932 = vadd.f32 %v3672, %v3798
        %v3933 = vadd.f32 %v3673, %v3798
        %v3934 = vadd.f32 %v3674, %v3798
        %v3935 = vadd.f32 %v3675, %v3798
        %v3936 = vadd.f32 %v3676, %v3798
        %v3937 = vadd.f32 %v3677, %v3798
        %v3938 = vadd.f32 %v3678, %v3798
        %v3939 = vadd.f32 %v3679, %v3798
        %v3940 = vadd.f32 %v3680, %v3798
        %v3941 = vadd.f32 %v3681, %v3798
        %v3942 = vadd.f32 %v3682, %v3798
        %v3943 = vadd.f32 %v3683, %v3798
        %v3944 = vadd.f32 %v3684, %v3798
        %v3945 = vadd.f32 %v3685, %v3798
        %v3946 = vadd.f32 %v3686, %v3798
        %v3947 = vadd.f32 %v3687, %v3798
        %v3948 = vadd.f32 %v3688, %v3798
        %v3949 = vadd.f32 %v3689, %v3798
        %v3950 = vadd.f32 %v3690, %v3798
        %v3951 = vadd.f32 %v3691, %v3798
        %v3952 = vadd.f32 %v3692, %v3798
        %v3953 = vadd.f32 %v3693, %v3798
        %v3954 = vadd.f32 %v3694, %v3798
        %v3955 = vadd.f32 %v3695, %v3798
        %v3956 = vadd.f32 %v3696, %v3798
        %v3957 = vadd.f32 %v3697, %v3798
        %v3958 = vadd.f32 %v3698, %v3798
        %v3959 = vadd.f32 %v3699, %v3798
        %v3960 = vadd.f32 %v3700, %v3798
        %v3961 = vadd.f32 %v3701, %v3798
        %v3962 = vadd.f32 %v3702, %v3798
        %v3963 = vadd.f32 %v3703, %v3798
        %v3964 = vadd.f32 %v3704, %v3798
        %v3965 = vadd.f32 %v3705, %v3798
        %v3966 = vadd.f32 %v3706, %v3798
        %v3967 = vadd.f32 %v3707, %v3798
        %v3968 = vadd.f32 %v3708, %v3798
        %v3969 = vadd.f32 %v3709, %v3798
        %v3970 = vadd.f32 %v3710, %v3798
        %v3971 = vadd.f32 %v3711, %v3798
        %v3972 = vadd.f32 %v3712, %v3798
        %v3973 = vadd.f32 %v3713, %v3798
        %v3974 = vadd.f32 %v3714, %v3798
        %v3975 = vadd.f32 %v3715, %v3798
        %v3976 = vadd.f32 %v3716, %v3798
        %v3977 = vadd.f32 %v3717, %v3798
        %v3978 = vadd.f32 %v3718, %v3798
        %v3979 = vadd.f32 %v3719, %v3798
        %v3980 = vadd.f32 %v3720, %v3798
        %v3981 = vadd.f32 %v3721, %v3798
        %v3982 = vadd.f32 %v3722, %v3798
        %v3983 = vadd.f32 %v3723, %v3798
        %v3984 = vadd.f32 %v3724, %v3798
        %v3985 = vadd.f32 %v3725, %v3798
        %v3986 = vadd.f32 %v3726, %v3798
        %v3987 = vadd.f32 %v3727, %v3798
        %v3988 = vadd.f32 %v3728, %v3798
        %v3989 = vadd.f32 %v3729, %v3798
        %v3990 = vadd.f32 %v3730, %v3798
        %v3991 = vadd.f32 %v3731, %v3798
        %v3992 = vadd.f32 %v3732, %v3798
        %v3993 = vadd.f32 %v3733, %v3798
        %v3994 = vadd.f32 %v3734, %v3798
        %v3995 = vadd.f32 %v3735, %v3798
        %v3996 = vadd.f32 %v3736, %v3798
        %v3997 = vadd.f32 %v3737, %v3798
        %v3998 = vadd.f32 %v3738, %v3798
        %v3999 = vadd.f32 %v3739, %v3798
        %v4000 = vadd.f32 %v3740, %v3798
        %v4001 = vadd.f32 %v3741, %v3798
        %v4002 = vadd.f32 %v3742, %v3798
        %v4003 = vadd.f32 %v3743, %v3798
        %v4004 = vadd.f32 %v3744, %v3798
        %v4005 = vadd.f32 %v3745, %v3798
        %v4006 = vadd.f32 %v3746, %v3798
        %v4007 = vadd.f32 %v3747, %v3798
        %v4008 = vadd.f32 %v3748, %v3798
        %v4009 = vadd.f32 %v3749, %v3798
        %v4010 = vadd.f32 %v3750, %v3798
        %v4011 = vadd.f32 %v3751, %v3798
        %v4012 = vadd.f32 %v3752, %v3798
        %v4013 = vadd.f32 %v3753, %v3798
        %v4014 = vadd.f32 %v3754, %v3798
        %v4015 = vadd.f32 %v3755, %v3798
        %v4016 = vadd.f32 %v3756, %v3798
        %v4017 = vadd.f32 %v3757, %v3798
        %v4018 = vadd.f32 %v3758, %v3798
        %v4019 = vadd.f32 %v3759, %v3798
        %v4020 = vadd.f32 %v3760, %v3798
        %v4021 = vadd.f32 %v3761, %v3798
        %v4022 = vadd.f32 %v3762, %v3798
        %v4023 = vadd.f32 %v3763, %v3798
        %v4024 = vadd.f32 %v3764, %v3798
        %v4025 = vadd.f32 %v3765, %v3798
        %v4026 = vadd.f32 %v3766, %v3798
        %v4027 = vadd.f32 %v3767, %v3798
        %v4028 = vadd.f32 %v3768, %v3798
        %v4029 = vadd.f32 %v3769, %v3798
        %v4030 = vadd.f32 %v3770, %v3798
        %v4031 = vadd.f32 %v3771, %v3798
        %v4032 = vadd.f32 %v3772, %v3798
        %v4033 = vadd.f32 %v3773, %v3798
        %v4034 = vadd.f32 %v3774, %v3798
        %v4035 = vadd.f32 %v3775, %v3798
        %v4036 = vadd.f32 %v3776, %v3798
        %v4037 = vadd.f32 %v3777, %v3798
        %v4038 = vadd.f32 %v3778, %v3798
        %v4039 = vadd.f32 %v3779, %v3798
        %v4040 = vadd.f32 %v3780, %v3798
        %v4041 = vadd.f32 %v3781, %v3798
        %v4042 = vadd.f32 %v3782, %v3798
        %v4043 = vadd.f32 %v3783, %v3798
        %v4044 = vadd.f32 %v3784, %v3798
        %v4045 = vadd.f32 %v3785, %v3798
        %v4046 = vadd.f32 %v3786, %v3798
        %v4047 = vadd.f32 %v3787, %v3798
        %v4048 = vadd.f32 %v3788, %v3798
        %v4049 = vadd.f32 %v3789, %v3798
        %v4050 = vadd.f32 %v3790, %v3798
        %v4051 = vadd.f32 %v3791, %v3798
        %v4052 = vadd.f32 %v3792, %v3798
        %v4053 = vadd.f32 %v3793, %v3798
        %v4054 = vadd.f32 %v3794, %v3798
        %v4055 = vadd.f32 %v3795, %v3798
        %v4056 = vmax.f32 %v3800, 0.0
        %v4057 = vmax.f32 %v3801, 0.0
        %v4058 = vmax.f32 %v3802, 0.0
        %v4059 = vmax.f32 %v3803, 0.0
        %v4060 = vmax.f32 %v3804, 0.0
        %v4061 = vmax.f32 %v3805, 0.0
        %v4062 = vmax.f32 %v3806, 0.0
        %v4063 = vmax.f32 %v3807, 0.0
        %v4064 = vmax.f32 %v3808, 0.0
        %v4065 = vmax.f32 %v3809, 0.0
        %v4066 = vmax.f32 %v3810, 0.0
        %v4067 = vmax.f32 %v3811, 0.0
        %v4068 = vmax.f32 %v3812, 0.0
        %v4069 = vmax.f32 %v3813, 0.0
        %v4070 = vmax.f32 %v3814, 0.0
        %v4071 = vmax.f32 %v3815, 0.0
        %v4072 = vmax.f32 %v3816, 0.0
        %v4073 = vmax.f32 %v3817, 0.0
        %v4074 = vmax.f32 %v3818, 0.0
        %v4075 = vmax.f32 %v3819, 0.0
        %v4076 = vmax.f32 %v3820, 0.0
        %v4077 = vmax.f32 %v3821, 0.0
        %v4078 = vmax.f32 %v3822, 0.0
        %v4079 = vmax.f32 %v3823, 0.0
        %v4080 = vmax.f32 %v3824, 0.0
        %v4081 = vmax.f32 %v3825, 0.0
        %v4082 = vmax.f32 %v3826, 0.0
        %v4083 = vmax.f32 %v3827, 0.0
        %v4084 = vmax.f32 %v3828, 0.0
        %v4085 = vmax.f32 %v3829, 0.0
        %v4086 = vmax.f32 %v3830, 0.0
        %v4087 = vmax.f32 %v3831, 0.0
        %v4088 = vmax.f32 %v3832, 0.0
        %v4089 = vmax.f32 %v3833, 0.0
        %v4090 = vmax.f32 %v3834, 0.0
        %v4091 = vmax.f32 %v3835, 0.0
        %v4092 = vmax.f32 %v3836, 0.0
        %v4093 = vmax.f32 %v3837, 0.0
        %v4094 = vmax.f32 %v3838, 0.0
        %v4095 = vmax.f32 %v3839, 0.0
        %v4096 = vmax.f32 %v3840, 0.0
        %v4097 = vmax.f32 %v3841, 0.0
        %v4098 = vmax.f32 %v3842, 0.0
        %v4099 = vmax.f32 %v3843, 0.0
        %v4100 = vmax.f32 %v3844, 0.0
        %v4101 = vmax.f32 %v3845, 0.0
        %v4102 = vmax.f32 %v3846, 0.0
        %v4103 = vmax.f32 %v3847, 0.0
        %v4104 = vmax.f32 %v3848, 0.0
        %v4105 = vmax.f32 %v3849, 0.0
        %v4106 = vmax.f32 %v3850, 0.0
        %v4107 = vmax.f32 %v3851, 0.0
        %v4108 = vmax.f32 %v3852, 0.0
        %v4109 = vmax.f32 %v3853, 0.0
        %v4110 = vmax.f32 %v3854, 0.0
        %v4111 = vmax.f32 %v3855, 0.0
        %v4112 = vmax.f32 %v3856, 0.0
        %v4113 = vmax.f32 %v3857, 0.0
        %v4114 = vmax.f32 %v3858, 0.0
        %v4115 = vmax.f32 %v3859, 0.0
        %v4116 = vmax.f32 %v3860, 0.0
        %v4117 = vmax.f32 %v3861, 0.0
        %v4118 = vmax.f32 %v3862, 0.0
        %v4119 = vmax.f32 %v3863, 0.0
        %v4120 = vmax.f32 %v3864, 0.0
        %v4121 = vmax.f32 %v3865, 0.0
        %v4122 = vmax.f32 %v3866, 0.0
        %v4123 = vmax.f32 %v3867, 0.0
        %v4124 = vmax.f32 %v3868, 0.0
        %v4125 = vmax.f32 %v3869, 0.0
        %v4126 = vmax.f32 %v3870, 0.0
        %v4127 = vmax.f32 %v3871, 0.0
        %v4128 = vmax.f32 %v3872, 0.0
        %v4129 = vmax.f32 %v3873, 0.0
        %v4130 = vmax.f32 %v3874, 0.0
        %v4131 = vmax.f32 %v3875, 0.0
        %v4132 = vmax.f32 %v3876, 0.0
        %v4133 = vmax.f32 %v3877, 0.0
        %v4134 = vmax.f32 %v3878, 0.0
        %v4135 = vmax.f32 %v3879, 0.0
        %v4136 = vmax.f32 %v3880, 0.0
        %v4137 = vmax.f32 %v3881, 0.0
        %v4138 = vmax.f32 %v3882, 0.0
        %v4139 = vmax.f32 %v3883, 0.0
        %v4140 = vmax.f32 %v3884, 0.0
        %v4141 = vmax.f32 %v3885, 0.0
        %v4142 = vmax.f32 %v3886, 0.0
        %v4143 = vmax.f32 %v3887, 0.0
        %v4144 = vmax.f32 %v3888, 0.0
        %v4145 = vmax.f32 %v3889, 0.0
        %v4146 = vmax.f32 %v3890, 0.0
        %v4147 = vmax.f32 %v3891, 0.0
        %v4148 = vmax.f32 %v3892, 0.0
        %v4149 = vmax.f32 %v3893, 0.0
        %v4150 = vmax.f32 %v3894, 0.0
        %v4151 = vmax.f32 %v3895, 0.0
        %v4152 = vmax.f32 %v3896, 0.0
        %v4153 = vmax.f32 %v3897, 0.0
        %v4154 = vmax.f32 %v3898, 0.0
        %v4155 = vmax.f32 %v3899, 0.0
        %v4156 = vmax.f32 %v3900, 0.0
        %v4157 = vmax.f32 %v3901, 0.0
        %v4158 = vmax.f32 %v3902, 0.0
        %v4159 = vmax.f32 %v3903, 0.0
        %v4160 = vmax.f32 %v3904, 0.0
        %v4161 = vmax.f32 %v3905, 0.0
        %v4162 = vmax.f32 %v3906, 0.0
        %v4163 = vmax.f32 %v3907, 0.0
        %v4164 = vmax.f32 %v3908, 0.0
        %v4165 = vmax.f32 %v3909, 0.0
        %v4166 = vmax.f32 %v3910, 0.0
        %v4167 = vmax.f32 %v3911, 0.0
        %v4168 = vmax.f32 %v3912, 0.0
        %v4169 = vmax.f32 %v3913, 0.0
        %v4170 = vmax.f32 %v3914, 0.0
        %v4171 = vmax.f32 %v3915, 0.0
        %v4172 = vmax.f32 %v3916, 0.0
        %v4173 = vmax.f32 %v3917, 0.0
        %v4174 = vmax.f32 %v3918, 0.0
        %v4175 = vmax.f32 %v3919, 0.0
        %v4176 = vmax.f32 %v3920, 0.0
        %v4177 = vmax.f32 %v3921, 0.0
        %v4178 = vmax.f32 %v3922, 0.0
        %v4179 = vmax.f32 %v3923, 0.0
        %v4180 = vmax.f32 %v3924, 0.0
        %v4181 = vmax.f32 %v3925, 0.0
        %v4182 = vmax.f32 %v3926, 0.0
        %v4183 = vmax.f32 %v3927, 0.0
        %v4184 = vmax.f32 %v3928, 0.0
        %v4185 = vmax.f32 %v3929, 0.0
        %v4186 = vmax.f32 %v3930, 0.0
        %v4187 = vmax.f32 %v3931, 0.0
        %v4188 = vmax.f32 %v3932, 0.0
        %v4189 = vmax.f32 %v3933, 0.0
        %v4190 = vmax.f32 %v3934, 0.0
        %v4191 = vmax.f32 %v3935, 0.0
        %v4192 = vmax.f32 %v3936, 0.0
        %v4193 = vmax.f32 %v3937, 0.0
        %v4194 = vmax.f32 %v3938, 0.0
        %v4195 = vmax.f32 %v3939, 0.0
        %v4196 = vmax.f32 %v3940, 0.0
        %v4197 = vmax.f32 %v3941, 0.0
        %v4198 = vmax.f32 %v3942, 0.0
        %v4199 = vmax.f32 %v3943, 0.0
        %v4200 = vmax.f32 %v3944, 0.0
        %v4201 = vmax.f32 %v3945, 0.0
        %v4202 = vmax.f32 %v3946, 0.0
        %v4203 = vmax.f32 %v3947, 0.0
        %v4204 = vmax.f32 %v3948, 0.0
        %v4205 = vmax.f32 %v3949, 0.0
        %v4206 = vmax.f32 %v3950, 0.0
        %v4207 = vmax.f32 %v3951, 0.0
        %v4208 = vmax.f32 %v3952, 0.0
        %v4209 = vmax.f32 %v3953, 0.0
        %v4210 = vmax.f32 %v3954, 0.0
        %v4211 = vmax.f32 %v3955, 0.0
        %v4212 = vmax.f32 %v3956, 0.0
        %v4213 = vmax.f32 %v3957, 0.0
        %v4214 = vmax.f32 %v3958, 0.0
        %v4215 = vmax.f32 %v3959, 0.0
        %v4216 = vmax.f32 %v3960, 0.0
        %v4217 = vmax.f32 %v3961, 0.0
        %v4218 = vmax.f32 %v3962, 0.0
        %v4219 = vmax.f32 %v3963, 0.0
        %v4220 = vmax.f32 %v3964, 0.0
        %v4221 = vmax.f32 %v3965, 0.0
        %v4222 = vmax.f32 %v3966, 0.0
        %v4223 = vmax.f32 %v3967, 0.0
        %v4224 = vmax.f32 %v3968, 0.0
        %v4225 = vmax.f32 %v3969, 0.0
        %v4226 = vmax.f32 %v3970, 0.0
        %v4227 = vmax.f32 %v3971, 0.0
        %v4228 = vmax.f32 %v3972, 0.0
        %v4229 = vmax.f32 %v3973, 0.0
        %v4230 = vmax.f32 %v3974, 0.0
        %v4231 = vmax.f32 %v3975, 0.0
        %v4232 = vmax.f32 %v3976, 0.0
        %v4233 = vmax.f32 %v3977, 0.0
        %v4234 = vmax.f32 %v3978, 0.0
        %v4235 = vmax.f32 %v3979, 0.0
        %v4236 = vmax.f32 %v3980, 0.0
        %v4237 = vmax.f32 %v3981, 0.0
        %v4238 = vmax.f32 %v3982, 0.0
        %v4239 = vmax.f32 %v3983, 0.0
        %v4240 = vmax.f32 %v3984, 0.0
        %v4241 = vmax.f32 %v3985, 0.0
        %v4242 = vmax.f32 %v3986, 0.0
        %v4243 = vmax.f32 %v3987, 0.0
        %v4244 = vmax.f32 %v3988, 0.0
        %v4245 = vmax.f32 %v3989, 0.0
        %v4246 = vmax.f32 %v3990, 0.0
        %v4247 = vmax.f32 %v3991, 0.0
        %v4248 = vmax.f32 %v3992, 0.0
        %v4249 = vmax.f32 %v3993, 0.0
        %v4250 = vmax.f32 %v3994, 0.0
        %v4251 = vmax.f32 %v3995, 0.0
        %v4252 = vmax.f32 %v3996, 0.0
        %v4253 = vmax.f32 %v3997, 0.0
        %v4254 = vmax.f32 %v3998, 0.0
        %v4255 = vmax.f32 %v3999, 0.0
        %v4256 = vmax.f32 %v4000, 0.0
        %v4257 = vmax.f32 %v4001, 0.0
        %v4258 = vmax.f32 %v4002, 0.0
        %v4259 = vmax.f32 %v4003, 0.0
        %v4260 = vmax.f32 %v4004, 0.0
        %v4261 = vmax.f32 %v4005, 0.0
        %v4262 = vmax.f32 %v4006, 0.0
        %v4263 = vmax.f32 %v4007, 0.0
        %v4264 = vmax.f32 %v4008, 0.0
        %v4265 = vmax.f32 %v4009, 0.0
        %v4266 = vmax.f32 %v4010, 0.0
        %v4267 = vmax.f32 %v4011, 0.0
        %v4268 = vmax.f32 %v4012, 0.0
        %v4269 = vmax.f32 %v4013, 0.0
        %v4270 = vmax.f32 %v4014, 0.0
        %v4271 = vmax.f32 %v4015, 0.0
        %v4272 = vmax.f32 %v4016, 0.0
        %v4273 = vmax.f32 %v4017, 0.0
        %v4274 = vmax.f32 %v4018, 0.0
        %v4275 = vmax.f32 %v4019, 0.0
        %v4276 = vmax.f32 %v4020, 0.0
        %v4277 = vmax.f32 %v4021, 0.0
        %v4278 = vmax.f32 %v4022, 0.0
        %v4279 = vmax.f32 %v4023, 0.0
        %v4280 = vmax.f32 %v4024, 0.0
        %v4281 = vmax.f32 %v4025, 0.0
        %v4282 = vmax.f32 %v4026, 0.0
        %v4283 = vmax.f32 %v4027, 0.0
        %v4284 = vmax.f32 %v4028, 0.0
        %v4285 = vmax.f32 %v4029, 0.0
        %v4286 = vmax.f32 %v4030, 0.0
        %v4287 = vmax.f32 %v4031, 0.0
        %v4288 = vmax.f32 %v4032, 0.0
        %v4289 = vmax.f32 %v4033, 0.0
        %v4290 = vmax.f32 %v4034, 0.0
        %v4291 = vmax.f32 %v4035, 0.0
        %v4292 = vmax.f32 %v4036, 0.0
        %v4293 = vmax.f32 %v4037, 0.0
        %v4294 = vmax.f32 %v4038, 0.0
        %v4295 = vmax.f32 %v4039, 0.0
        %v4296 = vmax.f32 %v4040, 0.0
        %v4297 = vmax.f32 %v4041, 0.0
        %v4298 = vmax.f32 %v4042, 0.0
        %v4299 = vmax.f32 %v4043, 0.0
        %v4300 = vmax.f32 %v4044, 0.0
        %v4301 = vmax.f32 %v4045, 0.0
        %v4302 = vmax.f32 %v4046, 0.0
        %v4303 = vmax.f32 %v4047, 0.0
        %v4304 = vmax.f32 %v4048, 0.0
        %v4305 = vmax.f32 %v4049, 0.0
        %v4306 = vmax.f32 %v4050, 0.0
        %v4307 = vmax.f32 %v4051, 0.0
        %v4308 = vmax.f32 %v4052, 0.0
        %v4309 = vmax.f32 %v4053, 0.0
        %v4310 = vmax.f32 %v4054, 0.0
        %v4311 = vmax.f32 %v4055, 0.0
        %v4312 = vpack.c.bf16 %v4056, %v4056
        %v4313 = vpack.c.bf16 %v4057, %v4057
        %v4314 = vpack.c.bf16 %v4058, %v4058
        %v4315 = vpack.c.bf16 %v4059, %v4059
        %v4316 = vpack.c.bf16 %v4060, %v4060
        %v4317 = vpack.c.bf16 %v4061, %v4061
        %v4318 = vpack.c.bf16 %v4062, %v4062
        %v4319 = vpack.c.bf16 %v4063, %v4063
        %v4320 = vpack.c.bf16 %v4064, %v4064
        %v4321 = vpack.c.bf16 %v4065, %v4065
        %v4322 = vpack.c.bf16 %v4066, %v4066
        %v4323 = vpack.c.bf16 %v4067, %v4067
        %v4324 = vpack.c.bf16 %v4068, %v4068
        %v4325 = vpack.c.bf16 %v4069, %v4069
        %v4326 = vpack.c.bf16 %v4070, %v4070
        %v4327 = vpack.c.bf16 %v4071, %v4071
        %v4328 = vpack.c.bf16 %v4072, %v4072
        %v4329 = vpack.c.bf16 %v4073, %v4073
        %v4330 = vpack.c.bf16 %v4074, %v4074
        %v4331 = vpack.c.bf16 %v4075, %v4075
        %v4332 = vpack.c.bf16 %v4076, %v4076
        %v4333 = vpack.c.bf16 %v4077, %v4077
        %v4334 = vpack.c.bf16 %v4078, %v4078
        %v4335 = vpack.c.bf16 %v4079, %v4079
        %v4336 = vpack.c.bf16 %v4080, %v4080
        %v4337 = vpack.c.bf16 %v4081, %v4081
        %v4338 = vpack.c.bf16 %v4082, %v4082
        %v4339 = vpack.c.bf16 %v4083, %v4083
        %v4340 = vpack.c.bf16 %v4084, %v4084
        %v4341 = vpack.c.bf16 %v4085, %v4085
        %v4342 = vpack.c.bf16 %v4086, %v4086
        %v4343 = vpack.c.bf16 %v4087, %v4087
        %v4344 = vpack.c.bf16 %v4088, %v4088
        %v4345 = vpack.c.bf16 %v4089, %v4089
        %v4346 = vpack.c.bf16 %v4090, %v4090
        %v4347 = vpack.c.bf16 %v4091, %v4091
        %v4348 = vpack.c.bf16 %v4092, %v4092
        %v4349 = vpack.c.bf16 %v4093, %v4093
        %v4350 = vpack.c.bf16 %v4094, %v4094
        %v4351 = vpack.c.bf16 %v4095, %v4095
        %v4352 = vpack.c.bf16 %v4096, %v4096
        %v4353 = vpack.c.bf16 %v4097, %v4097
        %v4354 = vpack.c.bf16 %v4098, %v4098
        %v4355 = vpack.c.bf16 %v4099, %v4099
        %v4356 = vpack.c.bf16 %v4100, %v4100
        %v4357 = vpack.c.bf16 %v4101, %v4101
        %v4358 = vpack.c.bf16 %v4102, %v4102
        %v4359 = vpack.c.bf16 %v4103, %v4103
        %v4360 = vpack.c.bf16 %v4104, %v4104
        %v4361 = vpack.c.bf16 %v4105, %v4105
        %v4362 = vpack.c.bf16 %v4106, %v4106
        %v4363 = vpack.c.bf16 %v4107, %v4107
        %v4364 = vpack.c.bf16 %v4108, %v4108
        %v4365 = vpack.c.bf16 %v4109, %v4109
        %v4366 = vpack.c.bf16 %v4110, %v4110
        %v4367 = vpack.c.bf16 %v4111, %v4111
        %v4368 = vpack.c.bf16 %v4112, %v4112
        %v4369 = vpack.c.bf16 %v4113, %v4113
        %v4370 = vpack.c.bf16 %v4114, %v4114
        %v4371 = vpack.c.bf16 %v4115, %v4115
        %v4372 = vpack.c.bf16 %v4116, %v4116
        %v4373 = vpack.c.bf16 %v4117, %v4117
        %v4374 = vpack.c.bf16 %v4118, %v4118
        %v4375 = vpack.c.bf16 %v4119, %v4119
        %v4376 = vpack.c.bf16 %v4120, %v4120
        %v4377 = vpack.c.bf16 %v4121, %v4121
        %v4378 = vpack.c.bf16 %v4122, %v4122
        %v4379 = vpack.c.bf16 %v4123, %v4123
        %v4380 = vpack.c.bf16 %v4124, %v4124
        %v4381 = vpack.c.bf16 %v4125, %v4125
        %v4382 = vpack.c.bf16 %v4126, %v4126
        %v4383 = vpack.c.bf16 %v4127, %v4127
        %v4384 = vpack.c.bf16 %v4128, %v4128
        %v4385 = vpack.c.bf16 %v4129, %v4129
        %v4386 = vpack.c.bf16 %v4130, %v4130
        %v4387 = vpack.c.bf16 %v4131, %v4131
        %v4388 = vpack.c.bf16 %v4132, %v4132
        %v4389 = vpack.c.bf16 %v4133, %v4133
        %v4390 = vpack.c.bf16 %v4134, %v4134
        %v4391 = vpack.c.bf16 %v4135, %v4135
        %v4392 = vpack.c.bf16 %v4136, %v4136
        %v4393 = vpack.c.bf16 %v4137, %v4137
        %v4394 = vpack.c.bf16 %v4138, %v4138
        %v4395 = vpack.c.bf16 %v4139, %v4139
        %v4396 = vpack.c.bf16 %v4140, %v4140
        %v4397 = vpack.c.bf16 %v4141, %v4141
        %v4398 = vpack.c.bf16 %v4142, %v4142
        %v4399 = vpack.c.bf16 %v4143, %v4143
        %v4400 = vpack.c.bf16 %v4144, %v4144
        %v4401 = vpack.c.bf16 %v4145, %v4145
        %v4402 = vpack.c.bf16 %v4146, %v4146
        %v4403 = vpack.c.bf16 %v4147, %v4147
        %v4404 = vpack.c.bf16 %v4148, %v4148
        %v4405 = vpack.c.bf16 %v4149, %v4149
        %v4406 = vpack.c.bf16 %v4150, %v4150
        %v4407 = vpack.c.bf16 %v4151, %v4151
        %v4408 = vpack.c.bf16 %v4152, %v4152
        %v4409 = vpack.c.bf16 %v4153, %v4153
        %v4410 = vpack.c.bf16 %v4154, %v4154
        %v4411 = vpack.c.bf16 %v4155, %v4155
        %v4412 = vpack.c.bf16 %v4156, %v4156
        %v4413 = vpack.c.bf16 %v4157, %v4157
        %v4414 = vpack.c.bf16 %v4158, %v4158
        %v4415 = vpack.c.bf16 %v4159, %v4159
        %v4416 = vpack.c.bf16 %v4160, %v4160
        %v4417 = vpack.c.bf16 %v4161, %v4161
        %v4418 = vpack.c.bf16 %v4162, %v4162
        %v4419 = vpack.c.bf16 %v4163, %v4163
        %v4420 = vpack.c.bf16 %v4164, %v4164
        %v4421 = vpack.c.bf16 %v4165, %v4165
        %v4422 = vpack.c.bf16 %v4166, %v4166
        %v4423 = vpack.c.bf16 %v4167, %v4167
        %v4424 = vpack.c.bf16 %v4168, %v4168
        %v4425 = vpack.c.bf16 %v4169, %v4169
        %v4426 = vpack.c.bf16 %v4170, %v4170
        %v4427 = vpack.c.bf16 %v4171, %v4171
        %v4428 = vpack.c.bf16 %v4172, %v4172
        %v4429 = vpack.c.bf16 %v4173, %v4173
        %v4430 = vpack.c.bf16 %v4174, %v4174
        %v4431 = vpack.c.bf16 %v4175, %v4175
        %v4432 = vpack.c.bf16 %v4176, %v4176
        %v4433 = vpack.c.bf16 %v4177, %v4177
        %v4434 = vpack.c.bf16 %v4178, %v4178
        %v4435 = vpack.c.bf16 %v4179, %v4179
        %v4436 = vpack.c.bf16 %v4180, %v4180
        %v4437 = vpack.c.bf16 %v4181, %v4181
        %v4438 = vpack.c.bf16 %v4182, %v4182
        %v4439 = vpack.c.bf16 %v4183, %v4183
        %v4440 = vpack.c.bf16 %v4184, %v4184
        %v4441 = vpack.c.bf16 %v4185, %v4185
        %v4442 = vpack.c.bf16 %v4186, %v4186
        %v4443 = vpack.c.bf16 %v4187, %v4187
        %v4444 = vpack.c.bf16 %v4188, %v4188
        %v4445 = vpack.c.bf16 %v4189, %v4189
        %v4446 = vpack.c.bf16 %v4190, %v4190
        %v4447 = vpack.c.bf16 %v4191, %v4191
        %v4448 = vpack.c.bf16 %v4192, %v4192
        %v4449 = vpack.c.bf16 %v4193, %v4193
        %v4450 = vpack.c.bf16 %v4194, %v4194
        %v4451 = vpack.c.bf16 %v4195, %v4195
        %v4452 = vpack.c.bf16 %v4196, %v4196
        %v4453 = vpack.c.bf16 %v4197, %v4197
        %v4454 = vpack.c.bf16 %v4198, %v4198
        %v4455 = vpack.c.bf16 %v4199, %v4199
        %v4456 = vpack.c.bf16 %v4200, %v4200
        %v4457 = vpack.c.bf16 %v4201, %v4201
        %v4458 = vpack.c.bf16 %v4202, %v4202
        %v4459 = vpack.c.bf16 %v4203, %v4203
        %v4460 = vpack.c.bf16 %v4204, %v4204
        %v4461 = vpack.c.bf16 %v4205, %v4205
        %v4462 = vpack.c.bf16 %v4206, %v4206
        %v4463 = vpack.c.bf16 %v4207, %v4207
        %v4464 = vpack.c.bf16 %v4208, %v4208
        %v4465 = vpack.c.bf16 %v4209, %v4209
        %v4466 = vpack.c.bf16 %v4210, %v4210
        %v4467 = vpack.c.bf16 %v4211, %v4211
        %v4468 = vpack.c.bf16 %v4212, %v4212
        %v4469 = vpack.c.bf16 %v4213, %v4213
        %v4470 = vpack.c.bf16 %v4214, %v4214
        %v4471 = vpack.c.bf16 %v4215, %v4215
        %v4472 = vpack.c.bf16 %v4216, %v4216
        %v4473 = vpack.c.bf16 %v4217, %v4217
        %v4474 = vpack.c.bf16 %v4218, %v4218
        %v4475 = vpack.c.bf16 %v4219, %v4219
        %v4476 = vpack.c.bf16 %v4220, %v4220
        %v4477 = vpack.c.bf16 %v4221, %v4221
        %v4478 = vpack.c.bf16 %v4222, %v4222
        %v4479 = vpack.c.bf16 %v4223, %v4223
        %v4480 = vpack.c.bf16 %v4224, %v4224
        %v4481 = vpack.c.bf16 %v4225, %v4225
        %v4482 = vpack.c.bf16 %v4226, %v4226
        %v4483 = vpack.c.bf16 %v4227, %v4227
        %v4484 = vpack.c.bf16 %v4228, %v4228
        %v4485 = vpack.c.bf16 %v4229, %v4229
        %v4486 = vpack.c.bf16 %v4230, %v4230
        %v4487 = vpack.c.bf16 %v4231, %v4231
        %v4488 = vpack.c.bf16 %v4232, %v4232
        %v4489 = vpack.c.bf16 %v4233, %v4233
        %v4490 = vpack.c.bf16 %v4234, %v4234
        %v4491 = vpack.c.bf16 %v4235, %v4235
        %v4492 = vpack.c.bf16 %v4236, %v4236
        %v4493 = vpack.c.bf16 %v4237, %v4237
        %v4494 = vpack.c.bf16 %v4238, %v4238
        %v4495 = vpack.c.bf16 %v4239, %v4239
        %v4496 = vpack.c.bf16 %v4240, %v4240
        %v4497 = vpack.c.bf16 %v4241, %v4241
        %v4498 = vpack.c.bf16 %v4242, %v4242
        %v4499 = vpack.c.bf16 %v4243, %v4243
        %v4500 = vpack.c.bf16 %v4244, %v4244
        %v4501 = vpack.c.bf16 %v4245, %v4245
        %v4502 = vpack.c.bf16 %v4246, %v4246
        %v4503 = vpack.c.bf16 %v4247, %v4247
        %v4504 = vpack.c.bf16 %v4248, %v4248
        %v4505 = vpack.c.bf16 %v4249, %v4249
        %v4506 = vpack.c.bf16 %v4250, %v4250
        %v4507 = vpack.c.bf16 %v4251, %v4251
        %v4508 = vpack.c.bf16 %v4252, %v4252
        %v4509 = vpack.c.bf16 %v4253, %v4253
        %v4510 = vpack.c.bf16 %v4254, %v4254
        %v4511 = vpack.c.bf16 %v4255, %v4255
        %v4512 = vpack.c.bf16 %v4256, %v4256
        %v4513 = vpack.c.bf16 %v4257, %v4257
        %v4514 = vpack.c.bf16 %v4258, %v4258
        %v4515 = vpack.c.bf16 %v4259, %v4259
        %v4516 = vpack.c.bf16 %v4260, %v4260
        %v4517 = vpack.c.bf16 %v4261, %v4261
        %v4518 = vpack.c.bf16 %v4262, %v4262
        %v4519 = vpack.c.bf16 %v4263, %v4263
        %v4520 = vpack.c.bf16 %v4264, %v4264
        %v4521 = vpack.c.bf16 %v4265, %v4265
        %v4522 = vpack.c.bf16 %v4266, %v4266
        %v4523 = vpack.c.bf16 %v4267, %v4267
        %v4524 = vpack.c.bf16 %v4268, %v4268
        %v4525 = vpack.c.bf16 %v4269, %v4269
        %v4526 = vpack.c.bf16 %v4270, %v4270
        %v4527 = vpack.c.bf16 %v4271, %v4271
        %v4528 = vpack.c.bf16 %v4272, %v4272
        %v4529 = vpack.c.bf16 %v4273, %v4273
        %v4530 = vpack.c.bf16 %v4274, %v4274
        %v4531 = vpack.c.bf16 %v4275, %v4275
        %v4532 = vpack.c.bf16 %v4276, %v4276
        %v4533 = vpack.c.bf16 %v4277, %v4277
        %v4534 = vpack.c.bf16 %v4278, %v4278
        %v4535 = vpack.c.bf16 %v4279, %v4279
        %v4536 = vpack.c.bf16 %v4280, %v4280
        %v4537 = vpack.c.bf16 %v4281, %v4281
        %v4538 = vpack.c.bf16 %v4282, %v4282
        %v4539 = vpack.c.bf16 %v4283, %v4283
        %v4540 = vpack.c.bf16 %v4284, %v4284
        %v4541 = vpack.c.bf16 %v4285, %v4285
        %v4542 = vpack.c.bf16 %v4286, %v4286
        %v4543 = vpack.c.bf16 %v4287, %v4287
        %v4544 = vpack.c.bf16 %v4288, %v4288
        %v4545 = vpack.c.bf16 %v4289, %v4289
        %v4546 = vpack.c.bf16 %v4290, %v4290
        %v4547 = vpack.c.bf16 %v4291, %v4291
        %v4548 = vpack.c.bf16 %v4292, %v4292
        %v4549 = vpack.c.bf16 %v4293, %v4293
        %v4550 = vpack.c.bf16 %v4294, %v4294
        %v4551 = vpack.c.bf16 %v4295, %v4295
        %v4552 = vpack.c.bf16 %v4296, %v4296
        %v4553 = vpack.c.bf16 %v4297, %v4297
        %v4554 = vpack.c.bf16 %v4298, %v4298
        %v4555 = vpack.c.bf16 %v4299, %v4299
        %v4556 = vpack.c.bf16 %v4300, %v4300
        %v4557 = vpack.c.bf16 %v4301, %v4301
        %v4558 = vpack.c.bf16 %v4302, %v4302
        %v4559 = vpack.c.bf16 %v4303, %v4303
        %v4560 = vpack.c.bf16 %v4304, %v4304
        %v4561 = vpack.c.bf16 %v4305, %v4305
        %v4562 = vpack.c.bf16 %v4306, %v4306
        %v4563 = vpack.c.bf16 %v4307, %v4307
        %v4564 = vpack.c.bf16 %v4308, %v4308
        %v4565 = vpack.c.bf16 %v4309, %v4309
        %v4566 = vpack.c.bf16 %v4310, %v4310
        %v4567 = vpack.c.bf16 %v4311, %v4311
        %vm4568 = vcmask 125952
        %4569 = vst.msk [vmem:[%s298] sm:$0xf] %vm4568, %v4312
        %4570 = vst.msk [vmem:[%s298 + $0x4] sm:$0xf] %vm4568, %v4313
        %4571 = vst.msk [vmem:[%s298 + $0x8] sm:$0xf] %vm4568, %v4314
        %4572 = vst.msk [vmem:[%s298 + $0xc] sm:$0xf] %vm4568, %v4315
        %4573 = vst.msk [vmem:[%s298 + $0x10] sm:$0xf] %vm4568, %v4316
        %4574 = vst.msk [vmem:[%s298 + $0x14] sm:$0xf] %vm4568, %v4317
        %4575 = vst.msk [vmem:[%s298 + $0x18] sm:$0xf] %vm4568, %v4318
        %4576 = vst.msk [vmem:[%s298 + $0x1c] sm:$0xf] %vm4568, %v4319
        %4577 = vst.msk [vmem:[%s298 + $0x20] sm:$0xf] %vm4568, %v4320
        %4578 = vst.msk [vmem:[%s298 + $0x24] sm:$0xf] %vm4568, %v4321
        %4579 = vst.msk [vmem:[%s298 + $0x28] sm:$0xf] %vm4568, %v4322
        %4580 = vst.msk [vmem:[%s298 + $0x2c] sm:$0xf] %vm4568, %v4323
        %4581 = vst.msk [vmem:[%s298 + $0x30] sm:$0xf] %vm4568, %v4324
        %4582 = vst.msk [vmem:[%s298 + $0x34] sm:$0xf] %vm4568, %v4325
        %4583 = vst.msk [vmem:[%s298 + $0x38] sm:$0xf] %vm4568, %v4326
        %4584 = vst.msk [vmem:[%s298 + $0x3c] sm:$0xf] %vm4568, %v4327
        %4585 = vst.msk [vmem:[%s298 + $0x40] sm:$0xf] %vm4568, %v4328
        %4586 = vst.msk [vmem:[%s298 + $0x44] sm:$0xf] %vm4568, %v4329
        %4587 = vst.msk [vmem:[%s298 + $0x48] sm:$0xf] %vm4568, %v4330
        %4588 = vst.msk [vmem:[%s298 + $0x4c] sm:$0xf] %vm4568, %v4331
        %4589 = vst.msk [vmem:[%s298 + $0x50] sm:$0xf] %vm4568, %v4332
        %4590 = vst.msk [vmem:[%s298 + $0x54] sm:$0xf] %vm4568, %v4333
        %4591 = vst.msk [vmem:[%s298 + $0x58] sm:$0xf] %vm4568, %v4334
        %4592 = vst.msk [vmem:[%s298 + $0x5c] sm:$0xf] %vm4568, %v4335
        %4593 = vst.msk [vmem:[%s298 + $0x60] sm:$0xf] %vm4568, %v4336
        %4594 = vst.msk [vmem:[%s298 + $0x64] sm:$0xf] %vm4568, %v4337
        %4595 = vst.msk [vmem:[%s298 + $0x68] sm:$0xf] %vm4568, %v4338
        %4596 = vst.msk [vmem:[%s298 + $0x6c] sm:$0xf] %vm4568, %v4339
        %4597 = vst.msk [vmem:[%s298 + $0x70] sm:$0xf] %vm4568, %v4340
        %4598 = vst.msk [vmem:[%s298 + $0x74] sm:$0xf] %vm4568, %v4341
        %4599 = vst.msk [vmem:[%s298 + $0x78] sm:$0xf] %vm4568, %v4342
        %4600 = vst.msk [vmem:[%s298 + $0x7c] sm:$0xf] %vm4568, %v4343
        %4601 = vst.msk [vmem:[%s298 + $0x80] sm:$0xf] %vm4568, %v4344
        %4602 = vst.msk [vmem:[%s298 + $0x84] sm:$0xf] %vm4568, %v4345
        %4603 = vst.msk [vmem:[%s298 + $0x88] sm:$0xf] %vm4568, %v4346
        %4604 = vst.msk [vmem:[%s298 + $0x8c] sm:$0xf] %vm4568, %v4347
        %4605 = vst.msk [vmem:[%s298 + $0x90] sm:$0xf] %vm4568, %v4348
        %4606 = vst.msk [vmem:[%s298 + $0x94] sm:$0xf] %vm4568, %v4349
        %4607 = vst.msk [vmem:[%s298 + $0x98] sm:$0xf] %vm4568, %v4350
        %4608 = vst.msk [vmem:[%s298 + $0x9c] sm:$0xf] %vm4568, %v4351
        %4609 = vst.msk [vmem:[%s298 + $0xa0] sm:$0xf] %vm4568, %v4352
        %4610 = vst.msk [vmem:[%s298 + $0xa4] sm:$0xf] %vm4568, %v4353
        %4611 = vst.msk [vmem:[%s298 + $0xa8] sm:$0xf] %vm4568, %v4354
        %4612 = vst.msk [vmem:[%s298 + $0xac] sm:$0xf] %vm4568, %v4355
        %4613 = vst.msk [vmem:[%s298 + $0xb0] sm:$0xf] %vm4568, %v4356
        %4614 = vst.msk [vmem:[%s298 + $0xb4] sm:$0xf] %vm4568, %v4357
        %4615 = vst.msk [vmem:[%s298 + $0xb8] sm:$0xf] %vm4568, %v4358
        %4616 = vst.msk [vmem:[%s298 + $0xbc] sm:$0xf] %vm4568, %v4359
        %4617 = vst.msk [vmem:[%s298 + $0xc0] sm:$0xf] %vm4568, %v4360
        %4618 = vst.msk [vmem:[%s298 + $0xc4] sm:$0xf] %vm4568, %v4361
        %4619 = vst.msk [vmem:[%s298 + $0xc8] sm:$0xf] %vm4568, %v4362
        %4620 = vst.msk [vmem:[%s298 + $0xcc] sm:$0xf] %vm4568, %v4363
        %4621 = vst.msk [vmem:[%s298 + $0xd0] sm:$0xf] %vm4568, %v4364
        %4622 = vst.msk [vmem:[%s298 + $0xd4] sm:$0xf] %vm4568, %v4365
        %4623 = vst.msk [vmem:[%s298 + $0xd8] sm:$0xf] %vm4568, %v4366
        %4624 = vst.msk [vmem:[%s298 + $0xdc] sm:$0xf] %vm4568, %v4367
        %4625 = vst.msk [vmem:[%s298 + $0xe0] sm:$0xf] %vm4568, %v4368
        %4626 = vst.msk [vmem:[%s298 + $0xe4] sm:$0xf] %vm4568, %v4369
        %4627 = vst.msk [vmem:[%s298 + $0xe8] sm:$0xf] %vm4568, %v4370
        %4628 = vst.msk [vmem:[%s298 + $0xec] sm:$0xf] %vm4568, %v4371
        %4629 = vst.msk [vmem:[%s298 + $0xf0] sm:$0xf] %vm4568, %v4372
        %4630 = vst.msk [vmem:[%s298 + $0xf4] sm:$0xf] %vm4568, %v4373
        %4631 = vst.msk [vmem:[%s298 + $0xf8] sm:$0xf] %vm4568, %v4374
        %4632 = vst.msk [vmem:[%s298 + $0xfc] sm:$0xf] %vm4568, %v4375
        %4633 = vst.msk [vmem:[%s298 + $0x100] sm:$0xf] %vm4568, %v4376
        %4634 = vst.msk [vmem:[%s298 + $0x104] sm:$0xf] %vm4568, %v4377
        %4635 = vst.msk [vmem:[%s298 + $0x108] sm:$0xf] %vm4568, %v4378
        %4636 = vst.msk [vmem:[%s298 + $0x10c] sm:$0xf] %vm4568, %v4379
        %4637 = vst.msk [vmem:[%s298 + $0x110] sm:$0xf] %vm4568, %v4380
        %4638 = vst.msk [vmem:[%s298 + $0x114] sm:$0xf] %vm4568, %v4381
        %4639 = vst.msk [vmem:[%s298 + $0x118] sm:$0xf] %vm4568, %v4382
        %4640 = vst.msk [vmem:[%s298 + $0x11c] sm:$0xf] %vm4568, %v4383
        %4641 = vst.msk [vmem:[%s298 + $0x120] sm:$0xf] %vm4568, %v4384
        %4642 = vst.msk [vmem:[%s298 + $0x124] sm:$0xf] %vm4568, %v4385
        %4643 = vst.msk [vmem:[%s298 + $0x128] sm:$0xf] %vm4568, %v4386
        %4644 = vst.msk [vmem:[%s298 + $0x12c] sm:$0xf] %vm4568, %v4387
        %4645 = vst.msk [vmem:[%s298 + $0x130] sm:$0xf] %vm4568, %v4388
        %4646 = vst.msk [vmem:[%s298 + $0x134] sm:$0xf] %vm4568, %v4389
        %4647 = vst.msk [vmem:[%s298 + $0x138] sm:$0xf] %vm4568, %v4390
        %4648 = vst.msk [vmem:[%s298 + $0x13c] sm:$0xf] %vm4568, %v4391
        %4649 = vst.msk [vmem:[%s298 + $0x140] sm:$0xf] %vm4568, %v4392
        %4650 = vst.msk [vmem:[%s298 + $0x144] sm:$0xf] %vm4568, %v4393
        %4651 = vst.msk [vmem:[%s298 + $0x148] sm:$0xf] %vm4568, %v4394
        %4652 = vst.msk [vmem:[%s298 + $0x14c] sm:$0xf] %vm4568, %v4395
        %4653 = vst.msk [vmem:[%s298 + $0x150] sm:$0xf] %vm4568, %v4396
        %4654 = vst.msk [vmem:[%s298 + $0x154] sm:$0xf] %vm4568, %v4397
        %4655 = vst.msk [vmem:[%s298 + $0x158] sm:$0xf] %vm4568, %v4398
        %4656 = vst.msk [vmem:[%s298 + $0x15c] sm:$0xf] %vm4568, %v4399
        %4657 = vst.msk [vmem:[%s298 + $0x160] sm:$0xf] %vm4568, %v4400
        %4658 = vst.msk [vmem:[%s298 + $0x164] sm:$0xf] %vm4568, %v4401
        %4659 = vst.msk [vmem:[%s298 + $0x168] sm:$0xf] %vm4568, %v4402
        %4660 = vst.msk [vmem:[%s298 + $0x16c] sm:$0xf] %vm4568, %v4403
        %4661 = vst.msk [vmem:[%s298 + $0x170] sm:$0xf] %vm4568, %v4404
        %4662 = vst.msk [vmem:[%s298 + $0x174] sm:$0xf] %vm4568, %v4405
        %4663 = vst.msk [vmem:[%s298 + $0x178] sm:$0xf] %vm4568, %v4406
        %4664 = vst.msk [vmem:[%s298 + $0x17c] sm:$0xf] %vm4568, %v4407
        %4665 = vst.msk [vmem:[%s298 + $0x180] sm:$0xf] %vm4568, %v4408
        %4666 = vst.msk [vmem:[%s298 + $0x184] sm:$0xf] %vm4568, %v4409
        %4667 = vst.msk [vmem:[%s298 + $0x188] sm:$0xf] %vm4568, %v4410
        %4668 = vst.msk [vmem:[%s298 + $0x18c] sm:$0xf] %vm4568, %v4411
        %4669 = vst.msk [vmem:[%s298 + $0x190] sm:$0xf] %vm4568, %v4412
        %4670 = vst.msk [vmem:[%s298 + $0x194] sm:$0xf] %vm4568, %v4413
        %4671 = vst.msk [vmem:[%s298 + $0x198] sm:$0xf] %vm4568, %v4414
        %4672 = vst.msk [vmem:[%s298 + $0x19c] sm:$0xf] %vm4568, %v4415
        %4673 = vst.msk [vmem:[%s298 + $0x1a0] sm:$0xf] %vm4568, %v4416
        %4674 = vst.msk [vmem:[%s298 + $0x1a4] sm:$0xf] %vm4568, %v4417
        %4675 = vst.msk [vmem:[%s298 + $0x1a8] sm:$0xf] %vm4568, %v4418
        %4676 = vst.msk [vmem:[%s298 + $0x1ac] sm:$0xf] %vm4568, %v4419
        %4677 = vst.msk [vmem:[%s298 + $0x1b0] sm:$0xf] %vm4568, %v4420
        %4678 = vst.msk [vmem:[%s298 + $0x1b4] sm:$0xf] %vm4568, %v4421
        %4679 = vst.msk [vmem:[%s298 + $0x1b8] sm:$0xf] %vm4568, %v4422
        %4680 = vst.msk [vmem:[%s298 + $0x1bc] sm:$0xf] %vm4568, %v4423
        %4681 = vst.msk [vmem:[%s298 + $0x1c0] sm:$0xf] %vm4568, %v4424
        %4682 = vst.msk [vmem:[%s298 + $0x1c4] sm:$0xf] %vm4568, %v4425
        %4683 = vst.msk [vmem:[%s298 + $0x1c8] sm:$0xf] %vm4568, %v4426
        %4684 = vst.msk [vmem:[%s298 + $0x1cc] sm:$0xf] %vm4568, %v4427
        %4685 = vst.msk [vmem:[%s298 + $0x1d0] sm:$0xf] %vm4568, %v4428
        %4686 = vst.msk [vmem:[%s298 + $0x1d4] sm:$0xf] %vm4568, %v4429
        %4687 = vst.msk [vmem:[%s298 + $0x1d8] sm:$0xf] %vm4568, %v4430
        %4688 = vst.msk [vmem:[%s298 + $0x1dc] sm:$0xf] %vm4568, %v4431
        %4689 = vst.msk [vmem:[%s298 + $0x1e0] sm:$0xf] %vm4568, %v4432
        %4690 = vst.msk [vmem:[%s298 + $0x1e4] sm:$0xf] %vm4568, %v4433
        %4691 = vst.msk [vmem:[%s298 + $0x1e8] sm:$0xf] %vm4568, %v4434
        %4692 = vst.msk [vmem:[%s298 + $0x1ec] sm:$0xf] %vm4568, %v4435
        %4693 = vst.msk [vmem:[%s298 + $0x1f0] sm:$0xf] %vm4568, %v4436
        %4694 = vst.msk [vmem:[%s298 + $0x1f4] sm:$0xf] %vm4568, %v4437
        %4695 = vst.msk [vmem:[%s298 + $0x1f8] sm:$0xf] %vm4568, %v4438
        %4696 = vst.msk [vmem:[%s298 + $0x1fc] sm:$0xf] %vm4568, %v4439
        %4697 = vst.msk [vmem:[%s298 + $0x200] sm:$0xf] %vm4568, %v4440
        %4698 = vst.msk [vmem:[%s298 + $0x204] sm:$0xf] %vm4568, %v4441
        %4699 = vst.msk [vmem:[%s298 + $0x208] sm:$0xf] %vm4568, %v4442
        %4700 = vst.msk [vmem:[%s298 + $0x20c] sm:$0xf] %vm4568, %v4443
        %4701 = vst.msk [vmem:[%s298 + $0x210] sm:$0xf] %vm4568, %v4444
        %4702 = vst.msk [vmem:[%s298 + $0x214] sm:$0xf] %vm4568, %v4445
        %4703 = vst.msk [vmem:[%s298 + $0x218] sm:$0xf] %vm4568, %v4446
        %4704 = vst.msk [vmem:[%s298 + $0x21c] sm:$0xf] %vm4568, %v4447
        %4705 = vst.msk [vmem:[%s298 + $0x220] sm:$0xf] %vm4568, %v4448
        %4706 = vst.msk [vmem:[%s298 + $0x224] sm:$0xf] %vm4568, %v4449
        %4707 = vst.msk [vmem:[%s298 + $0x228] sm:$0xf] %vm4568, %v4450
        %4708 = vst.msk [vmem:[%s298 + $0x22c] sm:$0xf] %vm4568, %v4451
        %4709 = vst.msk [vmem:[%s298 + $0x230] sm:$0xf] %vm4568, %v4452
        %4710 = vst.msk [vmem:[%s298 + $0x234] sm:$0xf] %vm4568, %v4453
        %4711 = vst.msk [vmem:[%s298 + $0x238] sm:$0xf] %vm4568, %v4454
        %4712 = vst.msk [vmem:[%s298 + $0x23c] sm:$0xf] %vm4568, %v4455
        %4713 = vst.msk [vmem:[%s298 + $0x240] sm:$0xf] %vm4568, %v4456
        %4714 = vst.msk [vmem:[%s298 + $0x244] sm:$0xf] %vm4568, %v4457
        %4715 = vst.msk [vmem:[%s298 + $0x248] sm:$0xf] %vm4568, %v4458
        %4716 = vst.msk [vmem:[%s298 + $0x24c] sm:$0xf] %vm4568, %v4459
        %4717 = vst.msk [vmem:[%s298 + $0x250] sm:$0xf] %vm4568, %v4460
        %4718 = vst.msk [vmem:[%s298 + $0x254] sm:$0xf] %vm4568, %v4461
        %4719 = vst.msk [vmem:[%s298 + $0x258] sm:$0xf] %vm4568, %v4462
        %4720 = vst.msk [vmem:[%s298 + $0x25c] sm:$0xf] %vm4568, %v4463
        %4721 = vst.msk [vmem:[%s298 + $0x260] sm:$0xf] %vm4568, %v4464
        %4722 = vst.msk [vmem:[%s298 + $0x264] sm:$0xf] %vm4568, %v4465
        %4723 = vst.msk [vmem:[%s298 + $0x268] sm:$0xf] %vm4568, %v4466
        %4724 = vst.msk [vmem:[%s298 + $0x26c] sm:$0xf] %vm4568, %v4467
        %4725 = vst.msk [vmem:[%s298 + $0x270] sm:$0xf] %vm4568, %v4468
        %4726 = vst.msk [vmem:[%s298 + $0x274] sm:$0xf] %vm4568, %v4469
        %4727 = vst.msk [vmem:[%s298 + $0x278] sm:$0xf] %vm4568, %v4470
        %4728 = vst.msk [vmem:[%s298 + $0x27c] sm:$0xf] %vm4568, %v4471
        %4729 = vst.msk [vmem:[%s298 + $0x280] sm:$0xf] %vm4568, %v4472
        %4730 = vst.msk [vmem:[%s298 + $0x284] sm:$0xf] %vm4568, %v4473
        %4731 = vst.msk [vmem:[%s298 + $0x288] sm:$0xf] %vm4568, %v4474
        %4732 = vst.msk [vmem:[%s298 + $0x28c] sm:$0xf] %vm4568, %v4475
        %4733 = vst.msk [vmem:[%s298 + $0x290] sm:$0xf] %vm4568, %v4476
        %4734 = vst.msk [vmem:[%s298 + $0x294] sm:$0xf] %vm4568, %v4477
        %4735 = vst.msk [vmem:[%s298 + $0x298] sm:$0xf] %vm4568, %v4478
        %4736 = vst.msk [vmem:[%s298 + $0x29c] sm:$0xf] %vm4568, %v4479
        %4737 = vst.msk [vmem:[%s298 + $0x2a0] sm:$0xf] %vm4568, %v4480
        %4738 = vst.msk [vmem:[%s298 + $0x2a4] sm:$0xf] %vm4568, %v4481
        %4739 = vst.msk [vmem:[%s298 + $0x2a8] sm:$0xf] %vm4568, %v4482
        %4740 = vst.msk [vmem:[%s298 + $0x2ac] sm:$0xf] %vm4568, %v4483
        %4741 = vst.msk [vmem:[%s298 + $0x2b0] sm:$0xf] %vm4568, %v4484
        %4742 = vst.msk [vmem:[%s298 + $0x2b4] sm:$0xf] %vm4568, %v4485
        %4743 = vst.msk [vmem:[%s298 + $0x2b8] sm:$0xf] %vm4568, %v4486
        %4744 = vst.msk [vmem:[%s298 + $0x2bc] sm:$0xf] %vm4568, %v4487
        %4745 = vst.msk [vmem:[%s298 + $0x2c0] sm:$0xf] %vm4568, %v4488
        %4746 = vst.msk [vmem:[%s298 + $0x2c4] sm:$0xf] %vm4568, %v4489
        %4747 = vst.msk [vmem:[%s298 + $0x2c8] sm:$0xf] %vm4568, %v4490
        %4748 = vst.msk [vmem:[%s298 + $0x2cc] sm:$0xf] %vm4568, %v4491
        %4749 = vst.msk [vmem:[%s298 + $0x2d0] sm:$0xf] %vm4568, %v4492
        %4750 = vst.msk [vmem:[%s298 + $0x2d4] sm:$0xf] %vm4568, %v4493
        %4751 = vst.msk [vmem:[%s298 + $0x2d8] sm:$0xf] %vm4568, %v4494
        %4752 = vst.msk [vmem:[%s298 + $0x2dc] sm:$0xf] %vm4568, %v4495
        %4753 = vst.msk [vmem:[%s298 + $0x2e0] sm:$0xf] %vm4568, %v4496
        %4754 = vst.msk [vmem:[%s298 + $0x2e4] sm:$0xf] %vm4568, %v4497
        %4755 = vst.msk [vmem:[%s298 + $0x2e8] sm:$0xf] %vm4568, %v4498
        %4756 = vst.msk [vmem:[%s298 + $0x2ec] sm:$0xf] %vm4568, %v4499
        %4757 = vst.msk [vmem:[%s298 + $0x2f0] sm:$0xf] %vm4568, %v4500
        %4758 = vst.msk [vmem:[%s298 + $0x2f4] sm:$0xf] %vm4568, %v4501
        %4759 = vst.msk [vmem:[%s298 + $0x2f8] sm:$0xf] %vm4568, %v4502
        %4760 = vst.msk [vmem:[%s298 + $0x2fc] sm:$0xf] %vm4568, %v4503
        %4761 = vst.msk [vmem:[%s298 + $0x300] sm:$0xf] %vm4568, %v4504
        %4762 = vst.msk [vmem:[%s298 + $0x304] sm:$0xf] %vm4568, %v4505
        %4763 = vst.msk [vmem:[%s298 + $0x308] sm:$0xf] %vm4568, %v4506
        %4764 = vst.msk [vmem:[%s298 + $0x30c] sm:$0xf] %vm4568, %v4507
        %4765 = vst.msk [vmem:[%s298 + $0x310] sm:$0xf] %vm4568, %v4508
        %4766 = vst.msk [vmem:[%s298 + $0x314] sm:$0xf] %vm4568, %v4509
        %4767 = vst.msk [vmem:[%s298 + $0x318] sm:$0xf] %vm4568, %v4510
        %4768 = vst.msk [vmem:[%s298 + $0x31c] sm:$0xf] %vm4568, %v4511
        %4769 = vst.msk [vmem:[%s298 + $0x320] sm:$0xf] %vm4568, %v4512
        %4770 = vst.msk [vmem:[%s298 + $0x324] sm:$0xf] %vm4568, %v4513
        %4771 = vst.msk [vmem:[%s298 + $0x328] sm:$0xf] %vm4568, %v4514
        %4772 = vst.msk [vmem:[%s298 + $0x32c] sm:$0xf] %vm4568, %v4515
        %4773 = vst.msk [vmem:[%s298 + $0x330] sm:$0xf] %vm4568, %v4516
        %4774 = vst.msk [vmem:[%s298 + $0x334] sm:$0xf] %vm4568, %v4517
        %4775 = vst.msk [vmem:[%s298 + $0x338] sm:$0xf] %vm4568, %v4518
        %4776 = vst.msk [vmem:[%s298 + $0x33c] sm:$0xf] %vm4568, %v4519
        %4777 = vst.msk [vmem:[%s298 + $0x340] sm:$0xf] %vm4568, %v4520
        %4778 = vst.msk [vmem:[%s298 + $0x344] sm:$0xf] %vm4568, %v4521
        %4779 = vst.msk [vmem:[%s298 + $0x348] sm:$0xf] %vm4568, %v4522
        %4780 = vst.msk [vmem:[%s298 + $0x34c] sm:$0xf] %vm4568, %v4523
        %4781 = vst.msk [vmem:[%s298 + $0x350] sm:$0xf] %vm4568, %v4524
        %4782 = vst.msk [vmem:[%s298 + $0x354] sm:$0xf] %vm4568, %v4525
        %4783 = vst.msk [vmem:[%s298 + $0x358] sm:$0xf] %vm4568, %v4526
        %4784 = vst.msk [vmem:[%s298 + $0x35c] sm:$0xf] %vm4568, %v4527
        %4785 = vst.msk [vmem:[%s298 + $0x360] sm:$0xf] %vm4568, %v4528
        %4786 = vst.msk [vmem:[%s298 + $0x364] sm:$0xf] %vm4568, %v4529
        %4787 = vst.msk [vmem:[%s298 + $0x368] sm:$0xf] %vm4568, %v4530
        %4788 = vst.msk [vmem:[%s298 + $0x36c] sm:$0xf] %vm4568, %v4531
        %4789 = vst.msk [vmem:[%s298 + $0x370] sm:$0xf] %vm4568, %v4532
        %4790 = vst.msk [vmem:[%s298 + $0x374] sm:$0xf] %vm4568, %v4533
        %4791 = vst.msk [vmem:[%s298 + $0x378] sm:$0xf] %vm4568, %v4534
        %4792 = vst.msk [vmem:[%s298 + $0x37c] sm:$0xf] %vm4568, %v4535
        %4793 = vst.msk [vmem:[%s298 + $0x380] sm:$0xf] %vm4568, %v4536
        %4794 = vst.msk [vmem:[%s298 + $0x384] sm:$0xf] %vm4568, %v4537
        %4795 = vst.msk [vmem:[%s298 + $0x388] sm:$0xf] %vm4568, %v4538
        %4796 = vst.msk [vmem:[%s298 + $0x38c] sm:$0xf] %vm4568, %v4539
        %4797 = vst.msk [vmem:[%s298 + $0x390] sm:$0xf] %vm4568, %v4540
        %4798 = vst.msk [vmem:[%s298 + $0x394] sm:$0xf] %vm4568, %v4541
        %4799 = vst.msk [vmem:[%s298 + $0x398] sm:$0xf] %vm4568, %v4542
        %4800 = vst.msk [vmem:[%s298 + $0x39c] sm:$0xf] %vm4568, %v4543
        %4801 = vst.msk [vmem:[%s298 + $0x3a0] sm:$0xf] %vm4568, %v4544
        %4802 = vst.msk [vmem:[%s298 + $0x3a4] sm:$0xf] %vm4568, %v4545
        %4803 = vst.msk [vmem:[%s298 + $0x3a8] sm:$0xf] %vm4568, %v4546
        %4804 = vst.msk [vmem:[%s298 + $0x3ac] sm:$0xf] %vm4568, %v4547
        %4805 = vst.msk [vmem:[%s298 + $0x3b0] sm:$0xf] %vm4568, %v4548
        %4806 = vst.msk [vmem:[%s298 + $0x3b4] sm:$0xf] %vm4568, %v4549
        %4807 = vst.msk [vmem:[%s298 + $0x3b8] sm:$0xf] %vm4568, %v4550
        %4808 = vst.msk [vmem:[%s298 + $0x3bc] sm:$0xf] %vm4568, %v4551
        %4809 = vst.msk [vmem:[%s298 + $0x3c0] sm:$0xf] %vm4568, %v4552
        %4810 = vst.msk [vmem:[%s298 + $0x3c4] sm:$0xf] %vm4568, %v4553
        %4811 = vst.msk [vmem:[%s298 + $0x3c8] sm:$0xf] %vm4568, %v4554
        %4812 = vst.msk [vmem:[%s298 + $0x3cc] sm:$0xf] %vm4568, %v4555
        %4813 = vst.msk [vmem:[%s298 + $0x3d0] sm:$0xf] %vm4568, %v4556
        %4814 = vst.msk [vmem:[%s298 + $0x3d4] sm:$0xf] %vm4568, %v4557
        %4815 = vst.msk [vmem:[%s298 + $0x3d8] sm:$0xf] %vm4568, %v4558
        %4816 = vst.msk [vmem:[%s298 + $0x3dc] sm:$0xf] %vm4568, %v4559
        %4817 = vst.msk [vmem:[%s298 + $0x3e0] sm:$0xf] %vm4568, %v4560
        %4818 = vst.msk [vmem:[%s298 + $0x3e4] sm:$0xf] %vm4568, %v4561
        %4819 = vst.msk [vmem:[%s298 + $0x3e8] sm:$0xf] %vm4568, %v4562
        %4820 = vst.msk [vmem:[%s298 + $0x3ec] sm:$0xf] %vm4568, %v4563
        %4821 = vst.msk [vmem:[%s298 + $0x3f0] sm:$0xf] %vm4568, %v4564
        %4822 = vst.msk [vmem:[%s298 + $0x3f4] sm:$0xf] %vm4568, %v4565
        %4823 = vst.msk [vmem:[%s298 + $0x3f8] sm:$0xf] %vm4568, %v4566
        %4824 = vst.msk [vmem:[%s298 + $0x3fc] sm:$0xf] %vm4568, %v4567
      $region44: #{matmul_fused.1} parent=35 // pred_fallthru
        _
      %s4825 = smul.u32 256, %s20
      %p4826 = scmp.lt.s32.totalorder %s4825, 8703
      %s4827 = scalar_select %p4826, %s4825, 8703
      %p4828 = scmp.lt.s32.totalorder %s21, 0
      %s4829 = scalar_select %p4828, %s21, 0
      %s4830 = sadd.s32 %s4829, %s4827
      %s4831 = smul.addr %s4830, 4
      %s4832 = scalar_lea.vmem %s4, %s4831
      // Predicated region
      $region45: #{matmul_fused.1} parent=35 // pred_check
        %p4833 = pneg %p162
      $region46: #{matmul_fused.1} parent=35 // pred_check_branch
        %4835 = sbr.rel (%p4833) target = $region48
      $region47: #{matmul_fused.1} parent=35 // pred_region
        %s4836 = smul.u32 256, %s20
      $region48: #{matmul_fused.1} parent=35 // pred_fallthru
        _
    $region36: #{matmul_fused.1} parent=5 // pred_fallthru
      _
    %p4837 = scmp.le.s32.totalorder 2, %s10
    // Predicated region
    $region49: #{matmul_fused.1} parent=5 // pred_check
      %p4838 = pneg %p4837
    $region50: #{matmul_fused.1} parent=5 // pred_check_branch
      %4840 = sbr.rel (%p4838) target = $region52
    $region51: #{matmul_fused.1} parent=5 // pred_region
      %s4841 = ssub.s32 %s10, 2
      // Predicated region
      $region53: #{matmul_fused.1} parent=51 // pred_check
        %p4842 = pneg %p168
      $region54: #{matmul_fused.1} parent=51 // pred_check_branch
        %4844 = sbr.rel (%p4842) target = $region56
      $region55: #{matmul_fused.1} parent=51 // pred_region
        %s4845 = smul.u32 256, %s23
        %p4846 = scmp.lt.s32.totalorder %s4845, 8703
        %s4847 = scalar_select %p4846, %s4845, 8703
        %p4848 = scmp.lt.s32.totalorder %s24, 0
        %s4849 = scalar_select %p4848, %s24, 0
        %s4850 = sadd.s32 %s4849, %s4847
        %s4851 = smul.addr %s4850, 4
        %s4852 = scalar_lea.vmem %s4, %s4851
      $region56: #{matmul_fused.1} parent=51 // pred_fallthru
        _
    $region52: #{matmul_fused.1} parent=5 // pred_fallthru
      _
  $region6: #{matmul_fused.1} parent=0 // loop_footer
    %s14 = sadd.s32 1, %s10
  $region7: #{matmul_fused.1} parent=0 // loop_footer_branch
    %9 = sbr.rel target = $region3
  $region8: #{matmul_fused.1} parent=0 // loop_exit
    _

</llo_original>
